<compile_context>
chip_gen: v7x
topology: tpu7x:2x2x1
jax: 0.10.0
libtpu: 0.0.40
codegen_flags: <defaults>
</compile_context>

<pallas_src>
import jax
import jax.numpy as jnp
from jax import lax
from jax.experimental import pallas as pl
from jax.experimental.pallas import tpu as pltpu

B = 2            # batch
H = W = 4        # spatial size implied by linear1: 256 * 2 * 2 = 1024
C_IN = 16
C1 = 256         # conv1 out channels
C2 = 256         # conv2 out channels
HO = WO = 2      # spatial after 3x3 valid conv
HID = 64
NACT = 4
EPS = 1e-5
K1_PAD = 256     # conv1 im2col K (=144) zero-padded to a clean 256 lanes
N1 = B * H * W   # 32 rows: row index = b*16 + h*4 + w


def actor_kernel(p1_ref, w1_ref, w2_ref, wl1_ref, wl2_ref, vec_ref, out_ref):
    # ---- packed small vectors: one (8,256) f32 block, sliced in-register ----
    vecs = vec_ref[...]
    b1, g1, be1 = vecs[0:1, :], vecs[1:2, :], vecs[2:3, :]
    b2, g2, be2 = vecs[3:4, :], vecs[4:5, :], vecs[5:6, :]
    bl1 = vecs[6:7, :HID]                                # (1, 64)
    bl2 = vecs[7:8, :NACT]                               # (1, 4)

    # ---- conv1: single (32,256)@(256,256) bf16 MXU matmul on pre-built patches
    y1 = jnp.dot(p1_ref[...], w1_ref[...], preferred_element_type=jnp.float32)
    y1 = jnp.maximum(y1 + b1, 0.0)                       # (32, 256) f32

    # ---- batch_norm1 (training-mode batch stats), one-pass var, fused scale
    inv_n1 = 1.0 / N1
    mu1 = jnp.sum(y1, axis=0, keepdims=True) * inv_n1
    var1 = jnp.sum(y1 * y1, axis=0, keepdims=True) * inv_n1 - mu1 * mu1
    s1 = g1 * lax.rsqrt(var1 + EPS)
    y1 = y1 * s1 + (be1 - mu1 * s1)                      # (32, 256) f32

    # ---- conv2 (3x3, valid): 9 accumulating full-tile matmuls.  LHS for tap
    # (kh,kw) is y1 rolled up by d = kh*4 + kw sublanes (row r of the rolled
    # tile holds y1[r + d]); output row r = b*16 + ho*4 + wo (ho,wo < 2) thus
    # accumulates y1[b, ho+kh, wo+kw] @ W2[kh,kw] with no wraparound.
    acc2 = jnp.zeros((N1, C2), jnp.float32)
    for kh in range(3):
        for kw in range(3):
            d = kh * W + kw
            lhs = y1 if d == 0 else pltpu.roll(y1, N1 - d, axis=0)
            acc2 = acc2 + jnp.dot(lhs.astype(jnp.bfloat16),
                                  w2_ref[kh * 3 + kw],
                                  preferred_element_type=jnp.float32)

    y2 = jnp.maximum(acc2 + b2, 0.0)                     # (32, 256); 8 valid rows

    # ---- batch_norm2: stats over the 8 valid rows only (mask); normalization
    # applied to the whole tile (garbage rows stay finite, dropped at the end)
    rb = lax.broadcasted_iota(jnp.int32, (N1, C2), 0) & (H * W - 1)
    mask = (((rb & 3) < 2) & (rb < 8)).astype(jnp.float32)   # rows b*16+{0,1,4,5}
    inv_n2 = 1.0 / (B * HO * WO)
    y2m = y2 * mask
    mu2 = jnp.sum(y2m, axis=0, keepdims=True) * inv_n2
    var2 = jnp.sum(y2m * y2, axis=0, keepdims=True) * inv_n2 - mu2 * mu2
    s2 = g2 * lax.rsqrt(var2 + EPS)
    y2 = y2 * s2 + (be2 - mu2 * s2)                      # (32, 256) f32

    # ---- flatten + linear1 (+ReLU): same roll trick over the 4 output
    # positions p (d = (p//2)*4 + p%2); rows 0 and 16 of the accumulator are
    # h[b=0] and h[b=1].  PyTorch's (c,h,w) flatten order is folded into wl1.
    acc1 = jnp.zeros((N1, HID), jnp.float32)
    for p in range(HO * WO):
        d = (p // WO) * W + (p % WO)
        lhs = y2 if d == 0 else pltpu.roll(y2, N1 - d, axis=0)
        acc1 = acc1 + jnp.dot(lhs.astype(jnp.bfloat16), wl1_ref[p],
                              preferred_element_type=jnp.float32)
    h = jnp.maximum(acc1 + bl1, 0.0)                     # (32, 64)

    # ---- linear2 + log_softmax on the full tile; gather the 2 valid rows last
    logits = jnp.dot(h, wl2_ref[...], preferred_element_type=jnp.float32) + bl2
    z = logits - jnp.max(logits, axis=-1, keepdims=True)
    res = z - jnp.log(jnp.sum(jnp.exp(z), axis=-1, keepdims=True))   # (32, 4)
    out_ref[...] = jnp.concatenate(
        [res[0:1, :], res[H * W:H * W + 1, :]], axis=0)  # rows 0 and 16


def make_params(key):
    """Deterministic synthetic parameters in PyTorch layouts, converted to the
    kernel's layouts (bf16 for the large weights)."""
    ks = jax.random.split(key, 12)
    w1_t = jax.random.normal(ks[0], (C1, C_IN, 3, 3), jnp.float32) * 0.05
    b1 = jax.random.normal(ks[1], (C1,), jnp.float32) * 0.05
    w2_t = jax.random.normal(ks[2], (C2, C1, 3, 3), jnp.float32) * 0.02
    b2 = jax.random.normal(ks[3], (C2,), jnp.float32) * 0.05
    wl1_t = jax.random.normal(ks[4], (HID, C2 * HO * WO), jnp.float32) * 0.03
    bl1 = jax.random.normal(ks[5], (HID,), jnp.float32) * 0.05
    wl2_t = jax.random.normal(ks[6], (NACT, HID), jnp.float32) * 0.1
    bl2 = jax.random.normal(ks[7], (NACT,), jnp.float32) * 0.05
    g1 = 1.0 + 0.1 * jax.random.normal(ks[8], (C1,), jnp.float32)
    be1 = 0.1 * jax.random.normal(ks[9], (C1,), jnp.float32)
    g2 = 1.0 + 0.1 * jax.random.normal(ks[10], (C2,), jnp.float32)
    be2 = 0.1 * jax.random.normal(ks[11], (C2,), jnp.float32)

    # conv1 weight: (Cout,Cin,3,3) -> (kh,kw,cin,Cout) -> (144,256), K padded
    # to 256 lanes, bf16.
    w1 = jnp.transpose(w1_t, (2, 3, 1, 0)).reshape(9 * C_IN, C1)
    w1 = jnp.pad(w1, ((0, K1_PAD - 9 * C_IN), (0, 0))).astype(jnp.bfloat16)
    # conv2 weight: (9, Cin=256, Cout=256) bf16 for 9 accumulating K=256 dots.
    w2 = jnp.transpose(w2_t, (2, 3, 1, 0)).reshape(9, C1, C2).astype(jnp.bfloat16)
    # linear1 weight: PyTorch flatten is (c,h,w); kernel sums over positions
    # p = h*2+w -> (4, 256, 64) bf16.
    wl1 = jnp.transpose(wl1_t.reshape(HID, C2, HO, WO), (2, 3, 1, 0)).reshape(
        HO * WO, C2, HID).astype(jnp.bfloat16)
    wl2 = wl2_t.T                                        # (64, 4) f32
    # Pack small vectors: rows = [b1,g1,be1,b2,g2,be2, bl1(pad), bl2(pad)].
    vecs = jnp.zeros((8, C1), jnp.float32)
    vecs = vecs.at[0].set(b1).at[1].set(g1).at[2].set(be1)
    vecs = vecs.at[3].set(b2).at[4].set(g2).at[5].set(be2)
    vecs = vecs.at[6, :HID].set(bl1)
    vecs = vecs.at[7, :NACT].set(bl2)
    return (w1, w2, wl1, wl2, vecs)


@jax.jit
def actor_forward(x_nchw, params):
    w1, w2, wl1, wl2, vecs = params
    # Wrapper-side im2col for conv1 (hoisted out of the kernel, fused by jit).
    x = jnp.transpose(x_nchw, (0, 2, 3, 1))              # NCHW -> NHWC (B,4,4,16)
    xp = jnp.pad(x, ((0, 0), (1, 1), (1, 1), (0, 0)))    # conv1 padding=1
    cols = [xp[:, kh:kh + H, kw:kw + W, :].reshape(B * H * W, C_IN)
            for kh in range(3) for kw in range(3)]
    p1 = jnp.concatenate(cols, axis=-1)                  # (32, 144), (kh,kw,cin)
    p1 = jnp.pad(p1, ((0, 0), (0, K1_PAD - 9 * C_IN))).astype(jnp.bfloat16)

    vmem = pl.BlockSpec(memory_space=pltpu.MemorySpace.VMEM)
    cost = pl.CostEstimate(flops=48_000_000, transcendentals=800,
                           bytes_accessed=1_500_000)
    return pl.pallas_call(
        actor_kernel,
        out_shape=jax.ShapeDtypeStruct((B, NACT), jnp.float32),
        in_specs=[vmem] * 6,
        out_specs=vmem,
        cost_estimate=cost,
    )(p1, w1, w2, wl1, wl2, vecs)


def actor_reference(x_nchw, params):
    """Pure-JAX reference using the same (bf16-stored) weights."""
    w1, w2, wl1, wl2, vecs = params
    w1f = w1.astype(jnp.float32)[:9 * C_IN].reshape(3, 3, C_IN, C1)
    w2f = w2.astype(jnp.float32).reshape(3, 3, C1, C2)
    wl1f = wl1.astype(jnp.float32)
    b1, g1, be1 = vecs[0], vecs[1], vecs[2]
    b2, g2, be2 = vecs[3], vecs[4], vecs[5]
    bl1, bl2 = vecs[6, :HID], vecs[7, :NACT]

    x = jnp.transpose(x_nchw, (0, 2, 3, 1))
    dn = ('NHWC', 'HWIO', 'NHWC')
    y1 = lax.conv_general_dilated(x, w1f, (1, 1), 'SAME',
                                  dimension_numbers=dn) + b1
    y1 = jnp.maximum(y1, 0.0)
    mu1 = jnp.mean(y1, axis=(0, 1, 2), keepdims=True)
    var1 = jnp.mean((y1 - mu1) ** 2, axis=(0, 1, 2), keepdims=True)
    y1 = (y1 - mu1) / jnp.sqrt(var1 + EPS) * g1 + be1
    y2 = lax.conv_general_dilated(y1, w2f, (1, 1), 'VALID',
                                  dimension_numbers=dn) + b2
    y2 = jnp.maximum(y2, 0.0)
    mu2 = jnp.mean(y2, axis=(0, 1, 2), keepdims=True)
    var2 = jnp.mean((y2 - mu2) ** 2, axis=(0, 1, 2), keepdims=True)
    y2 = (y2 - mu2) / jnp.sqrt(var2 + EPS) * g2 + be2
    y2r = y2.reshape(B, HO * WO, C2)
    h = jnp.maximum(bl1 + jnp.einsum('bpc,pcd->bd', y2r, wl1f), 0.0)
    logits = h @ wl2 + bl2
    return jax.nn.log_softmax(logits, axis=-1)


if __name__ == "__main__":
    key = jax.random.PRNGKey(0)
    kx, kp = jax.random.split(key)
    x = jax.random.normal(kx, (B, C_IN, H, W), jnp.float32)   # NCHW like PyTorch
    params = make_params(kp)

    out = jax.block_until_ready(actor_forward(x, params))
    ref = actor_reference(x, params)

    assert out.shape == (B, NACT)
    assert bool(jnp.all(jnp.isfinite(out)))
    max_diff = float(jnp.max(jnp.abs(out - ref)))
    assert bool(jnp.allclose(out, ref, atol=2e-2, rtol=2e-2)), (
        f"max abs diff {max_diff}")
    print("KERNEL_OK")
</pallas_src>

<mosaic_0001>
module attributes {stable_mosaic.version = 11 : i64} {
  func.func @actor_kernel(%arg0: memref<32x256xbf16, #tpu.memory_space<vmem>>, %arg1: memref<256x256xbf16, #tpu.memory_space<vmem>>, %arg2: memref<9x256x256xbf16, #tpu.memory_space<vmem>>, %arg3: memref<4x256x64xbf16, #tpu.memory_space<vmem>>, %arg4: memref<64x4xf32, #tpu.memory_space<vmem>>, %arg5: memref<8x256xf32, #tpu.memory_space<vmem>>, %arg6: memref<2x4xf32, #tpu.memory_space<vmem>>) attributes {dimension_semantics = [], scalar_prefetch = 0 : i64, scratch_operands = 0 : i64, tpu.core_type = #tpu.core_type<tc>} {
    %c0 = arith.constant 0 : index
    %c0_0 = arith.constant 0 : index
    %0 = vector.load %arg5[%c0, %c0_0] : memref<8x256xf32, #tpu.memory_space<vmem>>, vector<8x256xf32>
    %1 = vector.extract_strided_slice %0 {offsets = [0, 0], sizes = [1, 256], strides = [1, 1]} : vector<8x256xf32> to vector<1x256xf32>
    %2 = vector.extract_strided_slice %0 {offsets = [1, 0], sizes = [1, 256], strides = [1, 1]} : vector<8x256xf32> to vector<1x256xf32>
    %3 = vector.extract_strided_slice %0 {offsets = [2, 0], sizes = [1, 256], strides = [1, 1]} : vector<8x256xf32> to vector<1x256xf32>
    %4 = vector.extract_strided_slice %0 {offsets = [3, 0], sizes = [1, 256], strides = [1, 1]} : vector<8x256xf32> to vector<1x256xf32>
    %5 = vector.extract_strided_slice %0 {offsets = [4, 0], sizes = [1, 256], strides = [1, 1]} : vector<8x256xf32> to vector<1x256xf32>
    %6 = vector.extract_strided_slice %0 {offsets = [5, 0], sizes = [1, 256], strides = [1, 1]} : vector<8x256xf32> to vector<1x256xf32>
    %7 = vector.extract_strided_slice %0 {offsets = [6, 0], sizes = [1, 64], strides = [1, 1]} : vector<8x256xf32> to vector<1x64xf32>
    %8 = vector.extract_strided_slice %0 {offsets = [7, 0], sizes = [1, 4], strides = [1, 1]} : vector<8x256xf32> to vector<1x4xf32>
    %c0_1 = arith.constant 0 : index
    %c0_2 = arith.constant 0 : index
    %9 = vector.load %arg0[%c0_1, %c0_2] : memref<32x256xbf16, #tpu.memory_space<vmem>>, vector<32x256xbf16>
    %c0_3 = arith.constant 0 : index
    %c0_4 = arith.constant 0 : index
    %10 = vector.load %arg1[%c0_3, %c0_4] : memref<256x256xbf16, #tpu.memory_space<vmem>>, vector<256x256xbf16>
    %cst = arith.constant dense<0.000000e+00> : vector<32x256xf32>
    %11 = tpu.matmul %9, %10, %cst {dimension_numbers = #tpu.dot_dimension_numbers<[1], [0], [0], [1], [0, 0, 1, 1], [], []>} : vector<32x256xbf16>, vector<256x256xbf16>, vector<32x256xf32> -> vector<32x256xf32>
    %12 = vector.broadcast %1 : vector<1x256xf32> to vector<32x256xf32>
    %13 = arith.addf %11, %12 : vector<32x256xf32>
    %cst_5 = arith.constant 0.000000e+00 : f32
    %14 = vector.broadcast %cst_5 : f32 to vector<32x256xf32>
    %15 = arith.maximumf %13, %14 : vector<32x256xf32>
    %cst_6 = arith.constant dense<0.000000e+00> : vector<256xf32>
    %16 = vector.multi_reduction <add>, %15, %cst_6 [0] : vector<32x256xf32> to vector<256xf32>
    %17 = vector.shape_cast %16 : vector<256xf32> to vector<1x256xf32>
    %cst_7 = arith.constant 3.125000e-02 : f32
    %18 = vector.broadcast %cst_7 : f32 to vector<1x256xf32>
    %19 = arith.mulf %17, %18 : vector<1x256xf32>
    %20 = arith.mulf %15, %15 : vector<32x256xf32>
    %cst_8 = arith.constant dense<0.000000e+00> : vector<256xf32>
    %21 = vector.multi_reduction <add>, %20, %cst_8 [0] : vector<32x256xf32> to vector<256xf32>
    %22 = vector.shape_cast %21 : vector<256xf32> to vector<1x256xf32>
    %cst_9 = arith.constant 3.125000e-02 : f32
    %23 = vector.broadcast %cst_9 : f32 to vector<1x256xf32>
    %24 = arith.mulf %22, %23 : vector<1x256xf32>
    %25 = arith.mulf %19, %19 : vector<1x256xf32>
    %26 = arith.subf %24, %25 : vector<1x256xf32>
    %cst_10 = arith.constant 9.99999974E-6 : f32
    %27 = vector.broadcast %cst_10 : f32 to vector<1x256xf32>
    %28 = arith.addf %26, %27 : vector<1x256xf32>
    %29 = math.rsqrt %28 : vector<1x256xf32>
    %30 = arith.mulf %2, %29 : vector<1x256xf32>
    %31 = vector.broadcast %30 : vector<1x256xf32> to vector<32x256xf32>
    %32 = arith.mulf %15, %31 : vector<32x256xf32>
    %33 = arith.mulf %19, %30 : vector<1x256xf32>
    %34 = arith.subf %3, %33 : vector<1x256xf32>
    %35 = vector.broadcast %34 : vector<1x256xf32> to vector<32x256xf32>
    %36 = arith.addf %32, %35 : vector<32x256xf32>
    %cst_11 = arith.constant 0.000000e+00 : f32
    %37 = vector.broadcast %cst_11 : f32 to vector<32x256xf32>
    %38 = arith.truncf %36 : vector<32x256xf32> to vector<32x256xbf16>
    %c0_12 = arith.constant 0 : index
    %c0_13 = arith.constant 0 : index
    %c0_14 = arith.constant 0 : index
    %39 = vector.load %arg2[%c0_12, %c0_13, %c0_14] : memref<9x256x256xbf16, #tpu.memory_space<vmem>>, vector<1x256x256xbf16>
    %40 = vector.shape_cast %39 : vector<1x256x256xbf16> to vector<256x256xbf16>
    %cst_15 = arith.constant dense<0.000000e+00> : vector<32x256xf32>
    %41 = tpu.matmul %38, %40, %cst_15 {dimension_numbers = #tpu.dot_dimension_numbers<[1], [0], [0], [1], [0, 0, 1, 1], [], []>} : vector<32x256xbf16>, vector<256x256xbf16>, vector<32x256xf32> -> vector<32x256xf32>
    %42 = arith.addf %37, %41 : vector<32x256xf32>
    %c31_i32 = arith.constant 31 : i32
    %43 = tpu.dynamic_rotate %36 by %c31_i32 dim 0 : vector<32x256xf32>, i32 -> vector<32x256xf32>
    %44 = arith.truncf %43 : vector<32x256xf32> to vector<32x256xbf16>
    %c1 = arith.constant 1 : index
    %c0_16 = arith.constant 0 : index
    %c0_17 = arith.constant 0 : index
    %45 = vector.load %arg2[%c1, %c0_16, %c0_17] : memref<9x256x256xbf16, #tpu.memory_space<vmem>>, vector<1x256x256xbf16>
    %46 = vector.shape_cast %45 : vector<1x256x256xbf16> to vector<256x256xbf16>
    %cst_18 = arith.constant dense<0.000000e+00> : vector<32x256xf32>
    %47 = tpu.matmul %44, %46, %cst_18 {dimension_numbers = #tpu.dot_dimension_numbers<[1], [0], [0], [1], [0, 0, 1, 1], [], []>} : vector<32x256xbf16>, vector<256x256xbf16>, vector<32x256xf32> -> vector<32x256xf32>
    %48 = arith.addf %42, %47 : vector<32x256xf32>
    %c30_i32 = arith.constant 30 : i32
    %49 = tpu.dynamic_rotate %36 by %c30_i32 dim 0 : vector<32x256xf32>, i32 -> vector<32x256xf32>
    %50 = arith.truncf %49 : vector<32x256xf32> to vector<32x256xbf16>
    %c2 = arith.constant 2 : index
    %c0_19 = arith.constant 0 : index
    %c0_20 = arith.constant 0 : index
    %51 = vector.load %arg2[%c2, %c0_19, %c0_20] : memref<9x256x256xbf16, #tpu.memory_space<vmem>>, vector<1x256x256xbf16>
    %52 = vector.shape_cast %51 : vector<1x256x256xbf16> to vector<256x256xbf16>
    %cst_21 = arith.constant dense<0.000000e+00> : vector<32x256xf32>
    %53 = tpu.matmul %50, %52, %cst_21 {dimension_numbers = #tpu.dot_dimension_numbers<[1], [0], [0], [1], [0, 0, 1, 1], [], []>} : vector<32x256xbf16>, vector<256x256xbf16>, vector<32x256xf32> -> vector<32x256xf32>
    %54 = arith.addf %48, %53 : vector<32x256xf32>
    %c28_i32 = arith.constant 28 : i32
    %55 = tpu.dynamic_rotate %36 by %c28_i32 dim 0 : vector<32x256xf32>, i32 -> vector<32x256xf32>
    %56 = arith.truncf %55 : vector<32x256xf32> to vector<32x256xbf16>
    %c3 = arith.constant 3 : index
    %c0_22 = arith.constant 0 : index
    %c0_23 = arith.constant 0 : index
    %57 = vector.load %arg2[%c3, %c0_22, %c0_23] : memref<9x256x256xbf16, #tpu.memory_space<vmem>>, vector<1x256x256xbf16>
    %58 = vector.shape_cast %57 : vector<1x256x256xbf16> to vector<256x256xbf16>
    %cst_24 = arith.constant dense<0.000000e+00> : vector<32x256xf32>
    %59 = tpu.matmul %56, %58, %cst_24 {dimension_numbers = #tpu.dot_dimension_numbers<[1], [0], [0], [1], [0, 0, 1, 1], [], []>} : vector<32x256xbf16>, vector<256x256xbf16>, vector<32x256xf32> -> vector<32x256xf32>
    %60 = arith.addf %54, %59 : vector<32x256xf32>
    %c27_i32 = arith.constant 27 : i32
    %61 = tpu.dynamic_rotate %36 by %c27_i32 dim 0 : vector<32x256xf32>, i32 -> vector<32x256xf32>
    %62 = arith.truncf %61 : vector<32x256xf32> to vector<32x256xbf16>
    %c4 = arith.constant 4 : index
    %c0_25 = arith.constant 0 : index
    %c0_26 = arith.constant 0 : index
    %63 = vector.load %arg2[%c4, %c0_25, %c0_26] : memref<9x256x256xbf16, #tpu.memory_space<vmem>>, vector<1x256x256xbf16>
    %64 = vector.shape_cast %63 : vector<1x256x256xbf16> to vector<256x256xbf16>
    %cst_27 = arith.constant dense<0.000000e+00> : vector<32x256xf32>
    %65 = tpu.matmul %62, %64, %cst_27 {dimension_numbers = #tpu.dot_dimension_numbers<[1], [0], [0], [1], [0, 0, 1, 1], [], []>} : vector<32x256xbf16>, vector<256x256xbf16>, vector<32x256xf32> -> vector<32x256xf32>
    %66 = arith.addf %60, %65 : vector<32x256xf32>
    %c26_i32 = arith.constant 26 : i32
    %67 = tpu.dynamic_rotate %36 by %c26_i32 dim 0 : vector<32x256xf32>, i32 -> vector<32x256xf32>
    %68 = arith.truncf %67 : vector<32x256xf32> to vector<32x256xbf16>
    %c5 = arith.constant 5 : index
    %c0_28 = arith.constant 0 : index
    %c0_29 = arith.constant 0 : index
    %69 = vector.load %arg2[%c5, %c0_28, %c0_29] : memref<9x256x256xbf16, #tpu.memory_space<vmem>>, vector<1x256x256xbf16>
    %70 = vector.shape_cast %69 : vector<1x256x256xbf16> to vector<256x256xbf16>
    %cst_30 = arith.constant dense<0.000000e+00> : vector<32x256xf32>
    %71 = tpu.matmul %68, %70, %cst_30 {dimension_numbers = #tpu.dot_dimension_numbers<[1], [0], [0], [1], [0, 0, 1, 1], [], []>} : vector<32x256xbf16>, vector<256x256xbf16>, vector<32x256xf32> -> vector<32x256xf32>
    %72 = arith.addf %66, %71 : vector<32x256xf32>
    %c24_i32 = arith.constant 24 : i32
    %73 = tpu.dynamic_rotate %36 by %c24_i32 dim 0 : vector<32x256xf32>, i32 -> vector<32x256xf32>
    %74 = arith.truncf %73 : vector<32x256xf32> to vector<32x256xbf16>
    %c6 = arith.constant 6 : index
    %c0_31 = arith.constant 0 : index
    %c0_32 = arith.constant 0 : index
    %75 = vector.load %arg2[%c6, %c0_31, %c0_32] : memref<9x256x256xbf16, #tpu.memory_space<vmem>>, vector<1x256x256xbf16>
    %76 = vector.shape_cast %75 : vector<1x256x256xbf16> to vector<256x256xbf16>
    %cst_33 = arith.constant dense<0.000000e+00> : vector<32x256xf32>
    %77 = tpu.matmul %74, %76, %cst_33 {dimension_numbers = #tpu.dot_dimension_numbers<[1], [0], [0], [1], [0, 0, 1, 1], [], []>} : vector<32x256xbf16>, vector<256x256xbf16>, vector<32x256xf32> -> vector<32x256xf32>
    %78 = arith.addf %72, %77 : vector<32x256xf32>
    %c23_i32 = arith.constant 23 : i32
    %79 = tpu.dynamic_rotate %36 by %c23_i32 dim 0 : vector<32x256xf32>, i32 -> vector<32x256xf32>
    %80 = arith.truncf %79 : vector<32x256xf32> to vector<32x256xbf16>
    %c7 = arith.constant 7 : index
    %c0_34 = arith.constant 0 : index
    %c0_35 = arith.constant 0 : index
    %81 = vector.load %arg2[%c7, %c0_34, %c0_35] : memref<9x256x256xbf16, #tpu.memory_space<vmem>>, vector<1x256x256xbf16>
    %82 = vector.shape_cast %81 : vector<1x256x256xbf16> to vector<256x256xbf16>
    %cst_36 = arith.constant dense<0.000000e+00> : vector<32x256xf32>
    %83 = tpu.matmul %80, %82, %cst_36 {dimension_numbers = #tpu.dot_dimension_numbers<[1], [0], [0], [1], [0, 0, 1, 1], [], []>} : vector<32x256xbf16>, vector<256x256xbf16>, vector<32x256xf32> -> vector<32x256xf32>
    %84 = arith.addf %78, %83 : vector<32x256xf32>
    %c22_i32 = arith.constant 22 : i32
    %85 = tpu.dynamic_rotate %36 by %c22_i32 dim 0 : vector<32x256xf32>, i32 -> vector<32x256xf32>
    %86 = arith.truncf %85 : vector<32x256xf32> to vector<32x256xbf16>
    %c8 = arith.constant 8 : index
    %c0_37 = arith.constant 0 : index
    %c0_38 = arith.constant 0 : index
    %87 = vector.load %arg2[%c8, %c0_37, %c0_38] : memref<9x256x256xbf16, #tpu.memory_space<vmem>>, vector<1x256x256xbf16>
    %88 = vector.shape_cast %87 : vector<1x256x256xbf16> to vector<256x256xbf16>
    %cst_39 = arith.constant dense<0.000000e+00> : vector<32x256xf32>
    %89 = tpu.matmul %86, %88, %cst_39 {dimension_numbers = #tpu.dot_dimension_numbers<[1], [0], [0], [1], [0, 0, 1, 1], [], []>} : vector<32x256xbf16>, vector<256x256xbf16>, vector<32x256xf32> -> vector<32x256xf32>
    %90 = arith.addf %84, %89 : vector<32x256xf32>
    %91 = vector.broadcast %4 : vector<1x256xf32> to vector<32x256xf32>
    %92 = arith.addf %90, %91 : vector<32x256xf32>
    %cst_40 = arith.constant 0.000000e+00 : f32
    %93 = vector.broadcast %cst_40 : f32 to vector<32x256xf32>
    %94 = arith.maximumf %92, %93 : vector<32x256xf32>
    %95 = tpu.iota {dimensions = array<i32: 0>} : vector<32x256xi32>
    %c15_i32 = arith.constant 15 : i32
    %96 = vector.broadcast %c15_i32 : i32 to vector<32x256xi32>
    %97 = arith.andi %95, %96 : vector<32x256xi32>
    %c3_i32 = arith.constant 3 : i32
    %98 = vector.broadcast %c3_i32 : i32 to vector<32x256xi32>
    %99 = arith.andi %97, %98 : vector<32x256xi32>
    %c2_i32 = arith.constant 2 : i32
    %100 = vector.broadcast %c2_i32 : i32 to vector<32x256xi32>
    %101 = arith.cmpi slt, %99, %100 : vector<32x256xi32>
    %c8_i32 = arith.constant 8 : i32
    %102 = vector.broadcast %c8_i32 : i32 to vector<32x256xi32>
    %103 = arith.cmpi slt, %97, %102 : vector<32x256xi32>
    %104 = arith.andi %101, %103 : vector<32x256xi1>
    %105 = arith.extui %104 : vector<32x256xi1> to vector<32x256xi32>
    %106 = arith.sitofp %105 : vector<32x256xi32> to vector<32x256xf32>
    %107 = arith.mulf %94, %106 : vector<32x256xf32>
    %cst_41 = arith.constant dense<0.000000e+00> : vector<256xf32>
    %108 = vector.multi_reduction <add>, %107, %cst_41 [0] : vector<32x256xf32> to vector<256xf32>
    %109 = vector.shape_cast %108 : vector<256xf32> to vector<1x256xf32>
    %cst_42 = arith.constant 1.250000e-01 : f32
    %110 = vector.broadcast %cst_42 : f32 to vector<1x256xf32>
    %111 = arith.mulf %109, %110 : vector<1x256xf32>
    %112 = arith.mulf %107, %94 : vector<32x256xf32>
    %cst_43 = arith.constant dense<0.000000e+00> : vector<256xf32>
    %113 = vector.multi_reduction <add>, %112, %cst_43 [0] : vector<32x256xf32> to vector<256xf32>
    %114 = vector.shape_cast %113 : vector<256xf32> to vector<1x256xf32>
    %cst_44 = arith.constant 1.250000e-01 : f32
    %115 = vector.broadcast %cst_44 : f32 to vector<1x256xf32>
    %116 = arith.mulf %114, %115 : vector<1x256xf32>
    %117 = arith.mulf %111, %111 : vector<1x256xf32>
    %118 = arith.subf %116, %117 : vector<1x256xf32>
    %cst_45 = arith.constant 9.99999974E-6 : f32
    %119 = vector.broadcast %cst_45 : f32 to vector<1x256xf32>
    %120 = arith.addf %118, %119 : vector<1x256xf32>
    %121 = math.rsqrt %120 : vector<1x256xf32>
    %122 = arith.mulf %5, %121 : vector<1x256xf32>
    %123 = vector.broadcast %122 : vector<1x256xf32> to vector<32x256xf32>
    %124 = arith.mulf %94, %123 : vector<32x256xf32>
    %125 = arith.mulf %111, %122 : vector<1x256xf32>
    %126 = arith.subf %6, %125 : vector<1x256xf32>
    %127 = vector.broadcast %126 : vector<1x256xf32> to vector<32x256xf32>
    %128 = arith.addf %124, %127 : vector<32x256xf32>
    %cst_46 = arith.constant 0.000000e+00 : f32
    %129 = vector.broadcast %cst_46 : f32 to vector<32x64xf32>
    %130 = arith.truncf %128 : vector<32x256xf32> to vector<32x256xbf16>
    %c0_47 = arith.constant 0 : index
    %c0_48 = arith.constant 0 : index
    %c0_49 = arith.constant 0 : index
    %131 = vector.load %arg3[%c0_47, %c0_48, %c0_49] : memref<4x256x64xbf16, #tpu.memory_space<vmem>>, vector<1x256x64xbf16>
    %132 = vector.shape_cast %131 : vector<1x256x64xbf16> to vector<256x64xbf16>
    %cst_50 = arith.constant dense<0.000000e+00> : vector<32x64xf32>
    %133 = tpu.matmul %130, %132, %cst_50 {dimension_numbers = #tpu.dot_dimension_numbers<[1], [0], [0], [1], [0, 0, 1, 1], [], []>} : vector<32x256xbf16>, vector<256x64xbf16>, vector<32x64xf32> -> vector<32x64xf32>
    %134 = arith.addf %129, %133 : vector<32x64xf32>
    %c31_i32_51 = arith.constant 31 : i32
    %135 = tpu.dynamic_rotate %128 by %c31_i32_51 dim 0 : vector<32x256xf32>, i32 -> vector<32x256xf32>
    %136 = arith.truncf %135 : vector<32x256xf32> to vector<32x256xbf16>
    %c1_52 = arith.constant 1 : index
    %c0_53 = arith.constant 0 : index
    %c0_54 = arith.constant 0 : index
    %137 = vector.load %arg3[%c1_52, %c0_53, %c0_54] : memref<4x256x64xbf16, #tpu.memory_space<vmem>>, vector<1x256x64xbf16>
    %138 = vector.shape_cast %137 : vector<1x256x64xbf16> to vector<256x64xbf16>
    %cst_55 = arith.constant dense<0.000000e+00> : vector<32x64xf32>
    %139 = tpu.matmul %136, %138, %cst_55 {dimension_numbers = #tpu.dot_dimension_numbers<[1], [0], [0], [1], [0, 0, 1, 1], [], []>} : vector<32x256xbf16>, vector<256x64xbf16>, vector<32x64xf32> -> vector<32x64xf32>
    %140 = arith.addf %134, %139 : vector<32x64xf32>
    %c28_i32_56 = arith.constant 28 : i32
    %141 = tpu.dynamic_rotate %128 by %c28_i32_56 dim 0 : vector<32x256xf32>, i32 -> vector<32x256xf32>
    %142 = arith.truncf %141 : vector<32x256xf32> to vector<32x256xbf16>
    %c2_57 = arith.constant 2 : index
    %c0_58 = arith.constant 0 : index
    %c0_59 = arith.constant 0 : index
    %143 = vector.load %arg3[%c2_57, %c0_58, %c0_59] : memref<4x256x64xbf16, #tpu.memory_space<vmem>>, vector<1x256x64xbf16>
    %144 = vector.shape_cast %143 : vector<1x256x64xbf16> to vector<256x64xbf16>
    %cst_60 = arith.constant dense<0.000000e+00> : vector<32x64xf32>
    %145 = tpu.matmul %142, %144, %cst_60 {dimension_numbers = #tpu.dot_dimension_numbers<[1], [0], [0], [1], [0, 0, 1, 1], [], []>} : vector<32x256xbf16>, vector<256x64xbf16>, vector<32x64xf32> -> vector<32x64xf32>
    %146 = arith.addf %140, %145 : vector<32x64xf32>
    %c27_i32_61 = arith.constant 27 : i32
    %147 = tpu.dynamic_rotate %128 by %c27_i32_61 dim 0 : vector<32x256xf32>, i32 -> vector<32x256xf32>
    %148 = arith.truncf %147 : vector<32x256xf32> to vector<32x256xbf16>
    %c3_62 = arith.constant 3 : index
    %c0_63 = arith.constant 0 : index
    %c0_64 = arith.constant 0 : index
    %149 = vector.load %arg3[%c3_62, %c0_63, %c0_64] : memref<4x256x64xbf16, #tpu.memory_space<vmem>>, vector<1x256x64xbf16>
    %150 = vector.shape_cast %149 : vector<1x256x64xbf16> to vector<256x64xbf16>
    %cst_65 = arith.constant dense<0.000000e+00> : vector<32x64xf32>
    %151 = tpu.matmul %148, %150, %cst_65 {dimension_numbers = #tpu.dot_dimension_numbers<[1], [0], [0], [1], [0, 0, 1, 1], [], []>} : vector<32x256xbf16>, vector<256x64xbf16>, vector<32x64xf32> -> vector<32x64xf32>
    %152 = arith.addf %146, %151 : vector<32x64xf32>
    %153 = vector.broadcast %7 : vector<1x64xf32> to vector<32x64xf32>
    %154 = arith.addf %152, %153 : vector<32x64xf32>
    %cst_66 = arith.constant 0.000000e+00 : f32
    %155 = vector.broadcast %cst_66 : f32 to vector<32x64xf32>
    %156 = arith.maximumf %154, %155 : vector<32x64xf32>
    %c0_67 = arith.constant 0 : index
    %c0_68 = arith.constant 0 : index
    %157 = vector.load %arg4[%c0_67, %c0_68] : memref<64x4xf32, #tpu.memory_space<vmem>>, vector<64x4xf32>
    %cst_69 = arith.constant dense<0.000000e+00> : vector<32x4xf32>
    %158 = tpu.matmul %156, %157, %cst_69 {dimension_numbers = #tpu.dot_dimension_numbers<[1], [0], [0], [1], [0, 0, 1, 1], [], []>} : vector<32x64xf32>, vector<64x4xf32>, vector<32x4xf32> -> vector<32x4xf32>
    %159 = vector.broadcast %8 : vector<1x4xf32> to vector<32x4xf32>
    %160 = arith.addf %158, %159 : vector<32x4xf32>
    %cst_70 = arith.constant dense<0xFF800000> : vector<32xf32>
    %161 = vector.multi_reduction <maximumf>, %160, %cst_70 [1] : vector<32x4xf32> to vector<32xf32>
    %162 = vector.shape_cast %161 : vector<32xf32> to vector<32x1xf32>
    %163 = vector.broadcast %162 : vector<32x1xf32> to vector<32x4xf32>
    %164 = arith.subf %160, %163 : vector<32x4xf32>
    %165 = math.exp %164 : vector<32x4xf32>
    %cst_71 = arith.constant dense<0.000000e+00> : vector<32xf32>
    %166 = vector.multi_reduction <add>, %165, %cst_71 [1] : vector<32x4xf32> to vector<32xf32>
    %167 = vector.shape_cast %166 : vector<32xf32> to vector<32x1xf32>
    %168 = math.log %167 : vector<32x1xf32>
    %169 = vector.broadcast %168 : vector<32x1xf32> to vector<32x4xf32>
    %170 = arith.subf %164, %169 : vector<32x4xf32>
    %171 = vector.extract_strided_slice %170 {offsets = [0, 0], sizes = [1, 4], strides = [1, 1]} : vector<32x4xf32> to vector<1x4xf32>
    %172 = vector.extract_strided_slice %170 {offsets = [16, 0], sizes = [1, 4], strides = [1, 1]} : vector<32x4xf32> to vector<1x4xf32>
    %173 = tpu.concatenate %171, %172 in 0 : vector<1x4xf32>, vector<1x4xf32> -> vector<2x4xf32>
    %c0_72 = arith.constant 0 : index
    %c0_73 = arith.constant 0 : index
    %174 = vector.load %arg6[%c0_72, %c0_73] : memref<2x4xf32, #tpu.memory_space<vmem>>, vector<2x4xf32>
    tpu.vector_store %arg6[%c0_72, %c0_73], %173 {strides = array<i32>} : memref<2x4xf32, #tpu.memory_space<vmem>>, vector<2x4xf32>,
    return
  }
}

</mosaic_0001>

<llo_original>
// kernel: actor_forward.1
$region0: #{actor_forward.1}
  #allocation0 [shape = 'u32[]', space=smem, size = 0x4, offset = 0x4, fixed_abs, tag = 'smem constant byte address 0x4 - core index']
  #allocation1 [shape = 'u32[144,128]{1,0:T(1,128)}', space=vmem, size = 0x12000, scoped, tag = 'internal scratch']
  %s0 = inlined_call_operand.vmem [shape: bf16[32,256], index: 0, kind: input, shape index: {}]
  %s1 = inlined_call_operand.hbm [shape: bf16[256,256], index: 1, kind: input, shape index: {}]
  %s2 = inlined_call_operand.hbm [shape: bf16[9,256,256], index: 2, kind: input, shape index: {}]
  %s3 = inlined_call_operand.vmem [shape: bf16[4,256,64], index: 3, kind: input, shape index: {}]
  %s4 = inlined_call_operand.vmem [shape: f32[64,4], index: 4, kind: input, shape index: {}]
  %s5 = inlined_call_operand.hbm [shape: f32[8,256], index: 5, kind: input, shape index: {}]
  %s6 = inlined_call_operand.hbm [shape: f32[2,4], index: 6, kind: output, shape index: {}]
  %s7 = sld [smem:[#allocation0]]
  $region46: #{actor_forward.1} parent=0
    _
  %s9 = ssub.s32 1, %s7
  %s10 = scalar_select 0, %s9, %s7
  $region1: #{actor_forward.1} parent=0
    #allocation2 [shape = 'u8[131072]{0}', space=vmem, size = 0x20000, scoped, tag = 'input window, operand 1, single buffered']
    #allocation3 [shape = 's32[1]{0}', space=sflag, size = 0x4, scoped, tag = 'scoped memory for actor_forward.1']
    #allocation4 [shape = 's32[1]{0}', space=sflag, size = 0x4, scoped, tag = 'scoped memory for actor_forward.1']
    #allocation5 [shape = 'u8[1179648]{0}', space=vmem, size = 0x120000, scoped, tag = 'input window, operand 2, single buffered']
    #allocation6 [shape = 's32[1]{0}', space=sflag, size = 0x4, scoped, tag = 'scoped memory for actor_forward.1']
    #allocation7 [shape = 'u8[8192]{0}', space=vmem, size = 0x2000, scoped, tag = 'input window, operand 5, single buffered']
    #allocation8 [shape = 'u8[1024]{0}', space=vmem, size = 0x400, scoped, tag = 'output window, operand 0, single buffered']
    %11 = vsyncpa [#allocation3], 0
    %12 = vsyncpa [#allocation6], 0
    %13 = vsyncpa [#allocation4], 0
    // Predicated region
    $region2: #{actor_forward.1} parent=1 // pred_check
      _
    $region3: #{actor_forward.1} parent=1 // pred_check_branch
      %15 = sbr.rel (0) target = $region5
    $region4: #{actor_forward.1} parent=1 // pred_region
      _
    $region5: #{actor_forward.1} parent=1 // pred_fallthru
      _
    // Predicated region
    $region6: #{actor_forward.1} parent=1 // pred_check
      _
    $region7: #{actor_forward.1} parent=1 // pred_check_branch
      %17 = sbr.rel (0) target = $region9
    $region8: #{actor_forward.1} parent=1 // pred_region
      %s19 = ssub.s32 4096, 4096
      %20 = vsyncadd [#allocation3], %s19
      %s21 = sshll.u32 [#allocation2], 4
      %s22 = int_to_ptr.vmem [resolvable:$true] %s21
      %27 = dma.hbm_to_vmem [thread:$0]  %s1, 4096, %s22, [#allocation3], 128, 128, 8
    $region9: #{actor_forward.1} parent=1 // pred_fallthru
      _
    // Predicated region
    $region10: #{actor_forward.1} parent=1 // pred_check
      _
    $region11: #{actor_forward.1} parent=1 // pred_check_branch
      %29 = sbr.rel (0) target = $region13
    $region12: #{actor_forward.1} parent=1 // pred_region
      %s31 = ssub.s32 36864, 36864
      %32 = vsyncadd [#allocation6], %s31
      %s33 = sshll.u32 [#allocation5], 4
      %s34 = int_to_ptr.vmem [resolvable:$true] %s33
      %39 = dma.hbm_to_vmem [thread:$0]  %s2, 36864, %s34, [#allocation6], 128, 128, 8
    $region13: #{actor_forward.1} parent=1 // pred_fallthru
      _
    // Predicated region
    $region14: #{actor_forward.1} parent=1 // pred_check
      _
    $region15: #{actor_forward.1} parent=1 // pred_check_branch
      %41 = sbr.rel (0) target = $region17
    $region16: #{actor_forward.1} parent=1 // pred_region
      _
    $region17: #{actor_forward.1} parent=1 // pred_fallthru
      _
    // Predicated region
    $region18: #{actor_forward.1} parent=1 // pred_check
      _
    $region19: #{actor_forward.1} parent=1 // pred_check_branch
      %43 = sbr.rel (0) target = $region21
    $region20: #{actor_forward.1} parent=1 // pred_region
      _
    $region21: #{actor_forward.1} parent=1 // pred_fallthru
      _
    // Predicated region
    $region22: #{actor_forward.1} parent=1 // pred_check
      _
    $region23: #{actor_forward.1} parent=1 // pred_check_branch
      %45 = sbr.rel (0) target = $region25
    $region24: #{actor_forward.1} parent=1 // pred_region
      %s47 = ssub.s32 256, 256
      %48 = vsyncadd [#allocation6], %s47
      %s50 = sshll.u32 [#allocation7], 4
      %s51 = int_to_ptr.vmem [resolvable:$true] %s50
      %53 = dma.hbm_to_vmem [thread:$0]  %s5, 256, %s51, [#allocation6]
    $region25: #{actor_forward.1} parent=1 // pred_fallthru
      _
    // Predicated region
    $region26: #{actor_forward.1} parent=1 // pred_check
      _
    $region27: #{actor_forward.1} parent=1 // pred_check_branch
      %55 = sbr.rel (0) target = $region29
    $region28: #{actor_forward.1} parent=1 // pred_region
      %56 = dma.done [#allocation3], 4096
    $region29: #{actor_forward.1} parent=1 // pred_fallthru
      _
    // Predicated region
    $region30: #{actor_forward.1} parent=1 // pred_check
      _
    $region31: #{actor_forward.1} parent=1 // pred_check_branch
      %58 = sbr.rel (0) target = $region33
    $region32: #{actor_forward.1} parent=1 // pred_region
      %59 = dma.done [#allocation6], 36864
    $region33: #{actor_forward.1} parent=1 // pred_fallthru
      _
    // Predicated region
    $region34: #{actor_forward.1} parent=1 // pred_check
      _
    $region35: #{actor_forward.1} parent=1 // pred_check_branch
      %61 = sbr.rel (0) target = $region37
    $region36: #{actor_forward.1} parent=1 // pred_region
      %62 = dma.done [#allocation6], 256
    $region37: #{actor_forward.1} parent=1 // pred_fallthru
      _
    %v64 = vld [vmem:[#allocation7] sm:$0xff]
    %v65 = vld [vmem:[#allocation7 + $0x8] sm:$0xff]
    %v66 = vld [vmem:[%s0] sm:$0xff]
    %v67 = vld [vmem:[%s0 + $0x8] sm:$0xff]
    %v68 = vld [vmem:[%s0 + $0x10] sm:$0xff]
    %v69 = vld [vmem:[%s0 + $0x18] sm:$0xff]
    %v70 = vld [vmem:[#allocation2] sm:$0xff]
    %v71 = vld [vmem:[#allocation2 + $0x8] sm:$0xff]
    %v72 = vld [vmem:[#allocation2 + $0x10] sm:$0xff]
    %v73 = vld [vmem:[#allocation2 + $0x18] sm:$0xff]
    %v74 = vld [vmem:[#allocation2 + $0x20] sm:$0xff]
    %v75 = vld [vmem:[#allocation2 + $0x28] sm:$0xff]
    %v76 = vld [vmem:[#allocation2 + $0x30] sm:$0xff]
    %v77 = vld [vmem:[#allocation2 + $0x38] sm:$0xff]
    %v78 = vld [vmem:[#allocation2 + $0x40] sm:$0xff]
    %v79 = vld [vmem:[#allocation2 + $0x48] sm:$0xff]
    %v80 = vld [vmem:[#allocation2 + $0x50] sm:$0xff]
    %v81 = vld [vmem:[#allocation2 + $0x58] sm:$0xff]
    %v82 = vld [vmem:[#allocation2 + $0x60] sm:$0xff]
    %v83 = vld [vmem:[#allocation2 + $0x68] sm:$0xff]
    %v84 = vld [vmem:[#allocation2 + $0x70] sm:$0xff]
    %v85 = vld [vmem:[#allocation2 + $0x78] sm:$0xff]
    %v86 = vld [vmem:[#allocation2 + $0x80] sm:$0xff]
    %v87 = vld [vmem:[#allocation2 + $0x88] sm:$0xff]
    %v88 = vld [vmem:[#allocation2 + $0x90] sm:$0xff]
    %v89 = vld [vmem:[#allocation2 + $0x98] sm:$0xff]
    %v90 = vld [vmem:[#allocation2 + $0xa0] sm:$0xff]
    %v91 = vld [vmem:[#allocation2 + $0xa8] sm:$0xff]
    %v92 = vld [vmem:[#allocation2 + $0xb0] sm:$0xff]
    %v93 = vld [vmem:[#allocation2 + $0xb8] sm:$0xff]
    %v94 = vld [vmem:[#allocation2 + $0xc0] sm:$0xff]
    %v95 = vld [vmem:[#allocation2 + $0xc8] sm:$0xff]
    %v96 = vld [vmem:[#allocation2 + $0xd0] sm:$0xff]
    %v97 = vld [vmem:[#allocation2 + $0xd8] sm:$0xff]
    %v98 = vld [vmem:[#allocation2 + $0xe0] sm:$0xff]
    %v99 = vld [vmem:[#allocation2 + $0xe8] sm:$0xff]
    %v100 = vld [vmem:[#allocation2 + $0xf0] sm:$0xff]
    %v101 = vld [vmem:[#allocation2 + $0xf8] sm:$0xff]
    %v102 = vlaneseq
    %v103 = vshrl.u32 %v102, 7
    %v104 = vsub.s32 0, %v103
    %v105 = vrot.slane %v64, %v104
    %v106 = vlaneseq
    %v107 = vshrl.u32 %v106, 7
    %v108 = vsub.s32 0, %v107
    %v109 = vrot.slane %v65, %v108
    %v114 = vunpack.c.l.b16 %v66
    %v115 = vunpack.c.h.b16 %v66
    %v116 = vunpack.c.l.b16 %v67
    %v117 = vunpack.c.h.b16 %v67
    %v118 = vunpack.c.l.b16 %v68
    %v119 = vunpack.c.h.b16 %v68
    %v120 = vunpack.c.l.b16 %v69
    %v121 = vunpack.c.h.b16 %v69
    %v122 = vpack.c.b16 %v116, %v114
    %v123 = vpack.c.b16 %v117, %v115
    %v124 = vpack.c.b16 %v120, %v118
    %v125 = vpack.c.b16 %v121, %v119
    %v162 = vunpack.c.l.b16 %v70
    %v163 = vunpack.c.h.b16 %v70
    %v164 = vunpack.c.l.b16 %v71
    %v165 = vunpack.c.h.b16 %v71
    %v166 = vunpack.c.l.b16 %v72
    %v167 = vunpack.c.h.b16 %v72
    %v168 = vunpack.c.l.b16 %v73
    %v169 = vunpack.c.h.b16 %v73
    %v170 = vunpack.c.l.b16 %v74
    %v171 = vunpack.c.h.b16 %v74
    %v172 = vunpack.c.l.b16 %v75
    %v173 = vunpack.c.h.b16 %v75
    %v174 = vunpack.c.l.b16 %v76
    %v175 = vunpack.c.h.b16 %v76
    %v176 = vunpack.c.l.b16 %v77
    %v177 = vunpack.c.h.b16 %v77
    %v178 = vunpack.c.l.b16 %v78
    %v179 = vunpack.c.h.b16 %v78
    %v180 = vunpack.c.l.b16 %v79
    %v181 = vunpack.c.h.b16 %v79
    %v182 = vunpack.c.l.b16 %v80
    %v183 = vunpack.c.h.b16 %v80
    %v184 = vunpack.c.l.b16 %v81
    %v185 = vunpack.c.h.b16 %v81
    %v186 = vunpack.c.l.b16 %v82
    %v187 = vunpack.c.h.b16 %v82
    %v188 = vunpack.c.l.b16 %v83
    %v189 = vunpack.c.h.b16 %v83
    %v190 = vunpack.c.l.b16 %v84
    %v191 = vunpack.c.h.b16 %v84
    %v192 = vunpack.c.l.b16 %v85
    %v193 = vunpack.c.h.b16 %v85
    %v194 = vunpack.c.l.b16 %v86
    %v195 = vunpack.c.h.b16 %v86
    %v196 = vunpack.c.l.b16 %v87
    %v197 = vunpack.c.h.b16 %v87
    %v198 = vunpack.c.l.b16 %v88
    %v199 = vunpack.c.h.b16 %v88
    %v200 = vunpack.c.l.b16 %v89
    %v201 = vunpack.c.h.b16 %v89
    %v202 = vunpack.c.l.b16 %v90
    %v203 = vunpack.c.h.b16 %v90
    %v204 = vunpack.c.l.b16 %v91
    %v205 = vunpack.c.h.b16 %v91
    %v206 = vunpack.c.l.b16 %v92
    %v207 = vunpack.c.h.b16 %v92
    %v208 = vunpack.c.l.b16 %v93
    %v209 = vunpack.c.h.b16 %v93
    %v210 = vunpack.c.l.b16 %v94
    %v211 = vunpack.c.h.b16 %v94
    %v212 = vunpack.c.l.b16 %v95
    %v213 = vunpack.c.h.b16 %v95
    %v214 = vunpack.c.l.b16 %v96
    %v215 = vunpack.c.h.b16 %v96
    %v216 = vunpack.c.l.b16 %v97
    %v217 = vunpack.c.h.b16 %v97
    %v218 = vunpack.c.l.b16 %v98
    %v219 = vunpack.c.h.b16 %v98
    %v220 = vunpack.c.l.b16 %v99
    %v221 = vunpack.c.h.b16 %v99
    %v222 = vunpack.c.l.b16 %v100
    %v223 = vunpack.c.h.b16 %v100
    %v224 = vunpack.c.l.b16 %v101
    %v225 = vunpack.c.h.b16 %v101
    %v226 = vpack.c.b16 %v164, %v162
    %v227 = vpack.c.b16 %v165, %v163
    %v228 = vpack.c.b16 %v168, %v166
    %v229 = vpack.c.b16 %v169, %v167
    %v230 = vpack.c.b16 %v172, %v170
    %v231 = vpack.c.b16 %v173, %v171
    %v232 = vpack.c.b16 %v176, %v174
    %v233 = vpack.c.b16 %v177, %v175
    %v234 = vpack.c.b16 %v180, %v178
    %v235 = vpack.c.b16 %v181, %v179
    %v236 = vpack.c.b16 %v184, %v182
    %v237 = vpack.c.b16 %v185, %v183
    %v238 = vpack.c.b16 %v188, %v186
    %v239 = vpack.c.b16 %v189, %v187
    %v240 = vpack.c.b16 %v192, %v190
    %v241 = vpack.c.b16 %v193, %v191
    %v242 = vpack.c.b16 %v196, %v194
    %v243 = vpack.c.b16 %v197, %v195
    %v244 = vpack.c.b16 %v200, %v198
    %v245 = vpack.c.b16 %v201, %v199
    %v246 = vpack.c.b16 %v204, %v202
    %v247 = vpack.c.b16 %v205, %v203
    %v248 = vpack.c.b16 %v208, %v206
    %v249 = vpack.c.b16 %v209, %v207
    %v250 = vpack.c.b16 %v212, %v210
    %v251 = vpack.c.b16 %v213, %v211
    %v252 = vpack.c.b16 %v216, %v214
    %v253 = vpack.c.b16 %v217, %v215
    %v254 = vpack.c.b16 %v220, %v218
    %v255 = vpack.c.b16 %v221, %v219
    %v256 = vpack.c.b16 %v224, %v222
    %v257 = vpack.c.b16 %v225, %v223
    %290 = vmatprep.subr.bf16.mxu0 %v227
    %291 = vmatpush1.bf16.msra.mxu0 %v226
    %292 = vmatprep.subr.bf16.mxu0 %v229
    %293 = vmatpush1.bf16.msra.mxu0 %v228
    %294 = vmatprep.subr.bf16.mxu0 %v231
    %295 = vmatpush1.bf16.msra.mxu0 %v230
    %296 = vmatprep.subr.bf16.mxu0 %v233
    %297 = vmatpush1.bf16.msra.mxu0 %v232
    %298 = vmatprep.subr.bf16.mxu0 %v235
    %299 = vmatpush1.bf16.msra.mxu0 %v234
    %300 = vmatprep.subr.bf16.mxu0 %v237
    %301 = vmatpush1.bf16.msra.mxu0 %v236
    %302 = vmatprep.subr.bf16.mxu0 %v239
    %303 = vmatpush1.bf16.msra.mxu0 %v238
    %304 = vmatprep.subr.bf16.mxu0 %v241
    %305 = vmatpush1.bf16.msra.mxu0 %v240
    %306 = vmatprep.subr.bf16.mxu0 %v243
    %307 = vmatpush1.bf16.msra.mxu0 %v242
    %308 = vmatprep.subr.bf16.mxu0 %v245
    %309 = vmatpush1.bf16.msra.mxu0 %v244
    %310 = vmatprep.subr.bf16.mxu0 %v247
    %311 = vmatpush1.bf16.msra.mxu0 %v246
    %312 = vmatprep.subr.bf16.mxu0 %v249
    %313 = vmatpush1.bf16.msra.mxu0 %v248
    %314 = vmatprep.subr.bf16.mxu0 %v251
    %315 = vmatpush1.bf16.msra.mxu0 %v250
    %316 = vmatprep.subr.bf16.mxu0 %v253
    %317 = vmatpush1.bf16.msra.mxu0 %v252
    %318 = vmatprep.subr.bf16.mxu0 %v255
    %319 = vmatpush1.bf16.msra.mxu0 %v254
    %320 = vmatprep.subr.bf16.mxu0 %v257
    %321 = vmatpush1.bf16.msra.mxu0 %v256
    %322 = vmatprep.mubr.bf16.mxu0 %v123
    %323 = vmatmul.mubr.bf16.gmra.mrb[0].mxu0 %v122
    %v324 = vpop.f32.mrb[0].mxu0
    %v325 = vadd.f32 %v105, %v324
    %v326 = vpop.f32.mrb[0].mxu0
    %v327 = vadd.f32 %v109, %v326
    %v328 = vpop.f32.mrb[0].mxu0
    %v329 = vadd.f32 %v105, %v328
    %v330 = vpop.f32.mrb[0].mxu0
    %v331 = vadd.f32 %v109, %v330
    %332 = vmatprep.mubr.bf16.mxu0 %v125
    %333 = vmatmul.mubr.bf16.gmra.mrb[0].mxu0 %v124
    %v334 = vpop.f32.mrb[0].mxu0
    %v335 = vadd.f32 %v105, %v334
    %v336 = vpop.f32.mrb[0].mxu0
    %v337 = vadd.f32 %v109, %v336
    %v338 = vpop.f32.mrb[0].mxu0
    %v339 = vadd.f32 %v105, %v338
    %v340 = vpop.f32.mrb[0].mxu0
    %v341 = vadd.f32 %v109, %v340
    %342 = vdwg.mxu0
    %v343 = vmax.f32 %v325, 0.0
    %v344 = vmax.f32 %v327, 0.0
    %v345 = vmax.f32 %v329, 0.0
    %v346 = vmax.f32 %v331, 0.0
    %v347 = vmax.f32 %v335, 0.0
    %v348 = vmax.f32 %v337, 0.0
    %v349 = vmax.f32 %v339, 0.0
    %v350 = vmax.f32 %v341, 0.0
    %v351 = vadd.f32 %v343, %v345
    %v352 = vadd.f32 %v351, %v347
    %v353 = vadd.f32 %v352, %v349
    %v354 = vrot.slane %v353, 4
    %v355 = vadd.f32 %v353, %v354
    %v356 = vrot.slane %v355, 2
    %v357 = vadd.f32 %v355, %v356
    %v358 = vrot.slane %v357, 1
    %v359 = vadd.f32 %v357, %v358
    %v360 = vadd.f32 %v344, %v346
    %v361 = vadd.f32 %v360, %v348
    %v362 = vadd.f32 %v361, %v350
    %v363 = vrot.slane %v362, 4
    %v364 = vadd.f32 %v362, %v363
    %v365 = vrot.slane %v364, 2
    %v366 = vadd.f32 %v364, %v365
    %v367 = vrot.slane %v366, 1
    %v368 = vadd.f32 %v366, %v367
    %v369 = vmul.f32 %v359, 0.03125
    %v370 = vmul.f32 %v368, 0.03125
    %v371 = vmul.f32 %v343, %v343
    %v372 = vmul.f32 %v344, %v344
    %v373 = vmul.f32 %v345, %v345
    %v374 = vmul.f32 %v346, %v346
    %v375 = vmul.f32 %v347, %v347
    %v376 = vmul.f32 %v348, %v348
    %v377 = vmul.f32 %v349, %v349
    %v378 = vmul.f32 %v350, %v350
    %v379 = vadd.f32 %v371, %v373
    %v380 = vadd.f32 %v379, %v375
    %v381 = vadd.f32 %v380, %v377
    %v382 = vrot.slane %v381, 4
    %v383 = vadd.f32 %v381, %v382
    %v384 = vrot.slane %v383, 2
    %v385 = vadd.f32 %v383, %v384
    %v386 = vrot.slane %v385, 1
    %v387 = vadd.f32 %v385, %v386
    %v388 = vadd.f32 %v372, %v374
    %v389 = vadd.f32 %v388, %v376
    %v390 = vadd.f32 %v389, %v378
    %v391 = vrot.slane %v390, 4
    %v392 = vadd.f32 %v390, %v391
    %v393 = vrot.slane %v392, 2
    %v394 = vadd.f32 %v392, %v393
    %v395 = vrot.slane %v394, 1
    %v396 = vadd.f32 %v394, %v395
    %v397 = vmul.f32 %v387, 0.03125
    %v398 = vmul.f32 %v396, 0.03125
    %v399 = vmul.f32 %v369, %v369
    %v400 = vmul.f32 %v370, %v370
    %v401 = vsub.f32 %v397, %v399
    %v402 = vsub.f32 %v398, %v400
    %v403 = vadd.f32 %v401, 1e-05
    %v404 = vadd.f32 %v402, 1e-05
    %v405 = vrsqrt.pop %v403
    %v406 = vrsqrt.pop %v404
    %v407 = vmul.f32 %v64, %v405
    %v408 = vmul.f32 %v65, %v406
    %v409 = vlaneseq
    %v410 = vshrl.u32 %v409, 7
    %v411 = vsub.s32 1, %v410
    %v412 = vrot.slane %v407, %v411
    %v413 = vlaneseq
    %v414 = vshrl.u32 %v413, 7
    %v415 = vsub.s32 1, %v414
    %v416 = vrot.slane %v408, %v415
    %v417 = vmul.f32 %v343, %v412
    %v418 = vmul.f32 %v344, %v416
    %v419 = vmul.f32 %v345, %v412
    %v420 = vmul.f32 %v346, %v416
    %v421 = vmul.f32 %v347, %v412
    %v422 = vmul.f32 %v348, %v416
    %v423 = vmul.f32 %v349, %v412
    %v424 = vmul.f32 %v350, %v416
    %v425 = vmul.f32 %v369, %v407
    %v426 = vmul.f32 %v370, %v408
    %v429 = vrot.slane %v425, 7
    %v430 = vrot.slane %v426, 7
    %v433 = vsub.f32 %v64, %v429
    %v434 = vsub.f32 %v65, %v430
    %v435 = vlaneseq
    %v436 = vshrl.u32 %v435, 7
    %v437 = vsub.s32 2, %v436
    %v438 = vrot.slane %v433, %v437
    %v439 = vlaneseq
    %v440 = vshrl.u32 %v439, 7
    %v441 = vsub.s32 2, %v440
    %v442 = vrot.slane %v434, %v441
    %v443 = vadd.f32 %v417, %v438
    %v444 = vadd.f32 %v418, %v442
    %v445 = vadd.f32 %v419, %v438
    %v446 = vadd.f32 %v420, %v442
    %v447 = vadd.f32 %v421, %v438
    %v448 = vadd.f32 %v422, %v442
    %v449 = vadd.f32 %v423, %v438
    %v450 = vadd.f32 %v424, %v442
    %v451 = vpack.c.bf16 %v445, %v443
    %v452 = vpack.c.bf16 %v446, %v444
    %v453 = vpack.c.bf16 %v449, %v447
    %v454 = vpack.c.bf16 %v450, %v448
    %v455 = vld [vmem:[#allocation5] sm:$0xff]
    %v456 = vld [vmem:[#allocation5 + $0x8] sm:$0xff]
    %v457 = vld [vmem:[#allocation5 + $0x10] sm:$0xff]
    %v458 = vld [vmem:[#allocation5 + $0x18] sm:$0xff]
    %v459 = vld [vmem:[#allocation5 + $0x20] sm:$0xff]
    %v460 = vld [vmem:[#allocation5 + $0x28] sm:$0xff]
    %v461 = vld [vmem:[#allocation5 + $0x30] sm:$0xff]
    %v462 = vld [vmem:[#allocation5 + $0x38] sm:$0xff]
    %v463 = vld [vmem:[#allocation5 + $0x40] sm:$0xff]
    %v464 = vld [vmem:[#allocation5 + $0x48] sm:$0xff]
    %v465 = vld [vmem:[#allocation5 + $0x50] sm:$0xff]
    %v466 = vld [vmem:[#allocation5 + $0x58] sm:$0xff]
    %v467 = vld [vmem:[#allocation5 + $0x60] sm:$0xff]
    %v468 = vld [vmem:[#allocation5 + $0x68] sm:$0xff]
    %v469 = vld [vmem:[#allocation5 + $0x70] sm:$0xff]
    %v470 = vld [vmem:[#allocation5 + $0x78] sm:$0xff]
    %v471 = vld [vmem:[#allocation5 + $0x80] sm:$0xff]
    %v472 = vld [vmem:[#allocation5 + $0x88] sm:$0xff]
    %v473 = vld [vmem:[#allocation5 + $0x90] sm:$0xff]
    %v474 = vld [vmem:[#allocation5 + $0x98] sm:$0xff]
    %v475 = vld [vmem:[#allocation5 + $0xa0] sm:$0xff]
    %v476 = vld [vmem:[#allocation5 + $0xa8] sm:$0xff]
    %v477 = vld [vmem:[#allocation5 + $0xb0] sm:$0xff]
    %v478 = vld [vmem:[#allocation5 + $0xb8] sm:$0xff]
    %v479 = vld [vmem:[#allocation5 + $0xc0] sm:$0xff]
    %v480 = vld [vmem:[#allocation5 + $0xc8] sm:$0xff]
    %v481 = vld [vmem:[#allocation5 + $0xd0] sm:$0xff]
    %v482 = vld [vmem:[#allocation5 + $0xd8] sm:$0xff]
    %v483 = vld [vmem:[#allocation5 + $0xe0] sm:$0xff]
    %v484 = vld [vmem:[#allocation5 + $0xe8] sm:$0xff]
    %v485 = vld [vmem:[#allocation5 + $0xf0] sm:$0xff]
    %v486 = vld [vmem:[#allocation5 + $0xf8] sm:$0xff]
    %v487 = vrot.slane %v443, 1
    %v488 = vrot.slane %v444, 1
    %v489 = vrot.slane %v445, 1
    %v490 = vrot.slane %v446, 1
    %v491 = vrot.slane %v447, 1
    %v492 = vrot.slane %v448, 1
    %v493 = vrot.slane %v449, 1
    %v494 = vrot.slane %v450, 1
    %v495 = vlaneseq
    %v496 = vshrl.u32 %v495, 7
    %vm497 = vcmp.lt.s32.totalorder %v496, 7
    %v498 = vsel %vm497, %v491, %v493
    %v499 = vsel %vm497, %v492, %v494
    %v500 = vsel %vm497, %v489, %v491
    %v501 = vsel %vm497, %v490, %v492
    %v502 = vsel %vm497, %v487, %v489
    %v503 = vsel %vm497, %v488, %v490
    %v504 = vsel %vm497, %v493, %v487
    %v505 = vsel %vm497, %v494, %v488
    %v506 = vpack.c.bf16 %v500, %v502
    %v507 = vpack.c.bf16 %v501, %v503
    %v508 = vpack.c.bf16 %v504, %v498
    %v509 = vpack.c.bf16 %v505, %v499
    %s510 = scalar_lea.vmem [#allocation5], 256
    %v511 = vld [vmem:[%s510] sm:$0xff]
    %v512 = vld [vmem:[%s510 + $0x8] sm:$0xff]
    %v513 = vld [vmem:[%s510 + $0x10] sm:$0xff]
    %v514 = vld [vmem:[%s510 + $0x18] sm:$0xff]
    %v515 = vld [vmem:[%s510 + $0x20] sm:$0xff]
    %v516 = vld [vmem:[%s510 + $0x28] sm:$0xff]
    %v517 = vld [vmem:[%s510 + $0x30] sm:$0xff]
    %v518 = vld [vmem:[%s510 + $0x38] sm:$0xff]
    %v519 = vld [vmem:[%s510 + $0x40] sm:$0xff]
    %v520 = vld [vmem:[%s510 + $0x48] sm:$0xff]
    %v521 = vld [vmem:[%s510 + $0x50] sm:$0xff]
    %v522 = vld [vmem:[%s510 + $0x58] sm:$0xff]
    %v523 = vld [vmem:[%s510 + $0x60] sm:$0xff]
    %v524 = vld [vmem:[%s510 + $0x68] sm:$0xff]
    %v525 = vld [vmem:[%s510 + $0x70] sm:$0xff]
    %v526 = vld [vmem:[%s510 + $0x78] sm:$0xff]
    %v527 = vld [vmem:[%s510 + $0x80] sm:$0xff]
    %v528 = vld [vmem:[%s510 + $0x88] sm:$0xff]
    %v529 = vld [vmem:[%s510 + $0x90] sm:$0xff]
    %v530 = vld [vmem:[%s510 + $0x98] sm:$0xff]
    %v531 = vld [vmem:[%s510 + $0xa0] sm:$0xff]
    %v532 = vld [vmem:[%s510 + $0xa8] sm:$0xff]
    %v533 = vld [vmem:[%s510 + $0xb0] sm:$0xff]
    %v534 = vld [vmem:[%s510 + $0xb8] sm:$0xff]
    %v535 = vld [vmem:[%s510 + $0xc0] sm:$0xff]
    %v536 = vld [vmem:[%s510 + $0xc8] sm:$0xff]
    %v537 = vld [vmem:[%s510 + $0xd0] sm:$0xff]
    %v538 = vld [vmem:[%s510 + $0xd8] sm:$0xff]
    %v539 = vld [vmem:[%s510 + $0xe0] sm:$0xff]
    %v540 = vld [vmem:[%s510 + $0xe8] sm:$0xff]
    %v541 = vld [vmem:[%s510 + $0xf0] sm:$0xff]
    %v542 = vld [vmem:[%s510 + $0xf8] sm:$0xff]
    %v575 = vunpack.c.l.b16 %v511
    %v576 = vunpack.c.h.b16 %v511
    %v577 = vunpack.c.l.b16 %v512
    %v578 = vunpack.c.h.b16 %v512
    %v579 = vunpack.c.l.b16 %v513
    %v580 = vunpack.c.h.b16 %v513
    %v581 = vunpack.c.l.b16 %v514
    %v582 = vunpack.c.h.b16 %v514
    %v583 = vunpack.c.l.b16 %v515
    %v584 = vunpack.c.h.b16 %v515
    %v585 = vunpack.c.l.b16 %v516
    %v586 = vunpack.c.h.b16 %v516
    %v587 = vunpack.c.l.b16 %v517
    %v588 = vunpack.c.h.b16 %v517
    %v589 = vunpack.c.l.b16 %v518
    %v590 = vunpack.c.h.b16 %v518
    %v591 = vunpack.c.l.b16 %v519
    %v592 = vunpack.c.h.b16 %v519
    %v593 = vunpack.c.l.b16 %v520
    %v594 = vunpack.c.h.b16 %v520
    %v595 = vunpack.c.l.b16 %v521
    %v596 = vunpack.c.h.b16 %v521
    %v597 = vunpack.c.l.b16 %v522
    %v598 = vunpack.c.h.b16 %v522
    %v599 = vunpack.c.l.b16 %v523
    %v600 = vunpack.c.h.b16 %v523
    %v601 = vunpack.c.l.b16 %v524
    %v602 = vunpack.c.h.b16 %v524
    %v603 = vunpack.c.l.b16 %v525
    %v604 = vunpack.c.h.b16 %v525
    %v605 = vunpack.c.l.b16 %v526
    %v606 = vunpack.c.h.b16 %v526
    %v607 = vunpack.c.l.b16 %v527
    %v608 = vunpack.c.h.b16 %v527
    %v609 = vunpack.c.l.b16 %v528
    %v610 = vunpack.c.h.b16 %v528
    %v611 = vunpack.c.l.b16 %v529
    %v612 = vunpack.c.h.b16 %v529
    %v613 = vunpack.c.l.b16 %v530
    %v614 = vunpack.c.h.b16 %v530
    %v615 = vunpack.c.l.b16 %v531
    %v616 = vunpack.c.h.b16 %v531
    %v617 = vunpack.c.l.b16 %v532
    %v618 = vunpack.c.h.b16 %v532
    %v619 = vunpack.c.l.b16 %v533
    %v620 = vunpack.c.h.b16 %v533
    %v621 = vunpack.c.l.b16 %v534
    %v622 = vunpack.c.h.b16 %v534
    %v623 = vunpack.c.l.b16 %v535
    %v624 = vunpack.c.h.b16 %v535
    %v625 = vunpack.c.l.b16 %v536
    %v626 = vunpack.c.h.b16 %v536
    %v627 = vunpack.c.l.b16 %v537
    %v628 = vunpack.c.h.b16 %v537
    %v629 = vunpack.c.l.b16 %v538
    %v630 = vunpack.c.h.b16 %v538
    %v631 = vunpack.c.l.b16 %v539
    %v632 = vunpack.c.h.b16 %v539
    %v633 = vunpack.c.l.b16 %v540
    %v634 = vunpack.c.h.b16 %v540
    %v635 = vunpack.c.l.b16 %v541
    %v636 = vunpack.c.h.b16 %v541
    %v637 = vunpack.c.l.b16 %v542
    %v638 = vunpack.c.h.b16 %v542
    %v639 = vpack.c.b16 %v577, %v575
    %v640 = vpack.c.b16 %v578, %v576
    %v641 = vpack.c.b16 %v581, %v579
    %v642 = vpack.c.b16 %v582, %v580
    %v643 = vpack.c.b16 %v585, %v583
    %v644 = vpack.c.b16 %v586, %v584
    %v645 = vpack.c.b16 %v589, %v587
    %v646 = vpack.c.b16 %v590, %v588
    %v647 = vpack.c.b16 %v593, %v591
    %v648 = vpack.c.b16 %v594, %v592
    %v649 = vpack.c.b16 %v597, %v595
    %v650 = vpack.c.b16 %v598, %v596
    %v651 = vpack.c.b16 %v601, %v599
    %v652 = vpack.c.b16 %v602, %v600
    %v653 = vpack.c.b16 %v605, %v603
    %v654 = vpack.c.b16 %v606, %v604
    %v655 = vpack.c.b16 %v609, %v607
    %v656 = vpack.c.b16 %v610, %v608
    %v657 = vpack.c.b16 %v613, %v611
    %v658 = vpack.c.b16 %v614, %v612
    %v659 = vpack.c.b16 %v617, %v615
    %v660 = vpack.c.b16 %v618, %v616
    %v661 = vpack.c.b16 %v621, %v619
    %v662 = vpack.c.b16 %v622, %v620
    %v663 = vpack.c.b16 %v625, %v623
    %v664 = vpack.c.b16 %v626, %v624
    %v665 = vpack.c.b16 %v629, %v627
    %v666 = vpack.c.b16 %v630, %v628
    %v667 = vpack.c.b16 %v633, %v631
    %v668 = vpack.c.b16 %v634, %v632
    %v669 = vpack.c.b16 %v637, %v635
    %v670 = vpack.c.b16 %v638, %v636
    %703 = vmatprep.subr.bf16.mxu0 %v640
    %704 = vmatpush1.bf16.msra.mxu0 %v639
    %705 = vmatprep.subr.bf16.mxu0 %v642
    %706 = vmatpush1.bf16.msra.mxu0 %v641
    %707 = vmatprep.subr.bf16.mxu0 %v644
    %708 = vmatpush1.bf16.msra.mxu0 %v643
    %709 = vmatprep.subr.bf16.mxu0 %v646
    %710 = vmatpush1.bf16.msra.mxu0 %v645
    %711 = vmatprep.subr.bf16.mxu0 %v648
    %712 = vmatpush1.bf16.msra.mxu0 %v647
    %713 = vmatprep.subr.bf16.mxu0 %v650
    %714 = vmatpush1.bf16.msra.mxu0 %v649
    %715 = vmatprep.subr.bf16.mxu0 %v652
    %716 = vmatpush1.bf16.msra.mxu0 %v651
    %717 = vmatprep.subr.bf16.mxu0 %v654
    %718 = vmatpush1.bf16.msra.mxu0 %v653
    %719 = vmatprep.subr.bf16.mxu0 %v656
    %720 = vmatpush1.bf16.msra.mxu0 %v655
    %721 = vmatprep.subr.bf16.mxu0 %v658
    %722 = vmatpush1.bf16.msra.mxu0 %v657
    %723 = vmatprep.subr.bf16.mxu0 %v660
    %724 = vmatpush1.bf16.msra.mxu0 %v659
    %725 = vmatprep.subr.bf16.mxu0 %v662
    %726 = vmatpush1.bf16.msra.mxu0 %v661
    %727 = vmatprep.subr.bf16.mxu0 %v664
    %728 = vmatpush1.bf16.msra.mxu0 %v663
    %729 = vmatprep.subr.bf16.mxu0 %v666
    %730 = vmatpush1.bf16.msra.mxu0 %v665
    %731 = vmatprep.subr.bf16.mxu0 %v668
    %732 = vmatpush1.bf16.msra.mxu0 %v667
    %733 = vmatprep.subr.bf16.mxu0 %v670
    %734 = vmatpush1.bf16.msra.mxu0 %v669
    %735 = vmatprep.mubr.bf16.mxu0 %v507
    %736 = vmatmul.mubr.bf16.gmra.mrb[0].mxu0 %v506
    %v737 = vpop.f32.mrb[0].mxu0
    %v738 = vadd.f32 0.0, %v737
    %v739 = vpop.f32.mrb[0].mxu0
    %v740 = vadd.f32 0.0, %v739
    %v741 = vpop.f32.mrb[0].mxu0
    %v742 = vadd.f32 0.0, %v741
    %v743 = vpop.f32.mrb[0].mxu0
    %v744 = vadd.f32 0.0, %v743
    %745 = vmatprep.mubr.bf16.mxu0 %v509
    %746 = vmatmul.mubr.bf16.gmra.mrb[0].mxu0 %v508
    %v747 = vpop.f32.mrb[0].mxu0
    %v748 = vadd.f32 0.0, %v747
    %v749 = vpop.f32.mrb[0].mxu0
    %v750 = vadd.f32 0.0, %v749
    %v751 = vpop.f32.mrb[0].mxu0
    %v752 = vadd.f32 0.0, %v751
    %v753 = vpop.f32.mrb[0].mxu0
    %v754 = vadd.f32 0.0, %v753
    %755 = vdwg.mxu0
    %v788 = vunpack.c.l.b16 %v455
    %v789 = vunpack.c.h.b16 %v455
    %v790 = vunpack.c.l.b16 %v456
    %v791 = vunpack.c.h.b16 %v456
    %v792 = vunpack.c.l.b16 %v457
    %v793 = vunpack.c.h.b16 %v457
    %v794 = vunpack.c.l.b16 %v458
    %v795 = vunpack.c.h.b16 %v458
    %v796 = vunpack.c.l.b16 %v459
    %v797 = vunpack.c.h.b16 %v459
    %v798 = vunpack.c.l.b16 %v460
    %v799 = vunpack.c.h.b16 %v460
    %v800 = vunpack.c.l.b16 %v461
    %v801 = vunpack.c.h.b16 %v461
    %v802 = vunpack.c.l.b16 %v462
    %v803 = vunpack.c.h.b16 %v462
    %v804 = vunpack.c.l.b16 %v463
    %v805 = vunpack.c.h.b16 %v463
    %v806 = vunpack.c.l.b16 %v464
    %v807 = vunpack.c.h.b16 %v464
    %v808 = vunpack.c.l.b16 %v465
    %v809 = vunpack.c.h.b16 %v465
    %v810 = vunpack.c.l.b16 %v466
    %v811 = vunpack.c.h.b16 %v466
    %v812 = vunpack.c.l.b16 %v467
    %v813 = vunpack.c.h.b16 %v467
    %v814 = vunpack.c.l.b16 %v468
    %v815 = vunpack.c.h.b16 %v468
    %v816 = vunpack.c.l.b16 %v469
    %v817 = vunpack.c.h.b16 %v469
    %v818 = vunpack.c.l.b16 %v470
    %v819 = vunpack.c.h.b16 %v470
    %v820 = vunpack.c.l.b16 %v471
    %v821 = vunpack.c.h.b16 %v471
    %v822 = vunpack.c.l.b16 %v472
    %v823 = vunpack.c.h.b16 %v472
    %v824 = vunpack.c.l.b16 %v473
    %v825 = vunpack.c.h.b16 %v473
    %v826 = vunpack.c.l.b16 %v474
    %v827 = vunpack.c.h.b16 %v474
    %v828 = vunpack.c.l.b16 %v475
    %v829 = vunpack.c.h.b16 %v475
    %v830 = vunpack.c.l.b16 %v476
    %v831 = vunpack.c.h.b16 %v476
    %v832 = vunpack.c.l.b16 %v477
    %v833 = vunpack.c.h.b16 %v477
    %v834 = vunpack.c.l.b16 %v478
    %v835 = vunpack.c.h.b16 %v478
    %v836 = vunpack.c.l.b16 %v479
    %v837 = vunpack.c.h.b16 %v479
    %v838 = vunpack.c.l.b16 %v480
    %v839 = vunpack.c.h.b16 %v480
    %v840 = vunpack.c.l.b16 %v481
    %v841 = vunpack.c.h.b16 %v481
    %v842 = vunpack.c.l.b16 %v482
    %v843 = vunpack.c.h.b16 %v482
    %v844 = vunpack.c.l.b16 %v483
    %v845 = vunpack.c.h.b16 %v483
    %v846 = vunpack.c.l.b16 %v484
    %v847 = vunpack.c.h.b16 %v484
    %v848 = vunpack.c.l.b16 %v485
    %v849 = vunpack.c.h.b16 %v485
    %v850 = vunpack.c.l.b16 %v486
    %v851 = vunpack.c.h.b16 %v486
    %v852 = vpack.c.b16 %v790, %v788
    %v853 = vpack.c.b16 %v791, %v789
    %v854 = vpack.c.b16 %v794, %v792
    %v855 = vpack.c.b16 %v795, %v793
    %v856 = vpack.c.b16 %v798, %v796
    %v857 = vpack.c.b16 %v799, %v797
    %v858 = vpack.c.b16 %v802, %v800
    %v859 = vpack.c.b16 %v803, %v801
    %v860 = vpack.c.b16 %v806, %v804
    %v861 = vpack.c.b16 %v807, %v805
    %v862 = vpack.c.b16 %v810, %v808
    %v863 = vpack.c.b16 %v811, %v809
    %v864 = vpack.c.b16 %v814, %v812
    %v865 = vpack.c.b16 %v815, %v813
    %v866 = vpack.c.b16 %v818, %v816
    %v867 = vpack.c.b16 %v819, %v817
    %v868 = vpack.c.b16 %v822, %v820
    %v869 = vpack.c.b16 %v823, %v821
    %v870 = vpack.c.b16 %v826, %v824
    %v871 = vpack.c.b16 %v827, %v825
    %v872 = vpack.c.b16 %v830, %v828
    %v873 = vpack.c.b16 %v831, %v829
    %v874 = vpack.c.b16 %v834, %v832
    %v875 = vpack.c.b16 %v835, %v833
    %v876 = vpack.c.b16 %v838, %v836
    %v877 = vpack.c.b16 %v839, %v837
    %v878 = vpack.c.b16 %v842, %v840
    %v879 = vpack.c.b16 %v843, %v841
    %v880 = vpack.c.b16 %v846, %v844
    %v881 = vpack.c.b16 %v847, %v845
    %v882 = vpack.c.b16 %v850, %v848
    %v883 = vpack.c.b16 %v851, %v849
    %916 = vmatprep.subr.bf16.mxu0 %v853
    %917 = vmatpush1.bf16.msra.mxu0 %v852
    %918 = vmatprep.subr.bf16.mxu0 %v855
    %919 = vmatpush1.bf16.msra.mxu0 %v854
    %920 = vmatprep.subr.bf16.mxu0 %v857
    %921 = vmatpush1.bf16.msra.mxu0 %v856
    %922 = vmatprep.subr.bf16.mxu0 %v859
    %923 = vmatpush1.bf16.msra.mxu0 %v858
    %924 = vmatprep.subr.bf16.mxu0 %v861
    %925 = vmatpush1.bf16.msra.mxu0 %v860
    %926 = vmatprep.subr.bf16.mxu0 %v863
    %927 = vmatpush1.bf16.msra.mxu0 %v862
    %928 = vmatprep.subr.bf16.mxu0 %v865
    %929 = vmatpush1.bf16.msra.mxu0 %v864
    %930 = vmatprep.subr.bf16.mxu0 %v867
    %931 = vmatpush1.bf16.msra.mxu0 %v866
    %932 = vmatprep.subr.bf16.mxu0 %v869
    %933 = vmatpush1.bf16.msra.mxu0 %v868
    %934 = vmatprep.subr.bf16.mxu0 %v871
    %935 = vmatpush1.bf16.msra.mxu0 %v870
    %936 = vmatprep.subr.bf16.mxu0 %v873
    %937 = vmatpush1.bf16.msra.mxu0 %v872
    %938 = vmatprep.subr.bf16.mxu0 %v875
    %939 = vmatpush1.bf16.msra.mxu0 %v874
    %940 = vmatprep.subr.bf16.mxu0 %v877
    %941 = vmatpush1.bf16.msra.mxu0 %v876
    %942 = vmatprep.subr.bf16.mxu0 %v879
    %943 = vmatpush1.bf16.msra.mxu0 %v878
    %944 = vmatprep.subr.bf16.mxu0 %v881
    %945 = vmatpush1.bf16.msra.mxu0 %v880
    %946 = vmatprep.subr.bf16.mxu0 %v883
    %947 = vmatpush1.bf16.msra.mxu0 %v882
    %948 = vmatprep.mubr.bf16.mxu0 %v452
    %949 = vmatmul.mubr.bf16.gmra.mrb[0].mxu0 %v451
    %v950 = vpop.f32.mrb[0].mxu0
    %v951 = vadd.f32 %v738, %v950
    %v952 = vpop.f32.mrb[0].mxu0
    %v953 = vadd.f32 %v740, %v952
    %v954 = vpop.f32.mrb[0].mxu0
    %v955 = vadd.f32 %v742, %v954
    %v956 = vpop.f32.mrb[0].mxu0
    %v957 = vadd.f32 %v744, %v956
    %958 = vmatprep.mubr.bf16.mxu0 %v454
    %959 = vmatmul.mubr.bf16.gmra.mrb[0].mxu0 %v453
    %v960 = vpop.f32.mrb[0].mxu0
    %v961 = vadd.f32 %v748, %v960
    %v962 = vpop.f32.mrb[0].mxu0
    %v963 = vadd.f32 %v750, %v962
    %v964 = vpop.f32.mrb[0].mxu0
    %v965 = vadd.f32 %v752, %v964
    %v966 = vpop.f32.mrb[0].mxu0
    %v967 = vadd.f32 %v754, %v966
    %968 = vdwg.mxu0
    %v969 = vrot.slane %v443, 2
    %v970 = vrot.slane %v444, 2
    %v971 = vrot.slane %v445, 2
    %v972 = vrot.slane %v446, 2
    %v973 = vrot.slane %v447, 2
    %v974 = vrot.slane %v448, 2
    %v975 = vrot.slane %v449, 2
    %v976 = vrot.slane %v450, 2
    %vm977 = vcmp.lt.s32.totalorder %v496, 6
    %v978 = vsel %vm977, %v973, %v975
    %v979 = vsel %vm977, %v974, %v976
    %v980 = vsel %vm977, %v971, %v973
    %v981 = vsel %vm977, %v972, %v974
    %v982 = vsel %vm977, %v969, %v971
    %v983 = vsel %vm977, %v970, %v972
    %v984 = vsel %vm977, %v975, %v969
    %v985 = vsel %vm977, %v976, %v970
    %v986 = vpack.c.bf16 %v980, %v982
    %v987 = vpack.c.bf16 %v981, %v983
    %v988 = vpack.c.bf16 %v984, %v978
    %v989 = vpack.c.bf16 %v985, %v979
    %s990 = scalar_lea.vmem [#allocation5], 512
    %v991 = vld [vmem:[%s990] sm:$0xff]
    %v992 = vld [vmem:[%s990 + $0x8] sm:$0xff]
    %v993 = vld [vmem:[%s990 + $0x10] sm:$0xff]
    %v994 = vld [vmem:[%s990 + $0x18] sm:$0xff]
    %v995 = vld [vmem:[%s990 + $0x20] sm:$0xff]
    %v996 = vld [vmem:[%s990 + $0x28] sm:$0xff]
    %v997 = vld [vmem:[%s990 + $0x30] sm:$0xff]
    %v998 = vld [vmem:[%s990 + $0x38] sm:$0xff]
    %v999 = vld [vmem:[%s990 + $0x40] sm:$0xff]
    %v1000 = vld [vmem:[%s990 + $0x48] sm:$0xff]
    %v1001 = vld [vmem:[%s990 + $0x50] sm:$0xff]
    %v1002 = vld [vmem:[%s990 + $0x58] sm:$0xff]
    %v1003 = vld [vmem:[%s990 + $0x60] sm:$0xff]
    %v1004 = vld [vmem:[%s990 + $0x68] sm:$0xff]
    %v1005 = vld [vmem:[%s990 + $0x70] sm:$0xff]
    %v1006 = vld [vmem:[%s990 + $0x78] sm:$0xff]
    %v1007 = vld [vmem:[%s990 + $0x80] sm:$0xff]
    %v1008 = vld [vmem:[%s990 + $0x88] sm:$0xff]
    %v1009 = vld [vmem:[%s990 + $0x90] sm:$0xff]
    %v1010 = vld [vmem:[%s990 + $0x98] sm:$0xff]
    %v1011 = vld [vmem:[%s990 + $0xa0] sm:$0xff]
    %v1012 = vld [vmem:[%s990 + $0xa8] sm:$0xff]
    %v1013 = vld [vmem:[%s990 + $0xb0] sm:$0xff]
    %v1014 = vld [vmem:[%s990 + $0xb8] sm:$0xff]
    %v1015 = vld [vmem:[%s990 + $0xc0] sm:$0xff]
    %v1016 = vld [vmem:[%s990 + $0xc8] sm:$0xff]
    %v1017 = vld [vmem:[%s990 + $0xd0] sm:$0xff]
    %v1018 = vld [vmem:[%s990 + $0xd8] sm:$0xff]
    %v1019 = vld [vmem:[%s990 + $0xe0] sm:$0xff]
    %v1020 = vld [vmem:[%s990 + $0xe8] sm:$0xff]
    %v1021 = vld [vmem:[%s990 + $0xf0] sm:$0xff]
    %v1022 = vld [vmem:[%s990 + $0xf8] sm:$0xff]
    %v1055 = vunpack.c.l.b16 %v991
    %v1056 = vunpack.c.h.b16 %v991
    %v1057 = vunpack.c.l.b16 %v992
    %v1058 = vunpack.c.h.b16 %v992
    %v1059 = vunpack.c.l.b16 %v993
    %v1060 = vunpack.c.h.b16 %v993
    %v1061 = vunpack.c.l.b16 %v994
    %v1062 = vunpack.c.h.b16 %v994
    %v1063 = vunpack.c.l.b16 %v995
    %v1064 = vunpack.c.h.b16 %v995
    %v1065 = vunpack.c.l.b16 %v996
    %v1066 = vunpack.c.h.b16 %v996
    %v1067 = vunpack.c.l.b16 %v997
    %v1068 = vunpack.c.h.b16 %v997
    %v1069 = vunpack.c.l.b16 %v998
    %v1070 = vunpack.c.h.b16 %v998
    %v1071 = vunpack.c.l.b16 %v999
    %v1072 = vunpack.c.h.b16 %v999
    %v1073 = vunpack.c.l.b16 %v1000
    %v1074 = vunpack.c.h.b16 %v1000
    %v1075 = vunpack.c.l.b16 %v1001
    %v1076 = vunpack.c.h.b16 %v1001
    %v1077 = vunpack.c.l.b16 %v1002
    %v1078 = vunpack.c.h.b16 %v1002
    %v1079 = vunpack.c.l.b16 %v1003
    %v1080 = vunpack.c.h.b16 %v1003
    %v1081 = vunpack.c.l.b16 %v1004
    %v1082 = vunpack.c.h.b16 %v1004
    %v1083 = vunpack.c.l.b16 %v1005
    %v1084 = vunpack.c.h.b16 %v1005
    %v1085 = vunpack.c.l.b16 %v1006
    %v1086 = vunpack.c.h.b16 %v1006
    %v1087 = vunpack.c.l.b16 %v1007
    %v1088 = vunpack.c.h.b16 %v1007
    %v1089 = vunpack.c.l.b16 %v1008
    %v1090 = vunpack.c.h.b16 %v1008
    %v1091 = vunpack.c.l.b16 %v1009
    %v1092 = vunpack.c.h.b16 %v1009
    %v1093 = vunpack.c.l.b16 %v1010
    %v1094 = vunpack.c.h.b16 %v1010
    %v1095 = vunpack.c.l.b16 %v1011
    %v1096 = vunpack.c.h.b16 %v1011
    %v1097 = vunpack.c.l.b16 %v1012
    %v1098 = vunpack.c.h.b16 %v1012
    %v1099 = vunpack.c.l.b16 %v1013
    %v1100 = vunpack.c.h.b16 %v1013
    %v1101 = vunpack.c.l.b16 %v1014
    %v1102 = vunpack.c.h.b16 %v1014
    %v1103 = vunpack.c.l.b16 %v1015
    %v1104 = vunpack.c.h.b16 %v1015
    %v1105 = vunpack.c.l.b16 %v1016
    %v1106 = vunpack.c.h.b16 %v1016
    %v1107 = vunpack.c.l.b16 %v1017
    %v1108 = vunpack.c.h.b16 %v1017
    %v1109 = vunpack.c.l.b16 %v1018
    %v1110 = vunpack.c.h.b16 %v1018
    %v1111 = vunpack.c.l.b16 %v1019
    %v1112 = vunpack.c.h.b16 %v1019
    %v1113 = vunpack.c.l.b16 %v1020
    %v1114 = vunpack.c.h.b16 %v1020
    %v1115 = vunpack.c.l.b16 %v1021
    %v1116 = vunpack.c.h.b16 %v1021
    %v1117 = vunpack.c.l.b16 %v1022
    %v1118 = vunpack.c.h.b16 %v1022
    %v1119 = vpack.c.b16 %v1057, %v1055
    %v1120 = vpack.c.b16 %v1058, %v1056
    %v1121 = vpack.c.b16 %v1061, %v1059
    %v1122 = vpack.c.b16 %v1062, %v1060
    %v1123 = vpack.c.b16 %v1065, %v1063
    %v1124 = vpack.c.b16 %v1066, %v1064
    %v1125 = vpack.c.b16 %v1069, %v1067
    %v1126 = vpack.c.b16 %v1070, %v1068
    %v1127 = vpack.c.b16 %v1073, %v1071
    %v1128 = vpack.c.b16 %v1074, %v1072
    %v1129 = vpack.c.b16 %v1077, %v1075
    %v1130 = vpack.c.b16 %v1078, %v1076
    %v1131 = vpack.c.b16 %v1081, %v1079
    %v1132 = vpack.c.b16 %v1082, %v1080
    %v1133 = vpack.c.b16 %v1085, %v1083
    %v1134 = vpack.c.b16 %v1086, %v1084
    %v1135 = vpack.c.b16 %v1089, %v1087
    %v1136 = vpack.c.b16 %v1090, %v1088
    %v1137 = vpack.c.b16 %v1093, %v1091
    %v1138 = vpack.c.b16 %v1094, %v1092
    %v1139 = vpack.c.b16 %v1097, %v1095
    %v1140 = vpack.c.b16 %v1098, %v1096
    %v1141 = vpack.c.b16 %v1101, %v1099
    %v1142 = vpack.c.b16 %v1102, %v1100
    %v1143 = vpack.c.b16 %v1105, %v1103
    %v1144 = vpack.c.b16 %v1106, %v1104
    %v1145 = vpack.c.b16 %v1109, %v1107
    %v1146 = vpack.c.b16 %v1110, %v1108
    %v1147 = vpack.c.b16 %v1113, %v1111
    %v1148 = vpack.c.b16 %v1114, %v1112
    %v1149 = vpack.c.b16 %v1117, %v1115
    %v1150 = vpack.c.b16 %v1118, %v1116
    %1183 = vmatprep.subr.bf16.mxu0 %v1120
    %1184 = vmatpush1.bf16.msra.mxu0 %v1119
    %1185 = vmatprep.subr.bf16.mxu0 %v1122
    %1186 = vmatpush1.bf16.msra.mxu0 %v1121
    %1187 = vmatprep.subr.bf16.mxu0 %v1124
    %1188 = vmatpush1.bf16.msra.mxu0 %v1123
    %1189 = vmatprep.subr.bf16.mxu0 %v1126
    %1190 = vmatpush1.bf16.msra.mxu0 %v1125
    %1191 = vmatprep.subr.bf16.mxu0 %v1128
    %1192 = vmatpush1.bf16.msra.mxu0 %v1127
    %1193 = vmatprep.subr.bf16.mxu0 %v1130
    %1194 = vmatpush1.bf16.msra.mxu0 %v1129
    %1195 = vmatprep.subr.bf16.mxu0 %v1132
    %1196 = vmatpush1.bf16.msra.mxu0 %v1131
    %1197 = vmatprep.subr.bf16.mxu0 %v1134
    %1198 = vmatpush1.bf16.msra.mxu0 %v1133
    %1199 = vmatprep.subr.bf16.mxu0 %v1136
    %1200 = vmatpush1.bf16.msra.mxu0 %v1135
    %1201 = vmatprep.subr.bf16.mxu0 %v1138
    %1202 = vmatpush1.bf16.msra.mxu0 %v1137
    %1203 = vmatprep.subr.bf16.mxu0 %v1140
    %1204 = vmatpush1.bf16.msra.mxu0 %v1139
    %1205 = vmatprep.subr.bf16.mxu0 %v1142
    %1206 = vmatpush1.bf16.msra.mxu0 %v1141
    %1207 = vmatprep.subr.bf16.mxu0 %v1144
    %1208 = vmatpush1.bf16.msra.mxu0 %v1143
    %1209 = vmatprep.subr.bf16.mxu0 %v1146
    %1210 = vmatpush1.bf16.msra.mxu0 %v1145
    %1211 = vmatprep.subr.bf16.mxu0 %v1148
    %1212 = vmatpush1.bf16.msra.mxu0 %v1147
    %1213 = vmatprep.subr.bf16.mxu0 %v1150
    %1214 = vmatpush1.bf16.msra.mxu0 %v1149
    %1215 = vmatprep.mubr.bf16.mxu0 %v987
    %1216 = vmatmul.mubr.bf16.gmra.mrb[0].mxu0 %v986
    %v1217 = vpop.f32.mrb[0].mxu0
    %v1218 = vadd.f32 0.0, %v1217
    %v1219 = vpop.f32.mrb[0].mxu0
    %v1220 = vadd.f32 0.0, %v1219
    %v1221 = vpop.f32.mrb[0].mxu0
    %v1222 = vadd.f32 0.0, %v1221
    %v1223 = vpop.f32.mrb[0].mxu0
    %v1224 = vadd.f32 0.0, %v1223
    %1225 = vmatprep.mubr.bf16.mxu0 %v989
    %1226 = vmatmul.mubr.bf16.gmra.mrb[0].mxu0 %v988
    %v1227 = vpop.f32.mrb[0].mxu0
    %v1228 = vadd.f32 0.0, %v1227
    %v1229 = vpop.f32.mrb[0].mxu0
    %v1230 = vadd.f32 0.0, %v1229
    %v1231 = vpop.f32.mrb[0].mxu0
    %v1232 = vadd.f32 0.0, %v1231
    %v1233 = vpop.f32.mrb[0].mxu0
    %v1234 = vadd.f32 0.0, %v1233
    %1235 = vdwg.mxu0
    %v1236 = vadd.f32 %v951, %v1218
    %v1237 = vadd.f32 %v953, %v1220
    %v1238 = vadd.f32 %v955, %v1222
    %v1239 = vadd.f32 %v957, %v1224
    %v1240 = vadd.f32 %v961, %v1228
    %v1241 = vadd.f32 %v963, %v1230
    %v1242 = vadd.f32 %v965, %v1232
    %v1243 = vadd.f32 %v967, %v1234
    %v1244 = vrot.slane %v443, 4
    %v1245 = vrot.slane %v444, 4
    %v1246 = vrot.slane %v445, 4
    %v1247 = vrot.slane %v446, 4
    %v1248 = vrot.slane %v447, 4
    %v1249 = vrot.slane %v448, 4
    %v1250 = vrot.slane %v449, 4
    %v1251 = vrot.slane %v450, 4
    %vm1252 = vcmp.lt.s32.totalorder %v496, 4
    %v1253 = vsel %vm1252, %v1248, %v1250
    %v1254 = vsel %vm1252, %v1249, %v1251
    %v1255 = vsel %vm1252, %v1246, %v1248
    %v1256 = vsel %vm1252, %v1247, %v1249
    %v1257 = vsel %vm1252, %v1244, %v1246
    %v1258 = vsel %vm1252, %v1245, %v1247
    %v1259 = vsel %vm1252, %v1250, %v1244
    %v1260 = vsel %vm1252, %v1251, %v1245
    %v1261 = vpack.c.bf16 %v1255, %v1257
    %v1262 = vpack.c.bf16 %v1256, %v1258
    %v1263 = vpack.c.bf16 %v1259, %v1253
    %v1264 = vpack.c.bf16 %v1260, %v1254
    %s1265 = scalar_lea.vmem [#allocation5], 768
    %v1266 = vld [vmem:[%s1265] sm:$0xff]
    %v1267 = vld [vmem:[%s1265 + $0x8] sm:$0xff]
    %v1268 = vld [vmem:[%s1265 + $0x10] sm:$0xff]
    %v1269 = vld [vmem:[%s1265 + $0x18] sm:$0xff]
    %v1270 = vld [vmem:[%s1265 + $0x20] sm:$0xff]
    %v1271 = vld [vmem:[%s1265 + $0x28] sm:$0xff]
    %v1272 = vld [vmem:[%s1265 + $0x30] sm:$0xff]
    %v1273 = vld [vmem:[%s1265 + $0x38] sm:$0xff]
    %v1274 = vld [vmem:[%s1265 + $0x40] sm:$0xff]
    %v1275 = vld [vmem:[%s1265 + $0x48] sm:$0xff]
    %v1276 = vld [vmem:[%s1265 + $0x50] sm:$0xff]
    %v1277 = vld [vmem:[%s1265 + $0x58] sm:$0xff]
    %v1278 = vld [vmem:[%s1265 + $0x60] sm:$0xff]
    %v1279 = vld [vmem:[%s1265 + $0x68] sm:$0xff]
    %v1280 = vld [vmem:[%s1265 + $0x70] sm:$0xff]
    %v1281 = vld [vmem:[%s1265 + $0x78] sm:$0xff]
    %v1282 = vld [vmem:[%s1265 + $0x80] sm:$0xff]
    %v1283 = vld [vmem:[%s1265 + $0x88] sm:$0xff]
    %v1284 = vld [vmem:[%s1265 + $0x90] sm:$0xff]
    %v1285 = vld [vmem:[%s1265 + $0x98] sm:$0xff]
    %v1286 = vld [vmem:[%s1265 + $0xa0] sm:$0xff]
    %v1287 = vld [vmem:[%s1265 + $0xa8] sm:$0xff]
    %v1288 = vld [vmem:[%s1265 + $0xb0] sm:$0xff]
    %v1289 = vld [vmem:[%s1265 + $0xb8] sm:$0xff]
    %v1290 = vld [vmem:[%s1265 + $0xc0] sm:$0xff]
    %v1291 = vld [vmem:[%s1265 + $0xc8] sm:$0xff]
    %v1292 = vld [vmem:[%s1265 + $0xd0] sm:$0xff]
    %v1293 = vld [vmem:[%s1265 + $0xd8] sm:$0xff]
    %v1294 = vld [vmem:[%s1265 + $0xe0] sm:$0xff]
    %v1295 = vld [vmem:[%s1265 + $0xe8] sm:$0xff]
    %v1296 = vld [vmem:[%s1265 + $0xf0] sm:$0xff]
    %v1297 = vld [vmem:[%s1265 + $0xf8] sm:$0xff]
    %v1330 = vunpack.c.l.b16 %v1266
    %v1331 = vunpack.c.h.b16 %v1266
    %v1332 = vunpack.c.l.b16 %v1267
    %v1333 = vunpack.c.h.b16 %v1267
    %v1334 = vunpack.c.l.b16 %v1268
    %v1335 = vunpack.c.h.b16 %v1268
    %v1336 = vunpack.c.l.b16 %v1269
    %v1337 = vunpack.c.h.b16 %v1269
    %v1338 = vunpack.c.l.b16 %v1270
    %v1339 = vunpack.c.h.b16 %v1270
    %v1340 = vunpack.c.l.b16 %v1271
    %v1341 = vunpack.c.h.b16 %v1271
    %v1342 = vunpack.c.l.b16 %v1272
    %v1343 = vunpack.c.h.b16 %v1272
    %v1344 = vunpack.c.l.b16 %v1273
    %v1345 = vunpack.c.h.b16 %v1273
    %v1346 = vunpack.c.l.b16 %v1274
    %v1347 = vunpack.c.h.b16 %v1274
    %v1348 = vunpack.c.l.b16 %v1275
    %v1349 = vunpack.c.h.b16 %v1275
    %v1350 = vunpack.c.l.b16 %v1276
    %v1351 = vunpack.c.h.b16 %v1276
    %v1352 = vunpack.c.l.b16 %v1277
    %v1353 = vunpack.c.h.b16 %v1277
    %v1354 = vunpack.c.l.b16 %v1278
    %v1355 = vunpack.c.h.b16 %v1278
    %v1356 = vunpack.c.l.b16 %v1279
    %v1357 = vunpack.c.h.b16 %v1279
    %v1358 = vunpack.c.l.b16 %v1280
    %v1359 = vunpack.c.h.b16 %v1280
    %v1360 = vunpack.c.l.b16 %v1281
    %v1361 = vunpack.c.h.b16 %v1281
    %v1362 = vunpack.c.l.b16 %v1282
    %v1363 = vunpack.c.h.b16 %v1282
    %v1364 = vunpack.c.l.b16 %v1283
    %v1365 = vunpack.c.h.b16 %v1283
    %v1366 = vunpack.c.l.b16 %v1284
    %v1367 = vunpack.c.h.b16 %v1284
    %v1368 = vunpack.c.l.b16 %v1285
    %v1369 = vunpack.c.h.b16 %v1285
    %v1370 = vunpack.c.l.b16 %v1286
    %v1371 = vunpack.c.h.b16 %v1286
    %v1372 = vunpack.c.l.b16 %v1287
    %v1373 = vunpack.c.h.b16 %v1287
    %v1374 = vunpack.c.l.b16 %v1288
    %v1375 = vunpack.c.h.b16 %v1288
    %v1376 = vunpack.c.l.b16 %v1289
    %v1377 = vunpack.c.h.b16 %v1289
    %v1378 = vunpack.c.l.b16 %v1290
    %v1379 = vunpack.c.h.b16 %v1290
    %v1380 = vunpack.c.l.b16 %v1291
    %v1381 = vunpack.c.h.b16 %v1291
    %v1382 = vunpack.c.l.b16 %v1292
    %v1383 = vunpack.c.h.b16 %v1292
    %v1384 = vunpack.c.l.b16 %v1293
    %v1385 = vunpack.c.h.b16 %v1293
    %v1386 = vunpack.c.l.b16 %v1294
    %v1387 = vunpack.c.h.b16 %v1294
    %v1388 = vunpack.c.l.b16 %v1295
    %v1389 = vunpack.c.h.b16 %v1295
    %v1390 = vunpack.c.l.b16 %v1296
    %v1391 = vunpack.c.h.b16 %v1296
    %v1392 = vunpack.c.l.b16 %v1297
    %v1393 = vunpack.c.h.b16 %v1297
    %v1394 = vpack.c.b16 %v1332, %v1330
    %v1395 = vpack.c.b16 %v1333, %v1331
    %v1396 = vpack.c.b16 %v1336, %v1334
    %v1397 = vpack.c.b16 %v1337, %v1335
    %v1398 = vpack.c.b16 %v1340, %v1338
    %v1399 = vpack.c.b16 %v1341, %v1339
    %v1400 = vpack.c.b16 %v1344, %v1342
    %v1401 = vpack.c.b16 %v1345, %v1343
    %v1402 = vpack.c.b16 %v1348, %v1346
    %v1403 = vpack.c.b16 %v1349, %v1347
    %v1404 = vpack.c.b16 %v1352, %v1350
    %v1405 = vpack.c.b16 %v1353, %v1351
    %v1406 = vpack.c.b16 %v1356, %v1354
    %v1407 = vpack.c.b16 %v1357, %v1355
    %v1408 = vpack.c.b16 %v1360, %v1358
    %v1409 = vpack.c.b16 %v1361, %v1359
    %v1410 = vpack.c.b16 %v1364, %v1362
    %v1411 = vpack.c.b16 %v1365, %v1363
    %v1412 = vpack.c.b16 %v1368, %v1366
    %v1413 = vpack.c.b16 %v1369, %v1367
    %v1414 = vpack.c.b16 %v1372, %v1370
    %v1415 = vpack.c.b16 %v1373, %v1371
    %v1416 = vpack.c.b16 %v1376, %v1374
    %v1417 = vpack.c.b16 %v1377, %v1375
    %v1418 = vpack.c.b16 %v1380, %v1378
    %v1419 = vpack.c.b16 %v1381, %v1379
    %v1420 = vpack.c.b16 %v1384, %v1382
    %v1421 = vpack.c.b16 %v1385, %v1383
    %v1422 = vpack.c.b16 %v1388, %v1386
    %v1423 = vpack.c.b16 %v1389, %v1387
    %v1424 = vpack.c.b16 %v1392, %v1390
    %v1425 = vpack.c.b16 %v1393, %v1391
    %1458 = vmatprep.subr.bf16.mxu0 %v1395
    %1459 = vmatpush1.bf16.msra.mxu0 %v1394
    %1460 = vmatprep.subr.bf16.mxu0 %v1397
    %1461 = vmatpush1.bf16.msra.mxu0 %v1396
    %1462 = vmatprep.subr.bf16.mxu0 %v1399
    %1463 = vmatpush1.bf16.msra.mxu0 %v1398
    %1464 = vmatprep.subr.bf16.mxu0 %v1401
    %1465 = vmatpush1.bf16.msra.mxu0 %v1400
    %1466 = vmatprep.subr.bf16.mxu0 %v1403
    %1467 = vmatpush1.bf16.msra.mxu0 %v1402
    %1468 = vmatprep.subr.bf16.mxu0 %v1405
    %1469 = vmatpush1.bf16.msra.mxu0 %v1404
    %1470 = vmatprep.subr.bf16.mxu0 %v1407
    %1471 = vmatpush1.bf16.msra.mxu0 %v1406
    %1472 = vmatprep.subr.bf16.mxu0 %v1409
    %1473 = vmatpush1.bf16.msra.mxu0 %v1408
    %1474 = vmatprep.subr.bf16.mxu0 %v1411
    %1475 = vmatpush1.bf16.msra.mxu0 %v1410
    %1476 = vmatprep.subr.bf16.mxu0 %v1413
    %1477 = vmatpush1.bf16.msra.mxu0 %v1412
    %1478 = vmatprep.subr.bf16.mxu0 %v1415
    %1479 = vmatpush1.bf16.msra.mxu0 %v1414
    %1480 = vmatprep.subr.bf16.mxu0 %v1417
    %1481 = vmatpush1.bf16.msra.mxu0 %v1416
    %1482 = vmatprep.subr.bf16.mxu0 %v1419
    %1483 = vmatpush1.bf16.msra.mxu0 %v1418
    %1484 = vmatprep.subr.bf16.mxu0 %v1421
    %1485 = vmatpush1.bf16.msra.mxu0 %v1420
    %1486 = vmatprep.subr.bf16.mxu0 %v1423
    %1487 = vmatpush1.bf16.msra.mxu0 %v1422
    %1488 = vmatprep.subr.bf16.mxu0 %v1425
    %1489 = vmatpush1.bf16.msra.mxu0 %v1424
    %1490 = vmatprep.mubr.bf16.mxu0 %v1262
    %1491 = vmatmul.mubr.bf16.gmra.mrb[0].mxu0 %v1261
    %v1492 = vpop.f32.mrb[0].mxu0
    %v1493 = vadd.f32 0.0, %v1492
    %v1494 = vpop.f32.mrb[0].mxu0
    %v1495 = vadd.f32 0.0, %v1494
    %v1496 = vpop.f32.mrb[0].mxu0
    %v1497 = vadd.f32 0.0, %v1496
    %v1498 = vpop.f32.mrb[0].mxu0
    %v1499 = vadd.f32 0.0, %v1498
    %1500 = vmatprep.mubr.bf16.mxu0 %v1264
    %1501 = vmatmul.mubr.bf16.gmra.mrb[0].mxu0 %v1263
    %v1502 = vpop.f32.mrb[0].mxu0
    %v1503 = vadd.f32 0.0, %v1502
    %v1504 = vpop.f32.mrb[0].mxu0
    %v1505 = vadd.f32 0.0, %v1504
    %v1506 = vpop.f32.mrb[0].mxu0
    %v1507 = vadd.f32 0.0, %v1506
    %v1508 = vpop.f32.mrb[0].mxu0
    %v1509 = vadd.f32 0.0, %v1508
    %1510 = vdwg.mxu0
    %v1511 = vadd.f32 %v1236, %v1493
    %v1512 = vadd.f32 %v1237, %v1495
    %v1513 = vadd.f32 %v1238, %v1497
    %v1514 = vadd.f32 %v1239, %v1499
    %v1515 = vadd.f32 %v1240, %v1503
    %v1516 = vadd.f32 %v1241, %v1505
    %v1517 = vadd.f32 %v1242, %v1507
    %v1518 = vadd.f32 %v1243, %v1509
    %v1519 = vrot.slane %v443, 5
    %v1520 = vrot.slane %v444, 5
    %v1521 = vrot.slane %v445, 5
    %v1522 = vrot.slane %v446, 5
    %v1523 = vrot.slane %v447, 5
    %v1524 = vrot.slane %v448, 5
    %v1525 = vrot.slane %v449, 5
    %v1526 = vrot.slane %v450, 5
    %vm1527 = vcmp.lt.s32.totalorder %v496, 3
    %v1528 = vsel %vm1527, %v1523, %v1525
    %v1529 = vsel %vm1527, %v1524, %v1526
    %v1530 = vsel %vm1527, %v1521, %v1523
    %v1531 = vsel %vm1527, %v1522, %v1524
    %v1532 = vsel %vm1527, %v1519, %v1521
    %v1533 = vsel %vm1527, %v1520, %v1522
    %v1534 = vsel %vm1527, %v1525, %v1519
    %v1535 = vsel %vm1527, %v1526, %v1520
    %v1536 = vpack.c.bf16 %v1530, %v1532
    %v1537 = vpack.c.bf16 %v1531, %v1533
    %v1538 = vpack.c.bf16 %v1534, %v1528
    %v1539 = vpack.c.bf16 %v1535, %v1529
    %s1540 = scalar_lea.vmem [#allocation5], 1024
    %v1541 = vld [vmem:[%s1540] sm:$0xff]
    %v1542 = vld [vmem:[%s1540 + $0x8] sm:$0xff]
    %v1543 = vld [vmem:[%s1540 + $0x10] sm:$0xff]
    %v1544 = vld [vmem:[%s1540 + $0x18] sm:$0xff]
    %v1545 = vld [vmem:[%s1540 + $0x20] sm:$0xff]
    %v1546 = vld [vmem:[%s1540 + $0x28] sm:$0xff]
    %v1547 = vld [vmem:[%s1540 + $0x30] sm:$0xff]
    %v1548 = vld [vmem:[%s1540 + $0x38] sm:$0xff]
    %v1549 = vld [vmem:[%s1540 + $0x40] sm:$0xff]
    %v1550 = vld [vmem:[%s1540 + $0x48] sm:$0xff]
    %v1551 = vld [vmem:[%s1540 + $0x50] sm:$0xff]
    %v1552 = vld [vmem:[%s1540 + $0x58] sm:$0xff]
    %v1553 = vld [vmem:[%s1540 + $0x60] sm:$0xff]
    %v1554 = vld [vmem:[%s1540 + $0x68] sm:$0xff]
    %v1555 = vld [vmem:[%s1540 + $0x70] sm:$0xff]
    %v1556 = vld [vmem:[%s1540 + $0x78] sm:$0xff]
    %v1557 = vld [vmem:[%s1540 + $0x80] sm:$0xff]
    %v1558 = vld [vmem:[%s1540 + $0x88] sm:$0xff]
    %v1559 = vld [vmem:[%s1540 + $0x90] sm:$0xff]
    %v1560 = vld [vmem:[%s1540 + $0x98] sm:$0xff]
    %v1561 = vld [vmem:[%s1540 + $0xa0] sm:$0xff]
    %v1562 = vld [vmem:[%s1540 + $0xa8] sm:$0xff]
    %v1563 = vld [vmem:[%s1540 + $0xb0] sm:$0xff]
    %v1564 = vld [vmem:[%s1540 + $0xb8] sm:$0xff]
    %v1565 = vld [vmem:[%s1540 + $0xc0] sm:$0xff]
    %v1566 = vld [vmem:[%s1540 + $0xc8] sm:$0xff]
    %v1567 = vld [vmem:[%s1540 + $0xd0] sm:$0xff]
    %v1568 = vld [vmem:[%s1540 + $0xd8] sm:$0xff]
    %v1569 = vld [vmem:[%s1540 + $0xe0] sm:$0xff]
    %v1570 = vld [vmem:[%s1540 + $0xe8] sm:$0xff]
    %v1571 = vld [vmem:[%s1540 + $0xf0] sm:$0xff]
    %v1572 = vld [vmem:[%s1540 + $0xf8] sm:$0xff]
    %v1605 = vunpack.c.l.b16 %v1541
    %v1606 = vunpack.c.h.b16 %v1541
    %v1607 = vunpack.c.l.b16 %v1542
    %v1608 = vunpack.c.h.b16 %v1542
    %v1609 = vunpack.c.l.b16 %v1543
    %v1610 = vunpack.c.h.b16 %v1543
    %v1611 = vunpack.c.l.b16 %v1544
    %v1612 = vunpack.c.h.b16 %v1544
    %v1613 = vunpack.c.l.b16 %v1545
    %v1614 = vunpack.c.h.b16 %v1545
    %v1615 = vunpack.c.l.b16 %v1546
    %v1616 = vunpack.c.h.b16 %v1546
    %v1617 = vunpack.c.l.b16 %v1547
    %v1618 = vunpack.c.h.b16 %v1547
    %v1619 = vunpack.c.l.b16 %v1548
    %v1620 = vunpack.c.h.b16 %v1548
    %v1621 = vunpack.c.l.b16 %v1549
    %v1622 = vunpack.c.h.b16 %v1549
    %v1623 = vunpack.c.l.b16 %v1550
    %v1624 = vunpack.c.h.b16 %v1550
    %v1625 = vunpack.c.l.b16 %v1551
    %v1626 = vunpack.c.h.b16 %v1551
    %v1627 = vunpack.c.l.b16 %v1552
    %v1628 = vunpack.c.h.b16 %v1552
    %v1629 = vunpack.c.l.b16 %v1553
    %v1630 = vunpack.c.h.b16 %v1553
    %v1631 = vunpack.c.l.b16 %v1554
    %v1632 = vunpack.c.h.b16 %v1554
    %v1633 = vunpack.c.l.b16 %v1555
    %v1634 = vunpack.c.h.b16 %v1555
    %v1635 = vunpack.c.l.b16 %v1556
    %v1636 = vunpack.c.h.b16 %v1556
    %v1637 = vunpack.c.l.b16 %v1557
    %v1638 = vunpack.c.h.b16 %v1557
    %v1639 = vunpack.c.l.b16 %v1558
    %v1640 = vunpack.c.h.b16 %v1558
    %v1641 = vunpack.c.l.b16 %v1559
    %v1642 = vunpack.c.h.b16 %v1559
    %v1643 = vunpack.c.l.b16 %v1560
    %v1644 = vunpack.c.h.b16 %v1560
    %v1645 = vunpack.c.l.b16 %v1561
    %v1646 = vunpack.c.h.b16 %v1561
    %v1647 = vunpack.c.l.b16 %v1562
    %v1648 = vunpack.c.h.b16 %v1562
    %v1649 = vunpack.c.l.b16 %v1563
    %v1650 = vunpack.c.h.b16 %v1563
    %v1651 = vunpack.c.l.b16 %v1564
    %v1652 = vunpack.c.h.b16 %v1564
    %v1653 = vunpack.c.l.b16 %v1565
    %v1654 = vunpack.c.h.b16 %v1565
    %v1655 = vunpack.c.l.b16 %v1566
    %v1656 = vunpack.c.h.b16 %v1566
    %v1657 = vunpack.c.l.b16 %v1567
    %v1658 = vunpack.c.h.b16 %v1567
    %v1659 = vunpack.c.l.b16 %v1568
    %v1660 = vunpack.c.h.b16 %v1568
    %v1661 = vunpack.c.l.b16 %v1569
    %v1662 = vunpack.c.h.b16 %v1569
    %v1663 = vunpack.c.l.b16 %v1570
    %v1664 = vunpack.c.h.b16 %v1570
    %v1665 = vunpack.c.l.b16 %v1571
    %v1666 = vunpack.c.h.b16 %v1571
    %v1667 = vunpack.c.l.b16 %v1572
    %v1668 = vunpack.c.h.b16 %v1572
    %v1669 = vpack.c.b16 %v1607, %v1605
    %v1670 = vpack.c.b16 %v1608, %v1606
    %v1671 = vpack.c.b16 %v1611, %v1609
    %v1672 = vpack.c.b16 %v1612, %v1610
    %v1673 = vpack.c.b16 %v1615, %v1613
    %v1674 = vpack.c.b16 %v1616, %v1614
    %v1675 = vpack.c.b16 %v1619, %v1617
    %v1676 = vpack.c.b16 %v1620, %v1618
    %v1677 = vpack.c.b16 %v1623, %v1621
    %v1678 = vpack.c.b16 %v1624, %v1622
    %v1679 = vpack.c.b16 %v1627, %v1625
    %v1680 = vpack.c.b16 %v1628, %v1626
    %v1681 = vpack.c.b16 %v1631, %v1629
    %v1682 = vpack.c.b16 %v1632, %v1630
    %v1683 = vpack.c.b16 %v1635, %v1633
    %v1684 = vpack.c.b16 %v1636, %v1634
    %v1685 = vpack.c.b16 %v1639, %v1637
    %v1686 = vpack.c.b16 %v1640, %v1638
    %v1687 = vpack.c.b16 %v1643, %v1641
    %v1688 = vpack.c.b16 %v1644, %v1642
    %v1689 = vpack.c.b16 %v1647, %v1645
    %v1690 = vpack.c.b16 %v1648, %v1646
    %v1691 = vpack.c.b16 %v1651, %v1649
    %v1692 = vpack.c.b16 %v1652, %v1650
    %v1693 = vpack.c.b16 %v1655, %v1653
    %v1694 = vpack.c.b16 %v1656, %v1654
    %v1695 = vpack.c.b16 %v1659, %v1657
    %v1696 = vpack.c.b16 %v1660, %v1658
    %v1697 = vpack.c.b16 %v1663, %v1661
    %v1698 = vpack.c.b16 %v1664, %v1662
    %v1699 = vpack.c.b16 %v1667, %v1665
    %v1700 = vpack.c.b16 %v1668, %v1666
    %1733 = vmatprep.subr.bf16.mxu0 %v1670
    %1734 = vmatpush1.bf16.msra.mxu0 %v1669
    %1735 = vmatprep.subr.bf16.mxu0 %v1672
    %1736 = vmatpush1.bf16.msra.mxu0 %v1671
    %1737 = vmatprep.subr.bf16.mxu0 %v1674
    %1738 = vmatpush1.bf16.msra.mxu0 %v1673
    %1739 = vmatprep.subr.bf16.mxu0 %v1676
    %1740 = vmatpush1.bf16.msra.mxu0 %v1675
    %1741 = vmatprep.subr.bf16.mxu0 %v1678
    %1742 = vmatpush1.bf16.msra.mxu0 %v1677
    %1743 = vmatprep.subr.bf16.mxu0 %v1680
    %1744 = vmatpush1.bf16.msra.mxu0 %v1679
    %1745 = vmatprep.subr.bf16.mxu0 %v1682
    %1746 = vmatpush1.bf16.msra.mxu0 %v1681
    %1747 = vmatprep.subr.bf16.mxu0 %v1684
    %1748 = vmatpush1.bf16.msra.mxu0 %v1683
    %1749 = vmatprep.subr.bf16.mxu0 %v1686
    %1750 = vmatpush1.bf16.msra.mxu0 %v1685
    %1751 = vmatprep.subr.bf16.mxu0 %v1688
    %1752 = vmatpush1.bf16.msra.mxu0 %v1687
    %1753 = vmatprep.subr.bf16.mxu0 %v1690
    %1754 = vmatpush1.bf16.msra.mxu0 %v1689
    %1755 = vmatprep.subr.bf16.mxu0 %v1692
    %1756 = vmatpush1.bf16.msra.mxu0 %v1691
    %1757 = vmatprep.subr.bf16.mxu0 %v1694
    %1758 = vmatpush1.bf16.msra.mxu0 %v1693
    %1759 = vmatprep.subr.bf16.mxu0 %v1696
    %1760 = vmatpush1.bf16.msra.mxu0 %v1695
    %1761 = vmatprep.subr.bf16.mxu0 %v1698
    %1762 = vmatpush1.bf16.msra.mxu0 %v1697
    %1763 = vmatprep.subr.bf16.mxu0 %v1700
    %1764 = vmatpush1.bf16.msra.mxu0 %v1699
    %1765 = vmatprep.mubr.bf16.mxu0 %v1537
    %1766 = vmatmul.mubr.bf16.gmra.mrb[0].mxu0 %v1536
    %v1767 = vpop.f32.mrb[0].mxu0
    %v1768 = vadd.f32 0.0, %v1767
    %v1769 = vpop.f32.mrb[0].mxu0
    %v1770 = vadd.f32 0.0, %v1769
    %v1771 = vpop.f32.mrb[0].mxu0
    %v1772 = vadd.f32 0.0, %v1771
    %v1773 = vpop.f32.mrb[0].mxu0
    %v1774 = vadd.f32 0.0, %v1773
    %1775 = vmatprep.mubr.bf16.mxu0 %v1539
    %1776 = vmatmul.mubr.bf16.gmra.mrb[0].mxu0 %v1538
    %v1777 = vpop.f32.mrb[0].mxu0
    %v1778 = vadd.f32 0.0, %v1777
    %v1779 = vpop.f32.mrb[0].mxu0
    %v1780 = vadd.f32 0.0, %v1779
    %v1781 = vpop.f32.mrb[0].mxu0
    %v1782 = vadd.f32 0.0, %v1781
    %v1783 = vpop.f32.mrb[0].mxu0
    %v1784 = vadd.f32 0.0, %v1783
    %1785 = vdwg.mxu0
    %v1786 = vadd.f32 %v1511, %v1768
    %v1787 = vadd.f32 %v1512, %v1770
    %v1788 = vadd.f32 %v1513, %v1772
    %v1789 = vadd.f32 %v1514, %v1774
    %v1790 = vadd.f32 %v1515, %v1778
    %v1791 = vadd.f32 %v1516, %v1780
    %v1792 = vadd.f32 %v1517, %v1782
    %v1793 = vadd.f32 %v1518, %v1784
    %v1794 = vrot.slane %v443, 6
    %v1795 = vrot.slane %v444, 6
    %v1796 = vrot.slane %v445, 6
    %v1797 = vrot.slane %v446, 6
    %v1798 = vrot.slane %v447, 6
    %v1799 = vrot.slane %v448, 6
    %v1800 = vrot.slane %v449, 6
    %v1801 = vrot.slane %v450, 6
    %vm1802 = vcmp.lt.s32.totalorder %v496, 2
    %v1803 = vsel %vm1802, %v1798, %v1800
    %v1804 = vsel %vm1802, %v1799, %v1801
    %v1805 = vsel %vm1802, %v1796, %v1798
    %v1806 = vsel %vm1802, %v1797, %v1799
    %v1807 = vsel %vm1802, %v1794, %v1796
    %v1808 = vsel %vm1802, %v1795, %v1797
    %v1809 = vsel %vm1802, %v1800, %v1794
    %v1810 = vsel %vm1802, %v1801, %v1795
    %v1811 = vpack.c.bf16 %v1805, %v1807
    %v1812 = vpack.c.bf16 %v1806, %v1808
    %v1813 = vpack.c.bf16 %v1809, %v1803
    %v1814 = vpack.c.bf16 %v1810, %v1804
    %s1815 = scalar_lea.vmem [#allocation5], 1280
    %v1816 = vld [vmem:[%s1815] sm:$0xff]
    %v1817 = vld [vmem:[%s1815 + $0x8] sm:$0xff]
    %v1818 = vld [vmem:[%s1815 + $0x10] sm:$0xff]
    %v1819 = vld [vmem:[%s1815 + $0x18] sm:$0xff]
    %v1820 = vld [vmem:[%s1815 + $0x20] sm:$0xff]
    %v1821 = vld [vmem:[%s1815 + $0x28] sm:$0xff]
    %v1822 = vld [vmem:[%s1815 + $0x30] sm:$0xff]
    %v1823 = vld [vmem:[%s1815 + $0x38] sm:$0xff]
    %v1824 = vld [vmem:[%s1815 + $0x40] sm:$0xff]
    %v1825 = vld [vmem:[%s1815 + $0x48] sm:$0xff]
    %v1826 = vld [vmem:[%s1815 + $0x50] sm:$0xff]
    %v1827 = vld [vmem:[%s1815 + $0x58] sm:$0xff]
    %v1828 = vld [vmem:[%s1815 + $0x60] sm:$0xff]
    %v1829 = vld [vmem:[%s1815 + $0x68] sm:$0xff]
    %v1830 = vld [vmem:[%s1815 + $0x70] sm:$0xff]
    %v1831 = vld [vmem:[%s1815 + $0x78] sm:$0xff]
    %v1832 = vld [vmem:[%s1815 + $0x80] sm:$0xff]
    %v1833 = vld [vmem:[%s1815 + $0x88] sm:$0xff]
    %v1834 = vld [vmem:[%s1815 + $0x90] sm:$0xff]
    %v1835 = vld [vmem:[%s1815 + $0x98] sm:$0xff]
    %v1836 = vld [vmem:[%s1815 + $0xa0] sm:$0xff]
    %v1837 = vld [vmem:[%s1815 + $0xa8] sm:$0xff]
    %v1838 = vld [vmem:[%s1815 + $0xb0] sm:$0xff]
    %v1839 = vld [vmem:[%s1815 + $0xb8] sm:$0xff]
    %v1840 = vld [vmem:[%s1815 + $0xc0] sm:$0xff]
    %v1841 = vld [vmem:[%s1815 + $0xc8] sm:$0xff]
    %v1842 = vld [vmem:[%s1815 + $0xd0] sm:$0xff]
    %v1843 = vld [vmem:[%s1815 + $0xd8] sm:$0xff]
    %v1844 = vld [vmem:[%s1815 + $0xe0] sm:$0xff]
    %v1845 = vld [vmem:[%s1815 + $0xe8] sm:$0xff]
    %v1846 = vld [vmem:[%s1815 + $0xf0] sm:$0xff]
    %v1847 = vld [vmem:[%s1815 + $0xf8] sm:$0xff]
    %v1880 = vunpack.c.l.b16 %v1816
    %v1881 = vunpack.c.h.b16 %v1816
    %v1882 = vunpack.c.l.b16 %v1817
    %v1883 = vunpack.c.h.b16 %v1817
    %v1884 = vunpack.c.l.b16 %v1818
    %v1885 = vunpack.c.h.b16 %v1818
    %v1886 = vunpack.c.l.b16 %v1819
    %v1887 = vunpack.c.h.b16 %v1819
    %v1888 = vunpack.c.l.b16 %v1820
    %v1889 = vunpack.c.h.b16 %v1820
    %v1890 = vunpack.c.l.b16 %v1821
    %v1891 = vunpack.c.h.b16 %v1821
    %v1892 = vunpack.c.l.b16 %v1822
    %v1893 = vunpack.c.h.b16 %v1822
    %v1894 = vunpack.c.l.b16 %v1823
    %v1895 = vunpack.c.h.b16 %v1823
    %v1896 = vunpack.c.l.b16 %v1824
    %v1897 = vunpack.c.h.b16 %v1824
    %v1898 = vunpack.c.l.b16 %v1825
    %v1899 = vunpack.c.h.b16 %v1825
    %v1900 = vunpack.c.l.b16 %v1826
    %v1901 = vunpack.c.h.b16 %v1826
    %v1902 = vunpack.c.l.b16 %v1827
    %v1903 = vunpack.c.h.b16 %v1827
    %v1904 = vunpack.c.l.b16 %v1828
    %v1905 = vunpack.c.h.b16 %v1828
    %v1906 = vunpack.c.l.b16 %v1829
    %v1907 = vunpack.c.h.b16 %v1829
    %v1908 = vunpack.c.l.b16 %v1830
    %v1909 = vunpack.c.h.b16 %v1830
    %v1910 = vunpack.c.l.b16 %v1831
    %v1911 = vunpack.c.h.b16 %v1831
    %v1912 = vunpack.c.l.b16 %v1832
    %v1913 = vunpack.c.h.b16 %v1832
    %v1914 = vunpack.c.l.b16 %v1833
    %v1915 = vunpack.c.h.b16 %v1833
    %v1916 = vunpack.c.l.b16 %v1834
    %v1917 = vunpack.c.h.b16 %v1834
    %v1918 = vunpack.c.l.b16 %v1835
    %v1919 = vunpack.c.h.b16 %v1835
    %v1920 = vunpack.c.l.b16 %v1836
    %v1921 = vunpack.c.h.b16 %v1836
    %v1922 = vunpack.c.l.b16 %v1837
    %v1923 = vunpack.c.h.b16 %v1837
    %v1924 = vunpack.c.l.b16 %v1838
    %v1925 = vunpack.c.h.b16 %v1838
    %v1926 = vunpack.c.l.b16 %v1839
    %v1927 = vunpack.c.h.b16 %v1839
    %v1928 = vunpack.c.l.b16 %v1840
    %v1929 = vunpack.c.h.b16 %v1840
    %v1930 = vunpack.c.l.b16 %v1841
    %v1931 = vunpack.c.h.b16 %v1841
    %v1932 = vunpack.c.l.b16 %v1842
    %v1933 = vunpack.c.h.b16 %v1842
    %v1934 = vunpack.c.l.b16 %v1843
    %v1935 = vunpack.c.h.b16 %v1843
    %v1936 = vunpack.c.l.b16 %v1844
    %v1937 = vunpack.c.h.b16 %v1844
    %v1938 = vunpack.c.l.b16 %v1845
    %v1939 = vunpack.c.h.b16 %v1845
    %v1940 = vunpack.c.l.b16 %v1846
    %v1941 = vunpack.c.h.b16 %v1846
    %v1942 = vunpack.c.l.b16 %v1847
    %v1943 = vunpack.c.h.b16 %v1847
    %v1944 = vpack.c.b16 %v1882, %v1880
    %v1945 = vpack.c.b16 %v1883, %v1881
    %v1946 = vpack.c.b16 %v1886, %v1884
    %v1947 = vpack.c.b16 %v1887, %v1885
    %v1948 = vpack.c.b16 %v1890, %v1888
    %v1949 = vpack.c.b16 %v1891, %v1889
    %v1950 = vpack.c.b16 %v1894, %v1892
    %v1951 = vpack.c.b16 %v1895, %v1893
    %v1952 = vpack.c.b16 %v1898, %v1896
    %v1953 = vpack.c.b16 %v1899, %v1897
    %v1954 = vpack.c.b16 %v1902, %v1900
    %v1955 = vpack.c.b16 %v1903, %v1901
    %v1956 = vpack.c.b16 %v1906, %v1904
    %v1957 = vpack.c.b16 %v1907, %v1905
    %v1958 = vpack.c.b16 %v1910, %v1908
    %v1959 = vpack.c.b16 %v1911, %v1909
    %v1960 = vpack.c.b16 %v1914, %v1912
    %v1961 = vpack.c.b16 %v1915, %v1913
    %v1962 = vpack.c.b16 %v1918, %v1916
    %v1963 = vpack.c.b16 %v1919, %v1917
    %v1964 = vpack.c.b16 %v1922, %v1920
    %v1965 = vpack.c.b16 %v1923, %v1921
    %v1966 = vpack.c.b16 %v1926, %v1924
    %v1967 = vpack.c.b16 %v1927, %v1925
    %v1968 = vpack.c.b16 %v1930, %v1928
    %v1969 = vpack.c.b16 %v1931, %v1929
    %v1970 = vpack.c.b16 %v1934, %v1932
    %v1971 = vpack.c.b16 %v1935, %v1933
    %v1972 = vpack.c.b16 %v1938, %v1936
    %v1973 = vpack.c.b16 %v1939, %v1937
    %v1974 = vpack.c.b16 %v1942, %v1940
    %v1975 = vpack.c.b16 %v1943, %v1941
    %2008 = vmatprep.subr.bf16.mxu0 %v1945
    %2009 = vmatpush1.bf16.msra.mxu0 %v1944
    %2010 = vmatprep.subr.bf16.mxu0 %v1947
    %2011 = vmatpush1.bf16.msra.mxu0 %v1946
    %2012 = vmatprep.subr.bf16.mxu0 %v1949
    %2013 = vmatpush1.bf16.msra.mxu0 %v1948
    %2014 = vmatprep.subr.bf16.mxu0 %v1951
    %2015 = vmatpush1.bf16.msra.mxu0 %v1950
    %2016 = vmatprep.subr.bf16.mxu0 %v1953
    %2017 = vmatpush1.bf16.msra.mxu0 %v1952
    %2018 = vmatprep.subr.bf16.mxu0 %v1955
    %2019 = vmatpush1.bf16.msra.mxu0 %v1954
    %2020 = vmatprep.subr.bf16.mxu0 %v1957
    %2021 = vmatpush1.bf16.msra.mxu0 %v1956
    %2022 = vmatprep.subr.bf16.mxu0 %v1959
    %2023 = vmatpush1.bf16.msra.mxu0 %v1958
    %2024 = vmatprep.subr.bf16.mxu0 %v1961
    %2025 = vmatpush1.bf16.msra.mxu0 %v1960
    %2026 = vmatprep.subr.bf16.mxu0 %v1963
    %2027 = vmatpush1.bf16.msra.mxu0 %v1962
    %2028 = vmatprep.subr.bf16.mxu0 %v1965
    %2029 = vmatpush1.bf16.msra.mxu0 %v1964
    %2030 = vmatprep.subr.bf16.mxu0 %v1967
    %2031 = vmatpush1.bf16.msra.mxu0 %v1966
    %2032 = vmatprep.subr.bf16.mxu0 %v1969
    %2033 = vmatpush1.bf16.msra.mxu0 %v1968
    %2034 = vmatprep.subr.bf16.mxu0 %v1971
    %2035 = vmatpush1.bf16.msra.mxu0 %v1970
    %2036 = vmatprep.subr.bf16.mxu0 %v1973
    %2037 = vmatpush1.bf16.msra.mxu0 %v1972
    %2038 = vmatprep.subr.bf16.mxu0 %v1975
    %2039 = vmatpush1.bf16.msra.mxu0 %v1974
    %2040 = vmatprep.mubr.bf16.mxu0 %v1812
    %2041 = vmatmul.mubr.bf16.gmra.mrb[0].mxu0 %v1811
    %v2042 = vpop.f32.mrb[0].mxu0
    %v2043 = vadd.f32 0.0, %v2042
    %v2044 = vpop.f32.mrb[0].mxu0
    %v2045 = vadd.f32 0.0, %v2044
    %v2046 = vpop.f32.mrb[0].mxu0
    %v2047 = vadd.f32 0.0, %v2046
    %v2048 = vpop.f32.mrb[0].mxu0
    %v2049 = vadd.f32 0.0, %v2048
    %2050 = vmatprep.mubr.bf16.mxu0 %v1814
    %2051 = vmatmul.mubr.bf16.gmra.mrb[0].mxu0 %v1813
    %v2052 = vpop.f32.mrb[0].mxu0
    %v2053 = vadd.f32 0.0, %v2052
    %v2054 = vpop.f32.mrb[0].mxu0
    %v2055 = vadd.f32 0.0, %v2054
    %v2056 = vpop.f32.mrb[0].mxu0
    %v2057 = vadd.f32 0.0, %v2056
    %v2058 = vpop.f32.mrb[0].mxu0
    %v2059 = vadd.f32 0.0, %v2058
    %2060 = vdwg.mxu0
    %v2061 = vadd.f32 %v1786, %v2043
    %v2062 = vadd.f32 %v1787, %v2045
    %v2063 = vadd.f32 %v1788, %v2047
    %v2064 = vadd.f32 %v1789, %v2049
    %v2065 = vadd.f32 %v1790, %v2053
    %v2066 = vadd.f32 %v1791, %v2055
    %v2067 = vadd.f32 %v1792, %v2057
    %v2068 = vadd.f32 %v1793, %v2059
    %v2069 = vpack.c.bf16 %v447, %v445
    %v2070 = vpack.c.bf16 %v448, %v446
    %v2071 = vpack.c.bf16 %v443, %v449
    %v2072 = vpack.c.bf16 %v444, %v450
    %s2073 = scalar_lea.vmem [#allocation5], 1536
    %v2074 = vld [vmem:[%s2073] sm:$0xff]
    %v2075 = vld [vmem:[%s2073 + $0x8] sm:$0xff]
    %v2076 = vld [vmem:[%s2073 + $0x10] sm:$0xff]
    %v2077 = vld [vmem:[%s2073 + $0x18] sm:$0xff]
    %v2078 = vld [vmem:[%s2073 + $0x20] sm:$0xff]
    %v2079 = vld [vmem:[%s2073 + $0x28] sm:$0xff]
    %v2080 = vld [vmem:[%s2073 + $0x30] sm:$0xff]
    %v2081 = vld [vmem:[%s2073 + $0x38] sm:$0xff]
    %v2082 = vld [vmem:[%s2073 + $0x40] sm:$0xff]
    %v2083 = vld [vmem:[%s2073 + $0x48] sm:$0xff]
    %v2084 = vld [vmem:[%s2073 + $0x50] sm:$0xff]
    %v2085 = vld [vmem:[%s2073 + $0x58] sm:$0xff]
    %v2086 = vld [vmem:[%s2073 + $0x60] sm:$0xff]
    %v2087 = vld [vmem:[%s2073 + $0x68] sm:$0xff]
    %v2088 = vld [vmem:[%s2073 + $0x70] sm:$0xff]
    %v2089 = vld [vmem:[%s2073 + $0x78] sm:$0xff]
    %v2090 = vld [vmem:[%s2073 + $0x80] sm:$0xff]
    %v2091 = vld [vmem:[%s2073 + $0x88] sm:$0xff]
    %v2092 = vld [vmem:[%s2073 + $0x90] sm:$0xff]
    %v2093 = vld [vmem:[%s2073 + $0x98] sm:$0xff]
    %v2094 = vld [vmem:[%s2073 + $0xa0] sm:$0xff]
    %v2095 = vld [vmem:[%s2073 + $0xa8] sm:$0xff]
    %v2096 = vld [vmem:[%s2073 + $0xb0] sm:$0xff]
    %v2097 = vld [vmem:[%s2073 + $0xb8] sm:$0xff]
    %v2098 = vld [vmem:[%s2073 + $0xc0] sm:$0xff]
    %v2099 = vld [vmem:[%s2073 + $0xc8] sm:$0xff]
    %v2100 = vld [vmem:[%s2073 + $0xd0] sm:$0xff]
    %v2101 = vld [vmem:[%s2073 + $0xd8] sm:$0xff]
    %v2102 = vld [vmem:[%s2073 + $0xe0] sm:$0xff]
    %v2103 = vld [vmem:[%s2073 + $0xe8] sm:$0xff]
    %v2104 = vld [vmem:[%s2073 + $0xf0] sm:$0xff]
    %v2105 = vld [vmem:[%s2073 + $0xf8] sm:$0xff]
    %v2138 = vunpack.c.l.b16 %v2074
    %v2139 = vunpack.c.h.b16 %v2074
    %v2140 = vunpack.c.l.b16 %v2075
    %v2141 = vunpack.c.h.b16 %v2075
    %v2142 = vunpack.c.l.b16 %v2076
    %v2143 = vunpack.c.h.b16 %v2076
    %v2144 = vunpack.c.l.b16 %v2077
    %v2145 = vunpack.c.h.b16 %v2077
    %v2146 = vunpack.c.l.b16 %v2078
    %v2147 = vunpack.c.h.b16 %v2078
    %v2148 = vunpack.c.l.b16 %v2079
    %v2149 = vunpack.c.h.b16 %v2079
    %v2150 = vunpack.c.l.b16 %v2080
    %v2151 = vunpack.c.h.b16 %v2080
    %v2152 = vunpack.c.l.b16 %v2081
    %v2153 = vunpack.c.h.b16 %v2081
    %v2154 = vunpack.c.l.b16 %v2082
    %v2155 = vunpack.c.h.b16 %v2082
    %v2156 = vunpack.c.l.b16 %v2083
    %v2157 = vunpack.c.h.b16 %v2083
    %v2158 = vunpack.c.l.b16 %v2084
    %v2159 = vunpack.c.h.b16 %v2084
    %v2160 = vunpack.c.l.b16 %v2085
    %v2161 = vunpack.c.h.b16 %v2085
    %v2162 = vunpack.c.l.b16 %v2086
    %v2163 = vunpack.c.h.b16 %v2086
    %v2164 = vunpack.c.l.b16 %v2087
    %v2165 = vunpack.c.h.b16 %v2087
    %v2166 = vunpack.c.l.b16 %v2088
    %v2167 = vunpack.c.h.b16 %v2088
    %v2168 = vunpack.c.l.b16 %v2089
    %v2169 = vunpack.c.h.b16 %v2089
    %v2170 = vunpack.c.l.b16 %v2090
    %v2171 = vunpack.c.h.b16 %v2090
    %v2172 = vunpack.c.l.b16 %v2091
    %v2173 = vunpack.c.h.b16 %v2091
    %v2174 = vunpack.c.l.b16 %v2092
    %v2175 = vunpack.c.h.b16 %v2092
    %v2176 = vunpack.c.l.b16 %v2093
    %v2177 = vunpack.c.h.b16 %v2093
    %v2178 = vunpack.c.l.b16 %v2094
    %v2179 = vunpack.c.h.b16 %v2094
    %v2180 = vunpack.c.l.b16 %v2095
    %v2181 = vunpack.c.h.b16 %v2095
    %v2182 = vunpack.c.l.b16 %v2096
    %v2183 = vunpack.c.h.b16 %v2096
    %v2184 = vunpack.c.l.b16 %v2097
    %v2185 = vunpack.c.h.b16 %v2097
    %v2186 = vunpack.c.l.b16 %v2098
    %v2187 = vunpack.c.h.b16 %v2098
    %v2188 = vunpack.c.l.b16 %v2099
    %v2189 = vunpack.c.h.b16 %v2099
    %v2190 = vunpack.c.l.b16 %v2100
    %v2191 = vunpack.c.h.b16 %v2100
    %v2192 = vunpack.c.l.b16 %v2101
    %v2193 = vunpack.c.h.b16 %v2101
    %v2194 = vunpack.c.l.b16 %v2102
    %v2195 = vunpack.c.h.b16 %v2102
    %v2196 = vunpack.c.l.b16 %v2103
    %v2197 = vunpack.c.h.b16 %v2103
    %v2198 = vunpack.c.l.b16 %v2104
    %v2199 = vunpack.c.h.b16 %v2104
    %v2200 = vunpack.c.l.b16 %v2105
    %v2201 = vunpack.c.h.b16 %v2105
    %v2202 = vpack.c.b16 %v2140, %v2138
    %v2203 = vpack.c.b16 %v2141, %v2139
    %v2204 = vpack.c.b16 %v2144, %v2142
    %v2205 = vpack.c.b16 %v2145, %v2143
    %v2206 = vpack.c.b16 %v2148, %v2146
    %v2207 = vpack.c.b16 %v2149, %v2147
    %v2208 = vpack.c.b16 %v2152, %v2150
    %v2209 = vpack.c.b16 %v2153, %v2151
    %v2210 = vpack.c.b16 %v2156, %v2154
    %v2211 = vpack.c.b16 %v2157, %v2155
    %v2212 = vpack.c.b16 %v2160, %v2158
    %v2213 = vpack.c.b16 %v2161, %v2159
    %v2214 = vpack.c.b16 %v2164, %v2162
    %v2215 = vpack.c.b16 %v2165, %v2163
    %v2216 = vpack.c.b16 %v2168, %v2166
    %v2217 = vpack.c.b16 %v2169, %v2167
    %v2218 = vpack.c.b16 %v2172, %v2170
    %v2219 = vpack.c.b16 %v2173, %v2171
    %v2220 = vpack.c.b16 %v2176, %v2174
    %v2221 = vpack.c.b16 %v2177, %v2175
    %v2222 = vpack.c.b16 %v2180, %v2178
    %v2223 = vpack.c.b16 %v2181, %v2179
    %v2224 = vpack.c.b16 %v2184, %v2182
    %v2225 = vpack.c.b16 %v2185, %v2183
    %v2226 = vpack.c.b16 %v2188, %v2186
    %v2227 = vpack.c.b16 %v2189, %v2187
    %v2228 = vpack.c.b16 %v2192, %v2190
    %v2229 = vpack.c.b16 %v2193, %v2191
    %v2230 = vpack.c.b16 %v2196, %v2194
    %v2231 = vpack.c.b16 %v2197, %v2195
    %v2232 = vpack.c.b16 %v2200, %v2198
    %v2233 = vpack.c.b16 %v2201, %v2199
    %2266 = vmatprep.subr.bf16.mxu0 %v2203
    %2267 = vmatpush1.bf16.msra.mxu0 %v2202
    %2268 = vmatprep.subr.bf16.mxu0 %v2205
    %2269 = vmatpush1.bf16.msra.mxu0 %v2204
    %2270 = vmatprep.subr.bf16.mxu0 %v2207
    %2271 = vmatpush1.bf16.msra.mxu0 %v2206
    %2272 = vmatprep.subr.bf16.mxu0 %v2209
    %2273 = vmatpush1.bf16.msra.mxu0 %v2208
    %2274 = vmatprep.subr.bf16.mxu0 %v2211
    %2275 = vmatpush1.bf16.msra.mxu0 %v2210
    %2276 = vmatprep.subr.bf16.mxu0 %v2213
    %2277 = vmatpush1.bf16.msra.mxu0 %v2212
    %2278 = vmatprep.subr.bf16.mxu0 %v2215
    %2279 = vmatpush1.bf16.msra.mxu0 %v2214
    %2280 = vmatprep.subr.bf16.mxu0 %v2217
    %2281 = vmatpush1.bf16.msra.mxu0 %v2216
    %2282 = vmatprep.subr.bf16.mxu0 %v2219
    %2283 = vmatpush1.bf16.msra.mxu0 %v2218
    %2284 = vmatprep.subr.bf16.mxu0 %v2221
    %2285 = vmatpush1.bf16.msra.mxu0 %v2220
    %2286 = vmatprep.subr.bf16.mxu0 %v2223
    %2287 = vmatpush1.bf16.msra.mxu0 %v2222
    %2288 = vmatprep.subr.bf16.mxu0 %v2225
    %2289 = vmatpush1.bf16.msra.mxu0 %v2224
    %2290 = vmatprep.subr.bf16.mxu0 %v2227
    %2291 = vmatpush1.bf16.msra.mxu0 %v2226
    %2292 = vmatprep.subr.bf16.mxu0 %v2229
    %2293 = vmatpush1.bf16.msra.mxu0 %v2228
    %2294 = vmatprep.subr.bf16.mxu0 %v2231
    %2295 = vmatpush1.bf16.msra.mxu0 %v2230
    %2296 = vmatprep.subr.bf16.mxu0 %v2233
    %2297 = vmatpush1.bf16.msra.mxu0 %v2232
    %2298 = vmatprep.mubr.bf16.mxu0 %v2070
    %2299 = vmatmul.mubr.bf16.gmra.mrb[0].mxu0 %v2069
    %v2300 = vpop.f32.mrb[0].mxu0
    %v2301 = vadd.f32 0.0, %v2300
    %v2302 = vpop.f32.mrb[0].mxu0
    %v2303 = vadd.f32 0.0, %v2302
    %v2304 = vpop.f32.mrb[0].mxu0
    %v2305 = vadd.f32 0.0, %v2304
    %v2306 = vpop.f32.mrb[0].mxu0
    %v2307 = vadd.f32 0.0, %v2306
    %2308 = vmatprep.mubr.bf16.mxu0 %v2072
    %2309 = vmatmul.mubr.bf16.gmra.mrb[0].mxu0 %v2071
    %v2310 = vpop.f32.mrb[0].mxu0
    %v2311 = vadd.f32 0.0, %v2310
    %v2312 = vpop.f32.mrb[0].mxu0
    %v2313 = vadd.f32 0.0, %v2312
    %v2314 = vpop.f32.mrb[0].mxu0
    %v2315 = vadd.f32 0.0, %v2314
    %v2316 = vpop.f32.mrb[0].mxu0
    %v2317 = vadd.f32 0.0, %v2316
    %2318 = vdwg.mxu0
    %v2319 = vadd.f32 %v2061, %v2301
    %v2320 = vadd.f32 %v2062, %v2303
    %v2321 = vadd.f32 %v2063, %v2305
    %v2322 = vadd.f32 %v2064, %v2307
    %v2323 = vadd.f32 %v2065, %v2311
    %v2324 = vadd.f32 %v2066, %v2313
    %v2325 = vadd.f32 %v2067, %v2315
    %v2326 = vadd.f32 %v2068, %v2317
    %v2327 = vpack.c.bf16 %v498, %v500
    %v2328 = vpack.c.bf16 %v499, %v501
    %v2329 = vpack.c.bf16 %v502, %v504
    %v2330 = vpack.c.bf16 %v503, %v505
    %s2331 = scalar_lea.vmem [#allocation5], 1792
    %v2332 = vld [vmem:[%s2331] sm:$0xff]
    %v2333 = vld [vmem:[%s2331 + $0x8] sm:$0xff]
    %v2334 = vld [vmem:[%s2331 + $0x10] sm:$0xff]
    %v2335 = vld [vmem:[%s2331 + $0x18] sm:$0xff]
    %v2336 = vld [vmem:[%s2331 + $0x20] sm:$0xff]
    %v2337 = vld [vmem:[%s2331 + $0x28] sm:$0xff]
    %v2338 = vld [vmem:[%s2331 + $0x30] sm:$0xff]
    %v2339 = vld [vmem:[%s2331 + $0x38] sm:$0xff]
    %v2340 = vld [vmem:[%s2331 + $0x40] sm:$0xff]
    %v2341 = vld [vmem:[%s2331 + $0x48] sm:$0xff]
    %v2342 = vld [vmem:[%s2331 + $0x50] sm:$0xff]
    %v2343 = vld [vmem:[%s2331 + $0x58] sm:$0xff]
    %v2344 = vld [vmem:[%s2331 + $0x60] sm:$0xff]
    %v2345 = vld [vmem:[%s2331 + $0x68] sm:$0xff]
    %v2346 = vld [vmem:[%s2331 + $0x70] sm:$0xff]
    %v2347 = vld [vmem:[%s2331 + $0x78] sm:$0xff]
    %v2348 = vld [vmem:[%s2331 + $0x80] sm:$0xff]
    %v2349 = vld [vmem:[%s2331 + $0x88] sm:$0xff]
    %v2350 = vld [vmem:[%s2331 + $0x90] sm:$0xff]
    %v2351 = vld [vmem:[%s2331 + $0x98] sm:$0xff]
    %v2352 = vld [vmem:[%s2331 + $0xa0] sm:$0xff]
    %v2353 = vld [vmem:[%s2331 + $0xa8] sm:$0xff]
    %v2354 = vld [vmem:[%s2331 + $0xb0] sm:$0xff]
    %v2355 = vld [vmem:[%s2331 + $0xb8] sm:$0xff]
    %v2356 = vld [vmem:[%s2331 + $0xc0] sm:$0xff]
    %v2357 = vld [vmem:[%s2331 + $0xc8] sm:$0xff]
    %v2358 = vld [vmem:[%s2331 + $0xd0] sm:$0xff]
    %v2359 = vld [vmem:[%s2331 + $0xd8] sm:$0xff]
    %v2360 = vld [vmem:[%s2331 + $0xe0] sm:$0xff]
    %v2361 = vld [vmem:[%s2331 + $0xe8] sm:$0xff]
    %v2362 = vld [vmem:[%s2331 + $0xf0] sm:$0xff]
    %v2363 = vld [vmem:[%s2331 + $0xf8] sm:$0xff]
    %v2396 = vunpack.c.l.b16 %v2332
    %v2397 = vunpack.c.h.b16 %v2332
    %v2398 = vunpack.c.l.b16 %v2333
    %v2399 = vunpack.c.h.b16 %v2333
    %v2400 = vunpack.c.l.b16 %v2334
    %v2401 = vunpack.c.h.b16 %v2334
    %v2402 = vunpack.c.l.b16 %v2335
    %v2403 = vunpack.c.h.b16 %v2335
    %v2404 = vunpack.c.l.b16 %v2336
    %v2405 = vunpack.c.h.b16 %v2336
    %v2406 = vunpack.c.l.b16 %v2337
    %v2407 = vunpack.c.h.b16 %v2337
    %v2408 = vunpack.c.l.b16 %v2338
    %v2409 = vunpack.c.h.b16 %v2338
    %v2410 = vunpack.c.l.b16 %v2339
    %v2411 = vunpack.c.h.b16 %v2339
    %v2412 = vunpack.c.l.b16 %v2340
    %v2413 = vunpack.c.h.b16 %v2340
    %v2414 = vunpack.c.l.b16 %v2341
    %v2415 = vunpack.c.h.b16 %v2341
    %v2416 = vunpack.c.l.b16 %v2342
    %v2417 = vunpack.c.h.b16 %v2342
    %v2418 = vunpack.c.l.b16 %v2343
    %v2419 = vunpack.c.h.b16 %v2343
    %v2420 = vunpack.c.l.b16 %v2344
    %v2421 = vunpack.c.h.b16 %v2344
    %v2422 = vunpack.c.l.b16 %v2345
    %v2423 = vunpack.c.h.b16 %v2345
    %v2424 = vunpack.c.l.b16 %v2346
    %v2425 = vunpack.c.h.b16 %v2346
    %v2426 = vunpack.c.l.b16 %v2347
    %v2427 = vunpack.c.h.b16 %v2347
    %v2428 = vunpack.c.l.b16 %v2348
    %v2429 = vunpack.c.h.b16 %v2348
    %v2430 = vunpack.c.l.b16 %v2349
    %v2431 = vunpack.c.h.b16 %v2349
    %v2432 = vunpack.c.l.b16 %v2350
    %v2433 = vunpack.c.h.b16 %v2350
    %v2434 = vunpack.c.l.b16 %v2351
    %v2435 = vunpack.c.h.b16 %v2351
    %v2436 = vunpack.c.l.b16 %v2352
    %v2437 = vunpack.c.h.b16 %v2352
    %v2438 = vunpack.c.l.b16 %v2353
    %v2439 = vunpack.c.h.b16 %v2353
    %v2440 = vunpack.c.l.b16 %v2354
    %v2441 = vunpack.c.h.b16 %v2354
    %v2442 = vunpack.c.l.b16 %v2355
    %v2443 = vunpack.c.h.b16 %v2355
    %v2444 = vunpack.c.l.b16 %v2356
    %v2445 = vunpack.c.h.b16 %v2356
    %v2446 = vunpack.c.l.b16 %v2357
    %v2447 = vunpack.c.h.b16 %v2357
    %v2448 = vunpack.c.l.b16 %v2358
    %v2449 = vunpack.c.h.b16 %v2358
    %v2450 = vunpack.c.l.b16 %v2359
    %v2451 = vunpack.c.h.b16 %v2359
    %v2452 = vunpack.c.l.b16 %v2360
    %v2453 = vunpack.c.h.b16 %v2360
    %v2454 = vunpack.c.l.b16 %v2361
    %v2455 = vunpack.c.h.b16 %v2361
    %v2456 = vunpack.c.l.b16 %v2362
    %v2457 = vunpack.c.h.b16 %v2362
    %v2458 = vunpack.c.l.b16 %v2363
    %v2459 = vunpack.c.h.b16 %v2363
    %v2460 = vpack.c.b16 %v2398, %v2396
    %v2461 = vpack.c.b16 %v2399, %v2397
    %v2462 = vpack.c.b16 %v2402, %v2400
    %v2463 = vpack.c.b16 %v2403, %v2401
    %v2464 = vpack.c.b16 %v2406, %v2404
    %v2465 = vpack.c.b16 %v2407, %v2405
    %v2466 = vpack.c.b16 %v2410, %v2408
    %v2467 = vpack.c.b16 %v2411, %v2409
    %v2468 = vpack.c.b16 %v2414, %v2412
    %v2469 = vpack.c.b16 %v2415, %v2413
    %v2470 = vpack.c.b16 %v2418, %v2416
    %v2471 = vpack.c.b16 %v2419, %v2417
    %v2472 = vpack.c.b16 %v2422, %v2420
    %v2473 = vpack.c.b16 %v2423, %v2421
    %v2474 = vpack.c.b16 %v2426, %v2424
    %v2475 = vpack.c.b16 %v2427, %v2425
    %v2476 = vpack.c.b16 %v2430, %v2428
    %v2477 = vpack.c.b16 %v2431, %v2429
    %v2478 = vpack.c.b16 %v2434, %v2432
    %v2479 = vpack.c.b16 %v2435, %v2433
    %v2480 = vpack.c.b16 %v2438, %v2436
    %v2481 = vpack.c.b16 %v2439, %v2437
    %v2482 = vpack.c.b16 %v2442, %v2440
    %v2483 = vpack.c.b16 %v2443, %v2441
    %v2484 = vpack.c.b16 %v2446, %v2444
    %v2485 = vpack.c.b16 %v2447, %v2445
    %v2486 = vpack.c.b16 %v2450, %v2448
    %v2487 = vpack.c.b16 %v2451, %v2449
    %v2488 = vpack.c.b16 %v2454, %v2452
    %v2489 = vpack.c.b16 %v2455, %v2453
    %v2490 = vpack.c.b16 %v2458, %v2456
    %v2491 = vpack.c.b16 %v2459, %v2457
    %2524 = vmatprep.subr.bf16.mxu0 %v2461
    %2525 = vmatpush1.bf16.msra.mxu0 %v2460
    %2526 = vmatprep.subr.bf16.mxu0 %v2463
    %2527 = vmatpush1.bf16.msra.mxu0 %v2462
    %2528 = vmatprep.subr.bf16.mxu0 %v2465
    %2529 = vmatpush1.bf16.msra.mxu0 %v2464
    %2530 = vmatprep.subr.bf16.mxu0 %v2467
    %2531 = vmatpush1.bf16.msra.mxu0 %v2466
    %2532 = vmatprep.subr.bf16.mxu0 %v2469
    %2533 = vmatpush1.bf16.msra.mxu0 %v2468
    %2534 = vmatprep.subr.bf16.mxu0 %v2471
    %2535 = vmatpush1.bf16.msra.mxu0 %v2470
    %2536 = vmatprep.subr.bf16.mxu0 %v2473
    %2537 = vmatpush1.bf16.msra.mxu0 %v2472
    %2538 = vmatprep.subr.bf16.mxu0 %v2475
    %2539 = vmatpush1.bf16.msra.mxu0 %v2474
    %2540 = vmatprep.subr.bf16.mxu0 %v2477
    %2541 = vmatpush1.bf16.msra.mxu0 %v2476
    %2542 = vmatprep.subr.bf16.mxu0 %v2479
    %2543 = vmatpush1.bf16.msra.mxu0 %v2478
    %2544 = vmatprep.subr.bf16.mxu0 %v2481
    %2545 = vmatpush1.bf16.msra.mxu0 %v2480
    %2546 = vmatprep.subr.bf16.mxu0 %v2483
    %2547 = vmatpush1.bf16.msra.mxu0 %v2482
    %2548 = vmatprep.subr.bf16.mxu0 %v2485
    %2549 = vmatpush1.bf16.msra.mxu0 %v2484
    %2550 = vmatprep.subr.bf16.mxu0 %v2487
    %2551 = vmatpush1.bf16.msra.mxu0 %v2486
    %2552 = vmatprep.subr.bf16.mxu0 %v2489
    %2553 = vmatpush1.bf16.msra.mxu0 %v2488
    %2554 = vmatprep.subr.bf16.mxu0 %v2491
    %2555 = vmatpush1.bf16.msra.mxu0 %v2490
    %2556 = vmatprep.mubr.bf16.mxu0 %v2328
    %2557 = vmatmul.mubr.bf16.gmra.mrb[0].mxu0 %v2327
    %v2558 = vpop.f32.mrb[0].mxu0
    %v2559 = vadd.f32 0.0, %v2558
    %v2560 = vpop.f32.mrb[0].mxu0
    %v2561 = vadd.f32 0.0, %v2560
    %v2562 = vpop.f32.mrb[0].mxu0
    %v2563 = vadd.f32 0.0, %v2562
    %v2564 = vpop.f32.mrb[0].mxu0
    %v2565 = vadd.f32 0.0, %v2564
    %2566 = vmatprep.mubr.bf16.mxu0 %v2330
    %2567 = vmatmul.mubr.bf16.gmra.mrb[0].mxu0 %v2329
    %v2568 = vpop.f32.mrb[0].mxu0
    %v2569 = vadd.f32 0.0, %v2568
    %v2570 = vpop.f32.mrb[0].mxu0
    %v2571 = vadd.f32 0.0, %v2570
    %v2572 = vpop.f32.mrb[0].mxu0
    %v2573 = vadd.f32 0.0, %v2572
    %v2574 = vpop.f32.mrb[0].mxu0
    %v2575 = vadd.f32 0.0, %v2574
    %2576 = vdwg.mxu0
    %v2577 = vadd.f32 %v2319, %v2559
    %v2578 = vadd.f32 %v2320, %v2561
    %v2579 = vadd.f32 %v2321, %v2563
    %v2580 = vadd.f32 %v2322, %v2565
    %v2581 = vadd.f32 %v2323, %v2569
    %v2582 = vadd.f32 %v2324, %v2571
    %v2583 = vadd.f32 %v2325, %v2573
    %v2584 = vadd.f32 %v2326, %v2575
    %v2585 = vpack.c.bf16 %v978, %v980
    %v2586 = vpack.c.bf16 %v979, %v981
    %v2587 = vpack.c.bf16 %v982, %v984
    %v2588 = vpack.c.bf16 %v983, %v985
    %s2589 = scalar_lea.vmem [#allocation5], 2048
    %v2590 = vld [vmem:[%s2589] sm:$0xff]
    %v2591 = vld [vmem:[%s2589 + $0x8] sm:$0xff]
    %v2592 = vld [vmem:[%s2589 + $0x10] sm:$0xff]
    %v2593 = vld [vmem:[%s2589 + $0x18] sm:$0xff]
    %v2594 = vld [vmem:[%s2589 + $0x20] sm:$0xff]
    %v2595 = vld [vmem:[%s2589 + $0x28] sm:$0xff]
    %v2596 = vld [vmem:[%s2589 + $0x30] sm:$0xff]
    %v2597 = vld [vmem:[%s2589 + $0x38] sm:$0xff]
    %v2598 = vld [vmem:[%s2589 + $0x40] sm:$0xff]
    %v2599 = vld [vmem:[%s2589 + $0x48] sm:$0xff]
    %v2600 = vld [vmem:[%s2589 + $0x50] sm:$0xff]
    %v2601 = vld [vmem:[%s2589 + $0x58] sm:$0xff]
    %v2602 = vld [vmem:[%s2589 + $0x60] sm:$0xff]
    %v2603 = vld [vmem:[%s2589 + $0x68] sm:$0xff]
    %v2604 = vld [vmem:[%s2589 + $0x70] sm:$0xff]
    %v2605 = vld [vmem:[%s2589 + $0x78] sm:$0xff]
    %v2606 = vld [vmem:[%s2589 + $0x80] sm:$0xff]
    %v2607 = vld [vmem:[%s2589 + $0x88] sm:$0xff]
    %v2608 = vld [vmem:[%s2589 + $0x90] sm:$0xff]
    %v2609 = vld [vmem:[%s2589 + $0x98] sm:$0xff]
    %v2610 = vld [vmem:[%s2589 + $0xa0] sm:$0xff]
    %v2611 = vld [vmem:[%s2589 + $0xa8] sm:$0xff]
    %v2612 = vld [vmem:[%s2589 + $0xb0] sm:$0xff]
    %v2613 = vld [vmem:[%s2589 + $0xb8] sm:$0xff]
    %v2614 = vld [vmem:[%s2589 + $0xc0] sm:$0xff]
    %v2615 = vld [vmem:[%s2589 + $0xc8] sm:$0xff]
    %v2616 = vld [vmem:[%s2589 + $0xd0] sm:$0xff]
    %v2617 = vld [vmem:[%s2589 + $0xd8] sm:$0xff]
    %v2618 = vld [vmem:[%s2589 + $0xe0] sm:$0xff]
    %v2619 = vld [vmem:[%s2589 + $0xe8] sm:$0xff]
    %v2620 = vld [vmem:[%s2589 + $0xf0] sm:$0xff]
    %v2621 = vld [vmem:[%s2589 + $0xf8] sm:$0xff]
    %v2654 = vunpack.c.l.b16 %v2590
    %v2655 = vunpack.c.h.b16 %v2590
    %v2656 = vunpack.c.l.b16 %v2591
    %v2657 = vunpack.c.h.b16 %v2591
    %v2658 = vunpack.c.l.b16 %v2592
    %v2659 = vunpack.c.h.b16 %v2592
    %v2660 = vunpack.c.l.b16 %v2593
    %v2661 = vunpack.c.h.b16 %v2593
    %v2662 = vunpack.c.l.b16 %v2594
    %v2663 = vunpack.c.h.b16 %v2594
    %v2664 = vunpack.c.l.b16 %v2595
    %v2665 = vunpack.c.h.b16 %v2595
    %v2666 = vunpack.c.l.b16 %v2596
    %v2667 = vunpack.c.h.b16 %v2596
    %v2668 = vunpack.c.l.b16 %v2597
    %v2669 = vunpack.c.h.b16 %v2597
    %v2670 = vunpack.c.l.b16 %v2598
    %v2671 = vunpack.c.h.b16 %v2598
    %v2672 = vunpack.c.l.b16 %v2599
    %v2673 = vunpack.c.h.b16 %v2599
    %v2674 = vunpack.c.l.b16 %v2600
    %v2675 = vunpack.c.h.b16 %v2600
    %v2676 = vunpack.c.l.b16 %v2601
    %v2677 = vunpack.c.h.b16 %v2601
    %v2678 = vunpack.c.l.b16 %v2602
    %v2679 = vunpack.c.h.b16 %v2602
    %v2680 = vunpack.c.l.b16 %v2603
    %v2681 = vunpack.c.h.b16 %v2603
    %v2682 = vunpack.c.l.b16 %v2604
    %v2683 = vunpack.c.h.b16 %v2604
    %v2684 = vunpack.c.l.b16 %v2605
    %v2685 = vunpack.c.h.b16 %v2605
    %v2686 = vunpack.c.l.b16 %v2606
    %v2687 = vunpack.c.h.b16 %v2606
    %v2688 = vunpack.c.l.b16 %v2607
    %v2689 = vunpack.c.h.b16 %v2607
    %v2690 = vunpack.c.l.b16 %v2608
    %v2691 = vunpack.c.h.b16 %v2608
    %v2692 = vunpack.c.l.b16 %v2609
    %v2693 = vunpack.c.h.b16 %v2609
    %v2694 = vunpack.c.l.b16 %v2610
    %v2695 = vunpack.c.h.b16 %v2610
    %v2696 = vunpack.c.l.b16 %v2611
    %v2697 = vunpack.c.h.b16 %v2611
    %v2698 = vunpack.c.l.b16 %v2612
    %v2699 = vunpack.c.h.b16 %v2612
    %v2700 = vunpack.c.l.b16 %v2613
    %v2701 = vunpack.c.h.b16 %v2613
    %v2702 = vunpack.c.l.b16 %v2614
    %v2703 = vunpack.c.h.b16 %v2614
    %v2704 = vunpack.c.l.b16 %v2615
    %v2705 = vunpack.c.h.b16 %v2615
    %v2706 = vunpack.c.l.b16 %v2616
    %v2707 = vunpack.c.h.b16 %v2616
    %v2708 = vunpack.c.l.b16 %v2617
    %v2709 = vunpack.c.h.b16 %v2617
    %v2710 = vunpack.c.l.b16 %v2618
    %v2711 = vunpack.c.h.b16 %v2618
    %v2712 = vunpack.c.l.b16 %v2619
    %v2713 = vunpack.c.h.b16 %v2619
    %v2714 = vunpack.c.l.b16 %v2620
    %v2715 = vunpack.c.h.b16 %v2620
    %v2716 = vunpack.c.l.b16 %v2621
    %v2717 = vunpack.c.h.b16 %v2621
    %v2718 = vpack.c.b16 %v2656, %v2654
    %v2719 = vpack.c.b16 %v2657, %v2655
    %v2720 = vpack.c.b16 %v2660, %v2658
    %v2721 = vpack.c.b16 %v2661, %v2659
    %v2722 = vpack.c.b16 %v2664, %v2662
    %v2723 = vpack.c.b16 %v2665, %v2663
    %v2724 = vpack.c.b16 %v2668, %v2666
    %v2725 = vpack.c.b16 %v2669, %v2667
    %v2726 = vpack.c.b16 %v2672, %v2670
    %v2727 = vpack.c.b16 %v2673, %v2671
    %v2728 = vpack.c.b16 %v2676, %v2674
    %v2729 = vpack.c.b16 %v2677, %v2675
    %v2730 = vpack.c.b16 %v2680, %v2678
    %v2731 = vpack.c.b16 %v2681, %v2679
    %v2732 = vpack.c.b16 %v2684, %v2682
    %v2733 = vpack.c.b16 %v2685, %v2683
    %v2734 = vpack.c.b16 %v2688, %v2686
    %v2735 = vpack.c.b16 %v2689, %v2687
    %v2736 = vpack.c.b16 %v2692, %v2690
    %v2737 = vpack.c.b16 %v2693, %v2691
    %v2738 = vpack.c.b16 %v2696, %v2694
    %v2739 = vpack.c.b16 %v2697, %v2695
    %v2740 = vpack.c.b16 %v2700, %v2698
    %v2741 = vpack.c.b16 %v2701, %v2699
    %v2742 = vpack.c.b16 %v2704, %v2702
    %v2743 = vpack.c.b16 %v2705, %v2703
    %v2744 = vpack.c.b16 %v2708, %v2706
    %v2745 = vpack.c.b16 %v2709, %v2707
    %v2746 = vpack.c.b16 %v2712, %v2710
    %v2747 = vpack.c.b16 %v2713, %v2711
    %v2748 = vpack.c.b16 %v2716, %v2714
    %v2749 = vpack.c.b16 %v2717, %v2715
    %2782 = vmatprep.subr.bf16.mxu0 %v2719
    %2783 = vmatpush1.bf16.msra.mxu0 %v2718
    %2784 = vmatprep.subr.bf16.mxu0 %v2721
    %2785 = vmatpush1.bf16.msra.mxu0 %v2720
    %2786 = vmatprep.subr.bf16.mxu0 %v2723
    %2787 = vmatpush1.bf16.msra.mxu0 %v2722
    %2788 = vmatprep.subr.bf16.mxu0 %v2725
    %2789 = vmatpush1.bf16.msra.mxu0 %v2724
    %2790 = vmatprep.subr.bf16.mxu0 %v2727
    %2791 = vmatpush1.bf16.msra.mxu0 %v2726
    %2792 = vmatprep.subr.bf16.mxu0 %v2729
    %2793 = vmatpush1.bf16.msra.mxu0 %v2728
    %2794 = vmatprep.subr.bf16.mxu0 %v2731
    %2795 = vmatpush1.bf16.msra.mxu0 %v2730
    %2796 = vmatprep.subr.bf16.mxu0 %v2733
    %2797 = vmatpush1.bf16.msra.mxu0 %v2732
    %2798 = vmatprep.subr.bf16.mxu0 %v2735
    %2799 = vmatpush1.bf16.msra.mxu0 %v2734
    %2800 = vmatprep.subr.bf16.mxu0 %v2737
    %2801 = vmatpush1.bf16.msra.mxu0 %v2736
    %2802 = vmatprep.subr.bf16.mxu0 %v2739
    %2803 = vmatpush1.bf16.msra.mxu0 %v2738
    %2804 = vmatprep.subr.bf16.mxu0 %v2741
    %2805 = vmatpush1.bf16.msra.mxu0 %v2740
    %2806 = vmatprep.subr.bf16.mxu0 %v2743
    %2807 = vmatpush1.bf16.msra.mxu0 %v2742
    %2808 = vmatprep.subr.bf16.mxu0 %v2745
    %2809 = vmatpush1.bf16.msra.mxu0 %v2744
    %2810 = vmatprep.subr.bf16.mxu0 %v2747
    %2811 = vmatpush1.bf16.msra.mxu0 %v2746
    %2812 = vmatprep.subr.bf16.mxu0 %v2749
    %2813 = vmatpush1.bf16.msra.mxu0 %v2748
    %2814 = vmatprep.mubr.bf16.mxu0 %v2586
    %2815 = vmatmul.mubr.bf16.gmra.mrb[0].mxu0 %v2585
    %v2816 = vpop.f32.mrb[0].mxu0
    %v2817 = vadd.f32 0.0, %v2816
    %v2818 = vpop.f32.mrb[0].mxu0
    %v2819 = vadd.f32 0.0, %v2818
    %v2820 = vpop.f32.mrb[0].mxu0
    %v2821 = vadd.f32 0.0, %v2820
    %v2822 = vpop.f32.mrb[0].mxu0
    %v2823 = vadd.f32 0.0, %v2822
    %2824 = vmatprep.mubr.bf16.mxu0 %v2588
    %2825 = vmatmul.mubr.bf16.gmra.mrb[0].mxu0 %v2587
    %v2826 = vpop.f32.mrb[0].mxu0
    %v2827 = vadd.f32 0.0, %v2826
    %v2828 = vpop.f32.mrb[0].mxu0
    %v2829 = vadd.f32 0.0, %v2828
    %v2830 = vpop.f32.mrb[0].mxu0
    %v2831 = vadd.f32 0.0, %v2830
    %v2832 = vpop.f32.mrb[0].mxu0
    %v2833 = vadd.f32 0.0, %v2832
    %2834 = vdwg.mxu0
    %v2835 = vadd.f32 %v2577, %v2817
    %v2836 = vadd.f32 %v2578, %v2819
    %v2837 = vadd.f32 %v2579, %v2821
    %v2838 = vadd.f32 %v2580, %v2823
    %v2839 = vadd.f32 %v2581, %v2827
    %v2840 = vadd.f32 %v2582, %v2829
    %v2841 = vadd.f32 %v2583, %v2831
    %v2842 = vadd.f32 %v2584, %v2833
    %v2843 = vlaneseq
    %v2844 = vshrl.u32 %v2843, 7
    %v2845 = vsub.s32 3, %v2844
    %v2846 = vrot.slane %v64, %v2845
    %v2847 = vlaneseq
    %v2848 = vshrl.u32 %v2847, 7
    %v2849 = vsub.s32 3, %v2848
    %v2850 = vrot.slane %v65, %v2849
    %v2851 = vadd.f32 %v2835, %v2846
    %v2852 = vadd.f32 %v2836, %v2850
    %v2853 = vadd.f32 %v2837, %v2846
    %v2854 = vadd.f32 %v2838, %v2850
    %v2855 = vadd.f32 %v2839, %v2846
    %v2856 = vadd.f32 %v2840, %v2850
    %v2857 = vadd.f32 %v2841, %v2846
    %v2858 = vadd.f32 %v2842, %v2850
    %v2859 = vmax.f32 %v2851, 0.0
    %v2860 = vmax.f32 %v2852, 0.0
    %v2861 = vmax.f32 %v2853, 0.0
    %v2862 = vmax.f32 %v2854, 0.0
    %v2863 = vmax.f32 %v2855, 0.0
    %v2864 = vmax.f32 %v2856, 0.0
    %v2865 = vmax.f32 %v2857, 0.0
    %v2866 = vmax.f32 %v2858, 0.0
    %v2867 = vadd.s32 %v496, 8
    %v2868 = vadd.s32 %v496, 16
    %v2869 = vadd.s32 %v496, 24
    %v2870 = vand.u32 %v496, 15
    %v2871 = vand.u32 %v2867, 15
    %v2872 = vand.u32 %v2868, 15
    %v2873 = vand.u32 %v2869, 15
    %v2874 = vand.u32 %v2870, 3
    %v2875 = vand.u32 %v2871, 3
    %v2876 = vand.u32 %v2872, 3
    %v2877 = vand.u32 %v2873, 3
    %vm2878 = vcmp.lt.s32.totalorder %v2874, 2
    %vm2879 = vcmp.lt.s32.totalorder %v2875, 2
    %vm2880 = vcmp.lt.s32.totalorder %v2876, 2
    %vm2881 = vcmp.lt.s32.totalorder %v2877, 2
    %vm2882 = vcmp.lt.s32.totalorder %v2870, 8
    %vm2883 = vcmp.lt.s32.totalorder %v2871, 8
    %vm2884 = vcmp.lt.s32.totalorder %v2872, 8
    %vm2885 = vcmp.lt.s32.totalorder %v2873, 8
    %vm2886 = vmand %vm2878, %vm2882
    %vm2887 = vmand %vm2879, %vm2883
    %vm2888 = vmand %vm2880, %vm2884
    %vm2889 = vmand %vm2881, %vm2885
    %v2890 = vsel %vm2886, 1, 0
    %v2891 = vsel %vm2887, 1, 0
    %v2892 = vsel %vm2888, 1, 0
    %v2893 = vsel %vm2889, 1, 0
    %v2894 = vcvt.s32.f32 %v2890
    %v2895 = vcvt.s32.f32 %v2891
    %v2896 = vcvt.s32.f32 %v2892
    %v2897 = vcvt.s32.f32 %v2893
    %v2898 = vmul.f32 %v2859, %v2894
    %v2899 = vmul.f32 %v2860, %v2894
    %v2900 = vmul.f32 %v2861, %v2895
    %v2901 = vmul.f32 %v2862, %v2895
    %v2902 = vmul.f32 %v2863, %v2896
    %v2903 = vmul.f32 %v2864, %v2896
    %v2904 = vmul.f32 %v2865, %v2897
    %v2905 = vmul.f32 %v2866, %v2897
    %v2906 = vadd.f32 %v2898, %v2900
    %v2907 = vadd.f32 %v2906, %v2902
    %v2908 = vadd.f32 %v2907, %v2904
    %v2909 = vrot.slane %v2908, 4
    %v2910 = vadd.f32 %v2908, %v2909
    %v2911 = vrot.slane %v2910, 2
    %v2912 = vadd.f32 %v2910, %v2911
    %v2913 = vrot.slane %v2912, 1
    %v2914 = vadd.f32 %v2912, %v2913
    %v2915 = vadd.f32 %v2899, %v2901
    %v2916 = vadd.f32 %v2915, %v2903
    %v2917 = vadd.f32 %v2916, %v2905
    %v2918 = vrot.slane %v2917, 4
    %v2919 = vadd.f32 %v2917, %v2918
    %v2920 = vrot.slane %v2919, 2
    %v2921 = vadd.f32 %v2919, %v2920
    %v2922 = vrot.slane %v2921, 1
    %v2923 = vadd.f32 %v2921, %v2922
    %v2924 = vmul.f32 %v2914, 0.125
    %v2925 = vmul.f32 %v2923, 0.125
    %v2926 = vmul.f32 %v2898, %v2859
    %v2927 = vmul.f32 %v2899, %v2860
    %v2928 = vmul.f32 %v2900, %v2861
    %v2929 = vmul.f32 %v2901, %v2862
    %v2930 = vmul.f32 %v2902, %v2863
    %v2931 = vmul.f32 %v2903, %v2864
    %v2932 = vmul.f32 %v2904, %v2865
    %v2933 = vmul.f32 %v2905, %v2866
    %v2934 = vadd.f32 %v2926, %v2928
    %v2935 = vadd.f32 %v2934, %v2930
    %v2936 = vadd.f32 %v2935, %v2932
    %v2937 = vrot.slane %v2936, 4
    %v2938 = vadd.f32 %v2936, %v2937
    %v2939 = vrot.slane %v2938, 2
    %v2940 = vadd.f32 %v2938, %v2939
    %v2941 = vrot.slane %v2940, 1
    %v2942 = vadd.f32 %v2940, %v2941
    %v2943 = vadd.f32 %v2927, %v2929
    %v2944 = vadd.f32 %v2943, %v2931
    %v2945 = vadd.f32 %v2944, %v2933
    %v2946 = vrot.slane %v2945, 4
    %v2947 = vadd.f32 %v2945, %v2946
    %v2948 = vrot.slane %v2947, 2
    %v2949 = vadd.f32 %v2947, %v2948
    %v2950 = vrot.slane %v2949, 1
    %v2951 = vadd.f32 %v2949, %v2950
    %v2952 = vmul.f32 %v2942, 0.125
    %v2953 = vmul.f32 %v2951, 0.125
    %v2954 = vmul.f32 %v2924, %v2924
    %v2955 = vmul.f32 %v2925, %v2925
    %v2956 = vsub.f32 %v2952, %v2954
    %v2957 = vsub.f32 %v2953, %v2955
    %v2958 = vadd.f32 %v2956, 1e-05
    %v2959 = vadd.f32 %v2957, 1e-05
    %v2960 = vrsqrt.pop %v2958
    %v2961 = vrsqrt.pop %v2959
    %v2962 = vmul.f32 %v64, %v2960
    %v2963 = vmul.f32 %v65, %v2961
    %v2964 = vlaneseq
    %v2965 = vshrl.u32 %v2964, 7
    %v2966 = vsub.s32 4, %v2965
    %v2967 = vrot.slane %v2962, %v2966
    %v2968 = vlaneseq
    %v2969 = vshrl.u32 %v2968, 7
    %v2970 = vsub.s32 4, %v2969
    %v2971 = vrot.slane %v2963, %v2970
    %v2972 = vmul.f32 %v2859, %v2967
    %v2973 = vmul.f32 %v2860, %v2971
    %v2974 = vmul.f32 %v2861, %v2967
    %v2975 = vmul.f32 %v2862, %v2971
    %v2976 = vmul.f32 %v2863, %v2967
    %v2977 = vmul.f32 %v2864, %v2971
    %v2978 = vmul.f32 %v2865, %v2967
    %v2979 = vmul.f32 %v2866, %v2971
    %v2980 = vmul.f32 %v2924, %v2962
    %v2981 = vmul.f32 %v2925, %v2963
    %v2984 = vrot.slane %v2980, 7
    %v2985 = vrot.slane %v2981, 7
    %v2988 = vsub.f32 %v64, %v2984
    %v2989 = vsub.f32 %v65, %v2985
    %v2990 = vlaneseq
    %v2991 = vshrl.u32 %v2990, 7
    %v2992 = vsub.s32 5, %v2991
    %v2993 = vrot.slane %v2988, %v2992
    %v2994 = vlaneseq
    %v2995 = vshrl.u32 %v2994, 7
    %v2996 = vsub.s32 5, %v2995
    %v2997 = vrot.slane %v2989, %v2996
    %v2998 = vadd.f32 %v2972, %v2993
    %v2999 = vadd.f32 %v2973, %v2997
    %v3000 = vadd.f32 %v2974, %v2993
    %v3001 = vadd.f32 %v2975, %v2997
    %v3002 = vadd.f32 %v2976, %v2993
    %v3003 = vadd.f32 %v2977, %v2997
    %v3004 = vadd.f32 %v2978, %v2993
    %v3005 = vadd.f32 %v2979, %v2997
    %v3006 = vpack.c.bf16 %v3000, %v2998
    %v3007 = vpack.c.bf16 %v3001, %v2999
    %v3008 = vpack.c.bf16 %v3004, %v3002
    %v3009 = vpack.c.bf16 %v3005, %v3003
    %v3010 = vld [vmem:[%s3] sm:$0xf]
    %v3011 = vld [vmem:[%s3 + $0x4] sm:$0xf]
    %v3012 = vld [vmem:[%s3 + $0x8] sm:$0xf]
    %v3013 = vld [vmem:[%s3 + $0xc] sm:$0xf]
    %v3014 = vld [vmem:[%s3 + $0x10] sm:$0xf]
    %v3015 = vld [vmem:[%s3 + $0x14] sm:$0xf]
    %v3016 = vld [vmem:[%s3 + $0x18] sm:$0xf]
    %v3017 = vld [vmem:[%s3 + $0x1c] sm:$0xf]
    %v3018 = vld [vmem:[%s3 + $0x20] sm:$0xf]
    %v3019 = vld [vmem:[%s3 + $0x24] sm:$0xf]
    %v3020 = vld [vmem:[%s3 + $0x28] sm:$0xf]
    %v3021 = vld [vmem:[%s3 + $0x2c] sm:$0xf]
    %v3022 = vld [vmem:[%s3 + $0x30] sm:$0xf]
    %v3023 = vld [vmem:[%s3 + $0x34] sm:$0xf]
    %v3024 = vld [vmem:[%s3 + $0x38] sm:$0xf]
    %v3025 = vld [vmem:[%s3 + $0x3c] sm:$0xf]
    %v3026 = vld [vmem:[%s3 + $0x40] sm:$0xf]
    %v3027 = vld [vmem:[%s3 + $0x44] sm:$0xf]
    %v3028 = vld [vmem:[%s3 + $0x48] sm:$0xf]
    %v3029 = vld [vmem:[%s3 + $0x4c] sm:$0xf]
    %v3030 = vld [vmem:[%s3 + $0x50] sm:$0xf]
    %v3031 = vld [vmem:[%s3 + $0x54] sm:$0xf]
    %v3032 = vld [vmem:[%s3 + $0x58] sm:$0xf]
    %v3033 = vld [vmem:[%s3 + $0x5c] sm:$0xf]
    %v3034 = vld [vmem:[%s3 + $0x60] sm:$0xf]
    %v3035 = vld [vmem:[%s3 + $0x64] sm:$0xf]
    %v3036 = vld [vmem:[%s3 + $0x68] sm:$0xf]
    %v3037 = vld [vmem:[%s3 + $0x6c] sm:$0xf]
    %v3038 = vld [vmem:[%s3 + $0x70] sm:$0xf]
    %v3039 = vld [vmem:[%s3 + $0x74] sm:$0xf]
    %v3040 = vld [vmem:[%s3 + $0x78] sm:$0xf]
    %v3041 = vld [vmem:[%s3 + $0x7c] sm:$0xf]
    %v3042 = vrot.slane %v2998, 1
    %v3043 = vrot.slane %v2999, 1
    %v3044 = vrot.slane %v3000, 1
    %v3045 = vrot.slane %v3001, 1
    %v3046 = vrot.slane %v3002, 1
    %v3047 = vrot.slane %v3003, 1
    %v3048 = vrot.slane %v3004, 1
    %v3049 = vrot.slane %v3005, 1
    %v3050 = vsel %vm497, %v3046, %v3048
    %v3051 = vsel %vm497, %v3047, %v3049
    %v3052 = vsel %vm497, %v3044, %v3046
    %v3053 = vsel %vm497, %v3045, %v3047
    %v3054 = vsel %vm497, %v3042, %v3044
    %v3055 = vsel %vm497, %v3043, %v3045
    %v3056 = vsel %vm497, %v3048, %v3042
    %v3057 = vsel %vm497, %v3049, %v3043
    %v3058 = vpack.c.bf16 %v3052, %v3054
    %v3059 = vpack.c.bf16 %v3053, %v3055
    %v3060 = vpack.c.bf16 %v3056, %v3050
    %v3061 = vpack.c.bf16 %v3057, %v3051
    %s3062 = scalar_lea.vmem %s3, 128
    %v3063 = vld [vmem:[%s3062] sm:$0xf]
    %v3064 = vld [vmem:[%s3062 + $0x4] sm:$0xf]
    %v3065 = vld [vmem:[%s3062 + $0x8] sm:$0xf]
    %v3066 = vld [vmem:[%s3062 + $0xc] sm:$0xf]
    %v3067 = vld [vmem:[%s3062 + $0x10] sm:$0xf]
    %v3068 = vld [vmem:[%s3062 + $0x14] sm:$0xf]
    %v3069 = vld [vmem:[%s3062 + $0x18] sm:$0xf]
    %v3070 = vld [vmem:[%s3062 + $0x1c] sm:$0xf]
    %v3071 = vld [vmem:[%s3062 + $0x20] sm:$0xf]
    %v3072 = vld [vmem:[%s3062 + $0x24] sm:$0xf]
    %v3073 = vld [vmem:[%s3062 + $0x28] sm:$0xf]
    %v3074 = vld [vmem:[%s3062 + $0x2c] sm:$0xf]
    %v3075 = vld [vmem:[%s3062 + $0x30] sm:$0xf]
    %v3076 = vld [vmem:[%s3062 + $0x34] sm:$0xf]
    %v3077 = vld [vmem:[%s3062 + $0x38] sm:$0xf]
    %v3078 = vld [vmem:[%s3062 + $0x3c] sm:$0xf]
    %v3079 = vld [vmem:[%s3062 + $0x40] sm:$0xf]
    %v3080 = vld [vmem:[%s3062 + $0x44] sm:$0xf]
    %v3081 = vld [vmem:[%s3062 + $0x48] sm:$0xf]
    %v3082 = vld [vmem:[%s3062 + $0x4c] sm:$0xf]
    %v3083 = vld [vmem:[%s3062 + $0x50] sm:$0xf]
    %v3084 = vld [vmem:[%s3062 + $0x54] sm:$0xf]
    %v3085 = vld [vmem:[%s3062 + $0x58] sm:$0xf]
    %v3086 = vld [vmem:[%s3062 + $0x5c] sm:$0xf]
    %v3087 = vld [vmem:[%s3062 + $0x60] sm:$0xf]
    %v3088 = vld [vmem:[%s3062 + $0x64] sm:$0xf]
    %v3089 = vld [vmem:[%s3062 + $0x68] sm:$0xf]
    %v3090 = vld [vmem:[%s3062 + $0x6c] sm:$0xf]
    %v3091 = vld [vmem:[%s3062 + $0x70] sm:$0xf]
    %v3092 = vld [vmem:[%s3062 + $0x74] sm:$0xf]
    %v3093 = vld [vmem:[%s3062 + $0x78] sm:$0xf]
    %v3094 = vld [vmem:[%s3062 + $0x7c] sm:$0xf]
    %v3127 = vunpack.c.l.b16 %v3063
    %v3128 = vunpack.c.l.b16 %v3064
    %v3129 = vunpack.c.l.b16 %v3065
    %v3130 = vunpack.c.l.b16 %v3066
    %v3131 = vunpack.c.l.b16 %v3067
    %v3132 = vunpack.c.l.b16 %v3068
    %v3133 = vunpack.c.l.b16 %v3069
    %v3134 = vunpack.c.l.b16 %v3070
    %v3135 = vunpack.c.l.b16 %v3071
    %v3136 = vunpack.c.l.b16 %v3072
    %v3137 = vunpack.c.l.b16 %v3073
    %v3138 = vunpack.c.l.b16 %v3074
    %v3139 = vunpack.c.l.b16 %v3075
    %v3140 = vunpack.c.l.b16 %v3076
    %v3141 = vunpack.c.l.b16 %v3077
    %v3142 = vunpack.c.l.b16 %v3078
    %v3143 = vunpack.c.l.b16 %v3079
    %v3144 = vunpack.c.l.b16 %v3080
    %v3145 = vunpack.c.l.b16 %v3081
    %v3146 = vunpack.c.l.b16 %v3082
    %v3147 = vunpack.c.l.b16 %v3083
    %v3148 = vunpack.c.l.b16 %v3084
    %v3149 = vunpack.c.l.b16 %v3085
    %v3150 = vunpack.c.l.b16 %v3086
    %v3151 = vunpack.c.l.b16 %v3087
    %v3152 = vunpack.c.l.b16 %v3088
    %v3153 = vunpack.c.l.b16 %v3089
    %v3154 = vunpack.c.l.b16 %v3090
    %v3155 = vunpack.c.l.b16 %v3091
    %v3156 = vunpack.c.l.b16 %v3092
    %v3157 = vunpack.c.l.b16 %v3093
    %v3158 = vunpack.c.l.b16 %v3094
    %v3159 = vpack.c.b16 %v3128, %v3127
    %v3160 = vpack.c.b16 %v3130, %v3129
    %v3161 = vpack.c.b16 %v3132, %v3131
    %v3162 = vpack.c.b16 %v3134, %v3133
    %v3163 = vpack.c.b16 %v3136, %v3135
    %v3164 = vpack.c.b16 %v3138, %v3137
    %v3165 = vpack.c.b16 %v3140, %v3139
    %v3166 = vpack.c.b16 %v3142, %v3141
    %v3167 = vpack.c.b16 %v3144, %v3143
    %v3168 = vpack.c.b16 %v3146, %v3145
    %v3169 = vpack.c.b16 %v3148, %v3147
    %v3170 = vpack.c.b16 %v3150, %v3149
    %v3171 = vpack.c.b16 %v3152, %v3151
    %v3172 = vpack.c.b16 %v3154, %v3153
    %v3173 = vpack.c.b16 %v3156, %v3155
    %v3174 = vpack.c.b16 %v3158, %v3157
    %3191 = vmatprep.subr.bf16.mxu0 0
    %3192 = vmatpush1.bf16.msra.mxu0 %v3159
    %3193 = vmatprep.subr.bf16.mxu0 0
    %3194 = vmatpush1.bf16.msra.mxu0 %v3160
    %3195 = vmatprep.subr.bf16.mxu0 0
    %3196 = vmatpush1.bf16.msra.mxu0 %v3161
    %3197 = vmatprep.subr.bf16.mxu0 0
    %3198 = vmatpush1.bf16.msra.mxu0 %v3162
    %3199 = vmatprep.subr.bf16.mxu0 0
    %3200 = vmatpush1.bf16.msra.mxu0 %v3163
    %3201 = vmatprep.subr.bf16.mxu0 0
    %3202 = vmatpush1.bf16.msra.mxu0 %v3164
    %3203 = vmatprep.subr.bf16.mxu0 0
    %3204 = vmatpush1.bf16.msra.mxu0 %v3165
    %3205 = vmatprep.subr.bf16.mxu0 0
    %3206 = vmatpush1.bf16.msra.mxu0 %v3166
    %3207 = vmatprep.subr.bf16.mxu0 0
    %3208 = vmatpush1.bf16.msra.mxu0 %v3167
    %3209 = vmatprep.subr.bf16.mxu0 0
    %3210 = vmatpush1.bf16.msra.mxu0 %v3168
    %3211 = vmatprep.subr.bf16.mxu0 0
    %3212 = vmatpush1.bf16.msra.mxu0 %v3169
    %3213 = vmatprep.subr.bf16.mxu0 0
    %3214 = vmatpush1.bf16.msra.mxu0 %v3170
    %3215 = vmatprep.subr.bf16.mxu0 0
    %3216 = vmatpush1.bf16.msra.mxu0 %v3171
    %3217 = vmatprep.subr.bf16.mxu0 0
    %3218 = vmatpush1.bf16.msra.mxu0 %v3172
    %3219 = vmatprep.subr.bf16.mxu0 0
    %3220 = vmatpush1.bf16.msra.mxu0 %v3173
    %3221 = vmatprep.subr.bf16.mxu0 0
    %3222 = vmatpush1.bf16.msra.mxu0 %v3174
    %3223 = vmatprep.mubr.bf16.mxu0 %v3059
    %3224 = vmatmul.mubr.bf16.gmra.mrb[0].mxu0 %v3058
    %v3225 = vpop.f32.mrb[0].mxu0
    %v3226 = vadd.f32 0.0, %v3225
    %v3227 = vpop.f32.mrb[0].mxu0
    %v3228 = vpop.f32.mrb[0].mxu0
    %v3229 = vadd.f32 0.0, %v3228
    %v3230 = vpop.f32.mrb[0].mxu0
    %3231 = vmatprep.mubr.bf16.mxu0 %v3061
    %3232 = vmatmul.mubr.bf16.gmra.mrb[0].mxu0 %v3060
    %v3233 = vpop.f32.mrb[0].mxu0
    %v3234 = vadd.f32 0.0, %v3233
    %v3235 = vpop.f32.mrb[0].mxu0
    %v3236 = vpop.f32.mrb[0].mxu0
    %v3237 = vadd.f32 0.0, %v3236
    %v3238 = vpop.f32.mrb[0].mxu0
    %3239 = vdwg.mxu0
    %v3272 = vunpack.c.l.b16 %v3010
    %v3273 = vunpack.c.l.b16 %v3011
    %v3274 = vunpack.c.l.b16 %v3012
    %v3275 = vunpack.c.l.b16 %v3013
    %v3276 = vunpack.c.l.b16 %v3014
    %v3277 = vunpack.c.l.b16 %v3015
    %v3278 = vunpack.c.l.b16 %v3016
    %v3279 = vunpack.c.l.b16 %v3017
    %v3280 = vunpack.c.l.b16 %v3018
    %v3281 = vunpack.c.l.b16 %v3019
    %v3282 = vunpack.c.l.b16 %v3020
    %v3283 = vunpack.c.l.b16 %v3021
    %v3284 = vunpack.c.l.b16 %v3022
    %v3285 = vunpack.c.l.b16 %v3023
    %v3286 = vunpack.c.l.b16 %v3024
    %v3287 = vunpack.c.l.b16 %v3025
    %v3288 = vunpack.c.l.b16 %v3026
    %v3289 = vunpack.c.l.b16 %v3027
    %v3290 = vunpack.c.l.b16 %v3028
    %v3291 = vunpack.c.l.b16 %v3029
    %v3292 = vunpack.c.l.b16 %v3030
    %v3293 = vunpack.c.l.b16 %v3031
    %v3294 = vunpack.c.l.b16 %v3032
    %v3295 = vunpack.c.l.b16 %v3033
    %v3296 = vunpack.c.l.b16 %v3034
    %v3297 = vunpack.c.l.b16 %v3035
    %v3298 = vunpack.c.l.b16 %v3036
    %v3299 = vunpack.c.l.b16 %v3037
    %v3300 = vunpack.c.l.b16 %v3038
    %v3301 = vunpack.c.l.b16 %v3039
    %v3302 = vunpack.c.l.b16 %v3040
    %v3303 = vunpack.c.l.b16 %v3041
    %v3304 = vpack.c.b16 %v3273, %v3272
    %v3305 = vpack.c.b16 %v3275, %v3274
    %v3306 = vpack.c.b16 %v3277, %v3276
    %v3307 = vpack.c.b16 %v3279, %v3278
    %v3308 = vpack.c.b16 %v3281, %v3280
    %v3309 = vpack.c.b16 %v3283, %v3282
    %v3310 = vpack.c.b16 %v3285, %v3284
    %v3311 = vpack.c.b16 %v3287, %v3286
    %v3312 = vpack.c.b16 %v3289, %v3288
    %v3313 = vpack.c.b16 %v3291, %v3290
    %v3314 = vpack.c.b16 %v3293, %v3292
    %v3315 = vpack.c.b16 %v3295, %v3294
    %v3316 = vpack.c.b16 %v3297, %v3296
    %v3317 = vpack.c.b16 %v3299, %v3298
    %v3318 = vpack.c.b16 %v3301, %v3300
    %v3319 = vpack.c.b16 %v3303, %v3302
    %3336 = vmatprep.subr.bf16.mxu0 0
    %3337 = vmatpush1.bf16.msra.mxu0 %v3304
    %3338 = vmatprep.subr.bf16.mxu0 0
    %3339 = vmatpush1.bf16.msra.mxu0 %v3305
    %3340 = vmatprep.subr.bf16.mxu0 0
    %3341 = vmatpush1.bf16.msra.mxu0 %v3306
    %3342 = vmatprep.subr.bf16.mxu0 0
    %3343 = vmatpush1.bf16.msra.mxu0 %v3307
    %3344 = vmatprep.subr.bf16.mxu0 0
    %3345 = vmatpush1.bf16.msra.mxu0 %v3308
    %3346 = vmatprep.subr.bf16.mxu0 0
    %3347 = vmatpush1.bf16.msra.mxu0 %v3309
    %3348 = vmatprep.subr.bf16.mxu0 0
    %3349 = vmatpush1.bf16.msra.mxu0 %v3310
    %3350 = vmatprep.subr.bf16.mxu0 0
    %3351 = vmatpush1.bf16.msra.mxu0 %v3311
    %3352 = vmatprep.subr.bf16.mxu0 0
    %3353 = vmatpush1.bf16.msra.mxu0 %v3312
    %3354 = vmatprep.subr.bf16.mxu0 0
    %3355 = vmatpush1.bf16.msra.mxu0 %v3313
    %3356 = vmatprep.subr.bf16.mxu0 0
    %3357 = vmatpush1.bf16.msra.mxu0 %v3314
    %3358 = vmatprep.subr.bf16.mxu0 0
    %3359 = vmatpush1.bf16.msra.mxu0 %v3315
    %3360 = vmatprep.subr.bf16.mxu0 0
    %3361 = vmatpush1.bf16.msra.mxu0 %v3316
    %3362 = vmatprep.subr.bf16.mxu0 0
    %3363 = vmatpush1.bf16.msra.mxu0 %v3317
    %3364 = vmatprep.subr.bf16.mxu0 0
    %3365 = vmatpush1.bf16.msra.mxu0 %v3318
    %3366 = vmatprep.subr.bf16.mxu0 0
    %3367 = vmatpush1.bf16.msra.mxu0 %v3319
    %3368 = vmatprep.mubr.bf16.mxu0 %v3007
    %3369 = vmatmul.mubr.bf16.gmra.mrb[0].mxu0 %v3006
    %v3370 = vpop.f32.mrb[0].mxu0
    %v3371 = vadd.f32 %v3226, %v3370
    %v3372 = vpop.f32.mrb[0].mxu0
    %v3373 = vpop.f32.mrb[0].mxu0
    %v3374 = vadd.f32 %v3229, %v3373
    %v3375 = vpop.f32.mrb[0].mxu0
    %3376 = vmatprep.mubr.bf16.mxu0 %v3009
    %3377 = vmatmul.mubr.bf16.gmra.mrb[0].mxu0 %v3008
    %v3378 = vpop.f32.mrb[0].mxu0
    %v3379 = vadd.f32 %v3234, %v3378
    %v3380 = vpop.f32.mrb[0].mxu0
    %v3381 = vpop.f32.mrb[0].mxu0
    %v3382 = vadd.f32 %v3237, %v3381
    %v3383 = vpop.f32.mrb[0].mxu0
    %3384 = vdwg.mxu0
    %v3385 = vrot.slane %v2998, 4
    %v3386 = vrot.slane %v2999, 4
    %v3387 = vrot.slane %v3000, 4
    %v3388 = vrot.slane %v3001, 4
    %v3389 = vrot.slane %v3002, 4
    %v3390 = vrot.slane %v3003, 4
    %v3391 = vrot.slane %v3004, 4
    %v3392 = vrot.slane %v3005, 4
    %v3393 = vsel %vm1252, %v3389, %v3391
    %v3394 = vsel %vm1252, %v3390, %v3392
    %v3395 = vsel %vm1252, %v3387, %v3389
    %v3396 = vsel %vm1252, %v3388, %v3390
    %v3397 = vsel %vm1252, %v3385, %v3387
    %v3398 = vsel %vm1252, %v3386, %v3388
    %v3399 = vsel %vm1252, %v3391, %v3385
    %v3400 = vsel %vm1252, %v3392, %v3386
    %v3401 = vpack.c.bf16 %v3395, %v3397
    %v3402 = vpack.c.bf16 %v3396, %v3398
    %v3403 = vpack.c.bf16 %v3399, %v3393
    %v3404 = vpack.c.bf16 %v3400, %v3394
    %s3405 = scalar_lea.vmem %s3, 256
    %v3406 = vld [vmem:[%s3405] sm:$0xf]
    %v3407 = vld [vmem:[%s3405 + $0x4] sm:$0xf]
    %v3408 = vld [vmem:[%s3405 + $0x8] sm:$0xf]
    %v3409 = vld [vmem:[%s3405 + $0xc] sm:$0xf]
    %v3410 = vld [vmem:[%s3405 + $0x10] sm:$0xf]
    %v3411 = vld [vmem:[%s3405 + $0x14] sm:$0xf]
    %v3412 = vld [vmem:[%s3405 + $0x18] sm:$0xf]
    %v3413 = vld [vmem:[%s3405 + $0x1c] sm:$0xf]
    %v3414 = vld [vmem:[%s3405 + $0x20] sm:$0xf]
    %v3415 = vld [vmem:[%s3405 + $0x24] sm:$0xf]
    %v3416 = vld [vmem:[%s3405 + $0x28] sm:$0xf]
    %v3417 = vld [vmem:[%s3405 + $0x2c] sm:$0xf]
    %v3418 = vld [vmem:[%s3405 + $0x30] sm:$0xf]
    %v3419 = vld [vmem:[%s3405 + $0x34] sm:$0xf]
    %v3420 = vld [vmem:[%s3405 + $0x38] sm:$0xf]
    %v3421 = vld [vmem:[%s3405 + $0x3c] sm:$0xf]
    %v3422 = vld [vmem:[%s3405 + $0x40] sm:$0xf]
    %v3423 = vld [vmem:[%s3405 + $0x44] sm:$0xf]
    %v3424 = vld [vmem:[%s3405 + $0x48] sm:$0xf]
    %v3425 = vld [vmem:[%s3405 + $0x4c] sm:$0xf]
    %v3426 = vld [vmem:[%s3405 + $0x50] sm:$0xf]
    %v3427 = vld [vmem:[%s3405 + $0x54] sm:$0xf]
    %v3428 = vld [vmem:[%s3405 + $0x58] sm:$0xf]
    %v3429 = vld [vmem:[%s3405 + $0x5c] sm:$0xf]
    %v3430 = vld [vmem:[%s3405 + $0x60] sm:$0xf]
    %v3431 = vld [vmem:[%s3405 + $0x64] sm:$0xf]
    %v3432 = vld [vmem:[%s3405 + $0x68] sm:$0xf]
    %v3433 = vld [vmem:[%s3405 + $0x6c] sm:$0xf]
    %v3434 = vld [vmem:[%s3405 + $0x70] sm:$0xf]
    %v3435 = vld [vmem:[%s3405 + $0x74] sm:$0xf]
    %v3436 = vld [vmem:[%s3405 + $0x78] sm:$0xf]
    %v3437 = vld [vmem:[%s3405 + $0x7c] sm:$0xf]
    %v3470 = vunpack.c.l.b16 %v3406
    %v3471 = vunpack.c.l.b16 %v3407
    %v3472 = vunpack.c.l.b16 %v3408
    %v3473 = vunpack.c.l.b16 %v3409
    %v3474 = vunpack.c.l.b16 %v3410
    %v3475 = vunpack.c.l.b16 %v3411
    %v3476 = vunpack.c.l.b16 %v3412
    %v3477 = vunpack.c.l.b16 %v3413
    %v3478 = vunpack.c.l.b16 %v3414
    %v3479 = vunpack.c.l.b16 %v3415
    %v3480 = vunpack.c.l.b16 %v3416
    %v3481 = vunpack.c.l.b16 %v3417
    %v3482 = vunpack.c.l.b16 %v3418
    %v3483 = vunpack.c.l.b16 %v3419
    %v3484 = vunpack.c.l.b16 %v3420
    %v3485 = vunpack.c.l.b16 %v3421
    %v3486 = vunpack.c.l.b16 %v3422
    %v3487 = vunpack.c.l.b16 %v3423
    %v3488 = vunpack.c.l.b16 %v3424
    %v3489 = vunpack.c.l.b16 %v3425
    %v3490 = vunpack.c.l.b16 %v3426
    %v3491 = vunpack.c.l.b16 %v3427
    %v3492 = vunpack.c.l.b16 %v3428
    %v3493 = vunpack.c.l.b16 %v3429
    %v3494 = vunpack.c.l.b16 %v3430
    %v3495 = vunpack.c.l.b16 %v3431
    %v3496 = vunpack.c.l.b16 %v3432
    %v3497 = vunpack.c.l.b16 %v3433
    %v3498 = vunpack.c.l.b16 %v3434
    %v3499 = vunpack.c.l.b16 %v3435
    %v3500 = vunpack.c.l.b16 %v3436
    %v3501 = vunpack.c.l.b16 %v3437
    %v3502 = vpack.c.b16 %v3471, %v3470
    %v3503 = vpack.c.b16 %v3473, %v3472
    %v3504 = vpack.c.b16 %v3475, %v3474
    %v3505 = vpack.c.b16 %v3477, %v3476
    %v3506 = vpack.c.b16 %v3479, %v3478
    %v3507 = vpack.c.b16 %v3481, %v3480
    %v3508 = vpack.c.b16 %v3483, %v3482
    %v3509 = vpack.c.b16 %v3485, %v3484
    %v3510 = vpack.c.b16 %v3487, %v3486
    %v3511 = vpack.c.b16 %v3489, %v3488
    %v3512 = vpack.c.b16 %v3491, %v3490
    %v3513 = vpack.c.b16 %v3493, %v3492
    %v3514 = vpack.c.b16 %v3495, %v3494
    %v3515 = vpack.c.b16 %v3497, %v3496
    %v3516 = vpack.c.b16 %v3499, %v3498
    %v3517 = vpack.c.b16 %v3501, %v3500
    %3534 = vmatprep.subr.bf16.mxu0 0
    %3535 = vmatpush1.bf16.msra.mxu0 %v3502
    %3536 = vmatprep.subr.bf16.mxu0 0
    %3537 = vmatpush1.bf16.msra.mxu0 %v3503
    %3538 = vmatprep.subr.bf16.mxu0 0
    %3539 = vmatpush1.bf16.msra.mxu0 %v3504
    %3540 = vmatprep.subr.bf16.mxu0 0
    %3541 = vmatpush1.bf16.msra.mxu0 %v3505
    %3542 = vmatprep.subr.bf16.mxu0 0
    %3543 = vmatpush1.bf16.msra.mxu0 %v3506
    %3544 = vmatprep.subr.bf16.mxu0 0
    %3545 = vmatpush1.bf16.msra.mxu0 %v3507
    %3546 = vmatprep.subr.bf16.mxu0 0
    %3547 = vmatpush1.bf16.msra.mxu0 %v3508
    %3548 = vmatprep.subr.bf16.mxu0 0
    %3549 = vmatpush1.bf16.msra.mxu0 %v3509
    %3550 = vmatprep.subr.bf16.mxu0 0
    %3551 = vmatpush1.bf16.msra.mxu0 %v3510
    %3552 = vmatprep.subr.bf16.mxu0 0
    %3553 = vmatpush1.bf16.msra.mxu0 %v3511
    %3554 = vmatprep.subr.bf16.mxu0 0
    %3555 = vmatpush1.bf16.msra.mxu0 %v3512
    %3556 = vmatprep.subr.bf16.mxu0 0
    %3557 = vmatpush1.bf16.msra.mxu0 %v3513
    %3558 = vmatprep.subr.bf16.mxu0 0
    %3559 = vmatpush1.bf16.msra.mxu0 %v3514
    %3560 = vmatprep.subr.bf16.mxu0 0
    %3561 = vmatpush1.bf16.msra.mxu0 %v3515
    %3562 = vmatprep.subr.bf16.mxu0 0
    %3563 = vmatpush1.bf16.msra.mxu0 %v3516
    %3564 = vmatprep.subr.bf16.mxu0 0
    %3565 = vmatpush1.bf16.msra.mxu0 %v3517
    %3566 = vmatprep.mubr.bf16.mxu0 %v3402
    %3567 = vmatmul.mubr.bf16.gmra.mrb[0].mxu0 %v3401
    %v3568 = vpop.f32.mrb[0].mxu0
    %v3569 = vadd.f32 0.0, %v3568
    %v3570 = vpop.f32.mrb[0].mxu0
    %v3571 = vpop.f32.mrb[0].mxu0
    %v3572 = vadd.f32 0.0, %v3571
    %v3573 = vpop.f32.mrb[0].mxu0
    %3574 = vmatprep.mubr.bf16.mxu0 %v3404
    %3575 = vmatmul.mubr.bf16.gmra.mrb[0].mxu0 %v3403
    %v3576 = vpop.f32.mrb[0].mxu0
    %v3577 = vadd.f32 0.0, %v3576
    %v3578 = vpop.f32.mrb[0].mxu0
    %v3579 = vpop.f32.mrb[0].mxu0
    %v3580 = vadd.f32 0.0, %v3579
    %v3581 = vpop.f32.mrb[0].mxu0
    %3582 = vdwg.mxu0
    %v3583 = vadd.f32 %v3371, %v3569
    %v3584 = vadd.f32 %v3374, %v3572
    %v3585 = vadd.f32 %v3379, %v3577
    %v3586 = vadd.f32 %v3382, %v3580
    %v3587 = vrot.slane %v2998, 5
    %v3588 = vrot.slane %v2999, 5
    %v3589 = vrot.slane %v3000, 5
    %v3590 = vrot.slane %v3001, 5
    %v3591 = vrot.slane %v3002, 5
    %v3592 = vrot.slane %v3003, 5
    %v3593 = vrot.slane %v3004, 5
    %v3594 = vrot.slane %v3005, 5
    %v3595 = vsel %vm1527, %v3591, %v3593
    %v3596 = vsel %vm1527, %v3592, %v3594
    %v3597 = vsel %vm1527, %v3589, %v3591
    %v3598 = vsel %vm1527, %v3590, %v3592
    %v3599 = vsel %vm1527, %v3587, %v3589
    %v3600 = vsel %vm1527, %v3588, %v3590
    %v3601 = vsel %vm1527, %v3593, %v3587
    %v3602 = vsel %vm1527, %v3594, %v3588
    %v3603 = vpack.c.bf16 %v3597, %v3599
    %v3604 = vpack.c.bf16 %v3598, %v3600
    %v3605 = vpack.c.bf16 %v3601, %v3595
    %v3606 = vpack.c.bf16 %v3602, %v3596
    %s3607 = scalar_lea.vmem %s3, 384
    %v3608 = vld [vmem:[%s3607] sm:$0xf]
    %v3609 = vld [vmem:[%s3607 + $0x4] sm:$0xf]
    %v3610 = vld [vmem:[%s3607 + $0x8] sm:$0xf]
    %v3611 = vld [vmem:[%s3607 + $0xc] sm:$0xf]
    %v3612 = vld [vmem:[%s3607 + $0x10] sm:$0xf]
    %v3613 = vld [vmem:[%s3607 + $0x14] sm:$0xf]
    %v3614 = vld [vmem:[%s3607 + $0x18] sm:$0xf]
    %v3615 = vld [vmem:[%s3607 + $0x1c] sm:$0xf]
    %v3616 = vld [vmem:[%s3607 + $0x20] sm:$0xf]
    %v3617 = vld [vmem:[%s3607 + $0x24] sm:$0xf]
    %v3618 = vld [vmem:[%s3607 + $0x28] sm:$0xf]
    %v3619 = vld [vmem:[%s3607 + $0x2c] sm:$0xf]
    %v3620 = vld [vmem:[%s3607 + $0x30] sm:$0xf]
    %v3621 = vld [vmem:[%s3607 + $0x34] sm:$0xf]
    %v3622 = vld [vmem:[%s3607 + $0x38] sm:$0xf]
    %v3623 = vld [vmem:[%s3607 + $0x3c] sm:$0xf]
    %v3624 = vld [vmem:[%s3607 + $0x40] sm:$0xf]
    %v3625 = vld [vmem:[%s3607 + $0x44] sm:$0xf]
    %v3626 = vld [vmem:[%s3607 + $0x48] sm:$0xf]
    %v3627 = vld [vmem:[%s3607 + $0x4c] sm:$0xf]
    %v3628 = vld [vmem:[%s3607 + $0x50] sm:$0xf]
    %v3629 = vld [vmem:[%s3607 + $0x54] sm:$0xf]
    %v3630 = vld [vmem:[%s3607 + $0x58] sm:$0xf]
    %v3631 = vld [vmem:[%s3607 + $0x5c] sm:$0xf]
    %v3632 = vld [vmem:[%s3607 + $0x60] sm:$0xf]
    %v3633 = vld [vmem:[%s3607 + $0x64] sm:$0xf]
    %v3634 = vld [vmem:[%s3607 + $0x68] sm:$0xf]
    %v3635 = vld [vmem:[%s3607 + $0x6c] sm:$0xf]
    %v3636 = vld [vmem:[%s3607 + $0x70] sm:$0xf]
    %v3637 = vld [vmem:[%s3607 + $0x74] sm:$0xf]
    %v3638 = vld [vmem:[%s3607 + $0x78] sm:$0xf]
    %v3639 = vld [vmem:[%s3607 + $0x7c] sm:$0xf]
    %v3672 = vunpack.c.l.b16 %v3608
    %v3673 = vunpack.c.l.b16 %v3609
    %v3674 = vunpack.c.l.b16 %v3610
    %v3675 = vunpack.c.l.b16 %v3611
    %v3676 = vunpack.c.l.b16 %v3612
    %v3677 = vunpack.c.l.b16 %v3613
    %v3678 = vunpack.c.l.b16 %v3614
    %v3679 = vunpack.c.l.b16 %v3615
    %v3680 = vunpack.c.l.b16 %v3616
    %v3681 = vunpack.c.l.b16 %v3617
    %v3682 = vunpack.c.l.b16 %v3618
    %v3683 = vunpack.c.l.b16 %v3619
    %v3684 = vunpack.c.l.b16 %v3620
    %v3685 = vunpack.c.l.b16 %v3621
    %v3686 = vunpack.c.l.b16 %v3622
    %v3687 = vunpack.c.l.b16 %v3623
    %v3688 = vunpack.c.l.b16 %v3624
    %v3689 = vunpack.c.l.b16 %v3625
    %v3690 = vunpack.c.l.b16 %v3626
    %v3691 = vunpack.c.l.b16 %v3627
    %v3692 = vunpack.c.l.b16 %v3628
    %v3693 = vunpack.c.l.b16 %v3629
    %v3694 = vunpack.c.l.b16 %v3630
    %v3695 = vunpack.c.l.b16 %v3631
    %v3696 = vunpack.c.l.b16 %v3632
    %v3697 = vunpack.c.l.b16 %v3633
    %v3698 = vunpack.c.l.b16 %v3634
    %v3699 = vunpack.c.l.b16 %v3635
    %v3700 = vunpack.c.l.b16 %v3636
    %v3701 = vunpack.c.l.b16 %v3637
    %v3702 = vunpack.c.l.b16 %v3638
    %v3703 = vunpack.c.l.b16 %v3639
    %v3704 = vpack.c.b16 %v3673, %v3672
    %v3705 = vpack.c.b16 %v3675, %v3674
    %v3706 = vpack.c.b16 %v3677, %v3676
    %v3707 = vpack.c.b16 %v3679, %v3678
    %v3708 = vpack.c.b16 %v3681, %v3680
    %v3709 = vpack.c.b16 %v3683, %v3682
    %v3710 = vpack.c.b16 %v3685, %v3684
    %v3711 = vpack.c.b16 %v3687, %v3686
    %v3712 = vpack.c.b16 %v3689, %v3688
    %v3713 = vpack.c.b16 %v3691, %v3690
    %v3714 = vpack.c.b16 %v3693, %v3692
    %v3715 = vpack.c.b16 %v3695, %v3694
    %v3716 = vpack.c.b16 %v3697, %v3696
    %v3717 = vpack.c.b16 %v3699, %v3698
    %v3718 = vpack.c.b16 %v3701, %v3700
    %v3719 = vpack.c.b16 %v3703, %v3702
    %3736 = vmatprep.subr.bf16.mxu0 0
    %3737 = vmatpush1.bf16.msra.mxu0 %v3704
    %3738 = vmatprep.subr.bf16.mxu0 0
    %3739 = vmatpush1.bf16.msra.mxu0 %v3705
    %3740 = vmatprep.subr.bf16.mxu0 0
    %3741 = vmatpush1.bf16.msra.mxu0 %v3706
    %3742 = vmatprep.subr.bf16.mxu0 0
    %3743 = vmatpush1.bf16.msra.mxu0 %v3707
    %3744 = vmatprep.subr.bf16.mxu0 0
    %3745 = vmatpush1.bf16.msra.mxu0 %v3708
    %3746 = vmatprep.subr.bf16.mxu0 0
    %3747 = vmatpush1.bf16.msra.mxu0 %v3709
    %3748 = vmatprep.subr.bf16.mxu0 0
    %3749 = vmatpush1.bf16.msra.mxu0 %v3710
    %3750 = vmatprep.subr.bf16.mxu0 0
    %3751 = vmatpush1.bf16.msra.mxu0 %v3711
    %3752 = vmatprep.subr.bf16.mxu0 0
    %3753 = vmatpush1.bf16.msra.mxu0 %v3712
    %3754 = vmatprep.subr.bf16.mxu0 0
    %3755 = vmatpush1.bf16.msra.mxu0 %v3713
    %3756 = vmatprep.subr.bf16.mxu0 0
    %3757 = vmatpush1.bf16.msra.mxu0 %v3714
    %3758 = vmatprep.subr.bf16.mxu0 0
    %3759 = vmatpush1.bf16.msra.mxu0 %v3715
    %3760 = vmatprep.subr.bf16.mxu0 0
    %3761 = vmatpush1.bf16.msra.mxu0 %v3716
    %3762 = vmatprep.subr.bf16.mxu0 0
    %3763 = vmatpush1.bf16.msra.mxu0 %v3717
    %3764 = vmatprep.subr.bf16.mxu0 0
    %3765 = vmatpush1.bf16.msra.mxu0 %v3718
    %3766 = vmatprep.subr.bf16.mxu0 0
    %3767 = vmatpush1.bf16.msra.mxu0 %v3719
    %3768 = vmatprep.mubr.bf16.mxu0 %v3604
    %3769 = vmatmul.mubr.bf16.gmra.mrb[0].mxu0 %v3603
    %v3770 = vpop.f32.mrb[0].mxu0
    %v3771 = vadd.f32 0.0, %v3770
    %v3772 = vpop.f32.mrb[0].mxu0
    %v3773 = vpop.f32.mrb[0].mxu0
    %v3774 = vadd.f32 0.0, %v3773
    %v3775 = vpop.f32.mrb[0].mxu0
    %3776 = vmatprep.mubr.bf16.mxu0 %v3606
    %3777 = vmatmul.mubr.bf16.gmra.mrb[0].mxu0 %v3605
    %v3778 = vpop.f32.mrb[0].mxu0
    %v3779 = vadd.f32 0.0, %v3778
    %v3780 = vpop.f32.mrb[0].mxu0
    %v3781 = vpop.f32.mrb[0].mxu0
    %v3782 = vadd.f32 0.0, %v3781
    %v3783 = vpop.f32.mrb[0].mxu0
    %3784 = vdwg.mxu0
    %v3785 = vadd.f32 %v3583, %v3771
    %v3786 = vadd.f32 %v3584, %v3774
    %v3787 = vadd.f32 %v3585, %v3779
    %v3788 = vadd.f32 %v3586, %v3782
    %v3789 = vlaneseq
    %v3790 = vshrl.u32 %v3789, 7
    %v3791 = vsub.s32 6, %v3790
    %v3792 = vrot.slane %v64, %v3791
    %v3793 = vadd.f32 %v3785, %v3792
    %v3794 = vadd.f32 %v3786, %v3792
    %v3795 = vadd.f32 %v3787, %v3792
    %v3796 = vadd.f32 %v3788, %v3792
    %v3797 = vmax.f32 %v3793, 0.0
    %v3798 = vmax.f32 %v3794, 0.0
    %v3799 = vmax.f32 %v3795, 0.0
    %v3800 = vmax.f32 %v3796, 0.0
    %v3801 = vld [vmem:[%s4] sm:$0xff]
    %v3802 = vld [vmem:[%s4 + $0x8] sm:$0xff]
    %v3803 = vld [vmem:[%s4 + $0x10] sm:$0xff]
    %v3804 = vld [vmem:[%s4 + $0x18] sm:$0xff]
    %v3805 = vld [vmem:[%s4 + $0x20] sm:$0xff]
    %v3806 = vld [vmem:[%s4 + $0x28] sm:$0xff]
    %v3807 = vld [vmem:[%s4 + $0x30] sm:$0xff]
    %v3808 = vld [vmem:[%s4 + $0x38] sm:$0xff]
    %v3809 = vlaneseq
    %v3810 = vshrl.u32 %v3809, 7
    %v3811 = vsub.s32 7, %v3810
    %v3812 = vrot.slane %v64, %v3811
    %vm3813 = vcmask 523264
    %v3815 = vsel %vm3813, %v3797, 0
    %v3818 = vsel %vm3813, %v3798, 0
    %v3821 = vsel %vm3813, %v3799, 0
    %v3824 = vsel %vm3813, %v3800, 0
    %3826 = vmatprep.subr.mxu0 0.0
    %3827 = vmatpush1.msra.mxu0 %v3801
    %3828 = vmatprep.subr.mxu0 0.0
    %3829 = vmatpush1.msra.mxu0 %v3802
    %3830 = vmatprep.subr.mxu0 0.0
    %3831 = vmatpush1.msra.mxu0 %v3803
    %3832 = vmatprep.subr.mxu0 0.0
    %3833 = vmatpush1.msra.mxu0 %v3804
    %3834 = vmatprep.subr.mxu0 0.0
    %3835 = vmatpush1.msra.mxu0 %v3805
    %3836 = vmatprep.subr.mxu0 0.0
    %3837 = vmatpush1.msra.mxu0 %v3806
    %3838 = vmatprep.subr.mxu0 0.0
    %3839 = vmatpush1.msra.mxu0 %v3807
    %3840 = vmatprep.subr.mxu0 0.0
    %3841 = vmatpush1.msra.mxu0 %v3808
    %3842 = vmatprep.subr.mxu0 0.0
    %3843 = vmatpush1.msra.mxu0 0.0
    %3844 = vmatprep.subr.mxu0 0.0
    %3845 = vmatpush1.msra.mxu0 0.0
    %3846 = vmatprep.subr.mxu0 0.0
    %3847 = vmatpush1.msra.mxu0 0.0
    %3848 = vmatprep.subr.mxu0 0.0
    %3849 = vmatpush1.msra.mxu0 0.0
    %3850 = vmatprep.subr.mxu0 0.0
    %3851 = vmatpush1.msra.mxu0 0.0
    %3852 = vmatprep.subr.mxu0 0.0
    %3853 = vmatpush1.msra.mxu0 0.0
    %3854 = vmatprep.subr.mxu0 0.0
    %3855 = vmatpush1.msra.mxu0 0.0
    %3856 = vmatprep.subr.mxu0 0.0
    %3857 = vmatpush1.msra.mxu0 0.0
    %3858 = vmatprep.subr.mxu0 0.0
    %3859 = vmatpush1.msra.mxu0 0.0
    %3860 = vmatprep.subr.mxu0 0.0
    %3861 = vmatpush1.msra.mxu0 0.0
    %3862 = vmatprep.subr.mxu0 0.0
    %3863 = vmatpush1.msra.mxu0 0.0
    %3864 = vmatprep.subr.mxu0 0.0
    %3865 = vmatpush1.msra.mxu0 0.0
    %3866 = vmatprep.subr.mxu0 0.0
    %3867 = vmatpush1.msra.mxu0 0.0
    %3868 = vmatprep.subr.mxu0 0.0
    %3869 = vmatpush1.msra.mxu0 0.0
    %3870 = vmatprep.subr.mxu0 0.0
    %3871 = vmatpush1.msra.mxu0 0.0
    %3872 = vmatprep.subr.mxu0 0.0
    %3873 = vmatpush1.msra.mxu0 0.0
    %3874 = vmatprep.subr.mxu0 0.0
    %3875 = vmatpush1.msra.mxu0 0.0
    %3876 = vmatprep.subr.mxu0 0.0
    %3877 = vmatpush1.msra.mxu0 0.0
    %3878 = vmatprep.subr.mxu0 0.0
    %3879 = vmatpush1.msra.mxu0 0.0
    %3880 = vmatprep.subr.mxu0 0.0
    %3881 = vmatpush1.msra.mxu0 0.0
    %3882 = vmatprep.subr.mxu0 0.0
    %3883 = vmatpush1.msra.mxu0 0.0
    %3884 = vmatprep.subr.mxu0 0.0
    %3885 = vmatpush1.msra.mxu0 0.0
    %3886 = vmatprep.subr.mxu0 0.0
    %3887 = vmatpush1.msra.mxu0 0.0
    %3888 = vmatprep.subr.mxu0 0.0
    %3889 = vmatpush1.msra.mxu0 0.0
    %3890 = vmatprep.mubr.f32.mxu0 0.0
    %3891 = vmatmul.mubr.f32.gmra.mrb[0].mxu0 %v3815
    %v3892 = vpop.f32.mrb[0].mxu0
    %v3893 = vadd.f32 %v3812, %v3892
    %v3894 = vpop.f32.mrb[0].mxu0
    %3895 = vmatprep.mubr.f32.mxu0 0.0
    %3896 = vmatmul.mubr.f32.gmra.mrb[0].mxu0 %v3818
    %v3897 = vpop.f32.mrb[0].mxu0
    %v3898 = vpop.f32.mrb[0].mxu0
    %3899 = vmatprep.mubr.f32.mxu0 0.0
    %3900 = vmatmul.mubr.f32.gmra.mrb[0].mxu0 %v3821
    %v3901 = vpop.f32.mrb[0].mxu0
    %v3902 = vadd.f32 %v3812, %v3901
    %v3903 = vpop.f32.mrb[0].mxu0
    %3904 = vmatprep.mubr.f32.mxu0 0.0
    %3905 = vmatmul.mubr.f32.gmra.mrb[0].mxu0 %v3824
    %v3906 = vpop.f32.mrb[0].mxu0
    %v3907 = vpop.f32.mrb[0].mxu0
    %3908 = vdwg.mxu0
    %vm3909 = vcmask 31744
    %v3910 = vsel %vm3909, %v3893, -inf
    %3911 = vmax.xlane.f32.xlu0 %v3910
    %v3912 = vpop.xlane.xlu0 %3911
    %v3913 = vsel %vm3909, %v3902, -inf
    %3914 = vmax.xlane.f32.xlu0 %v3913
    %v3915 = vpop.xlane.xlu0 %3914
    %v3916 = vsub.f32 %v3893, %v3912
    %v3917 = vsub.f32 %v3902, %v3915
    %v3918 = vmul.f32 %v3916, 1.442695
    %v3919 = vpow.pop %v3918
    %v3920 = vmul.f32 %v3917, 1.442695
    %v3921 = vpow.pop %v3920
    %v3922 = vsel %vm3909, %v3919, 0.0
    %3923 = vadd.xlane.f32.xlu0 %v3922
    %v3924 = vpop.xlane.xlu0 %3923
    %v3925 = vsel %vm3909, %v3921, 0.0
    %3926 = vadd.xlane.f32.xlu0 %v3925
    %v3927 = vpop.xlane.xlu0 %3926
    %v3928 = vlog2.pop %v3924
    %v3929 = vmul.f32 %v3928, 0.6931472
    %v3930 = vlog2.pop %v3927
    %v3931 = vmul.f32 %v3930, 0.6931472
    %v3932 = vsub.f32 %v3916, %v3929
    %v3933 = vsub.f32 %v3917, %v3931
    %v3935 = vrot.slane %v3933, 7
    %vm3937 = vcmask 1040384
    %v3938 = vsel %vm3937, %v3932, %v3935
    %vm3939 = vcmask 25600
    %3940 = vst.msk [vmem:[#allocation8] sm:$0x3] %vm3939, %v3938
    // Predicated region
    $region38: #{actor_forward.1} parent=1 // pred_check
      _
    $region39: #{actor_forward.1} parent=1 // pred_check_branch
      %3942 = sbr.rel (0) target = $region41
    $region40: #{actor_forward.1} parent=1 // pred_region
      %s3944 = ssub.s32 32, 32
      %3945 = vsyncadd [#allocation4], %s3944
      %s3947 = sshll.u32 [#allocation8], 4
      %s3948 = int_to_ptr.vmem [resolvable:$true] %s3947
      %3950 = dma.vmem_to_hbm [thread:$0]  %s3948, 32, %s6, [#allocation4]
    $region41: #{actor_forward.1} parent=1 // pred_fallthru
      _
    // Predicated region
    $region42: #{actor_forward.1} parent=1 // pred_check
      _
    $region43: #{actor_forward.1} parent=1 // pred_check_branch
      %3952 = sbr.rel (0) target = $region45
    $region44: #{actor_forward.1} parent=1 // pred_region
      %3953 = dma.done [#allocation4], 32
    $region45: #{actor_forward.1} parent=1 // pred_fallthru
      _
    %3954 = vsyncpa [#allocation3], 1
    %3955 = vsyncpa [#allocation6], 1
    %3956 = vsyncpa [#allocation4], 1

</llo_original>
